<compile_context>
chip_gen: v7x
topology: tpu7x:2x2x1
jax: 0.10.0
libtpu: 0.0.40
codegen_flags: <defaults>
</compile_context>

<pallas_src>
import functools
import math

import jax
import jax.numpy as jnp
from jax.experimental import pallas as pl
from jax.experimental.pallas import tpu as pltpu

# Small synthetic sizes consistent with the module (scaled down from 256/8/1024).
D_MODEL = 32
NHEAD = 4
HEAD_DIM = D_MODEL // NHEAD
DIM_FF = 64
LN_EPS = 1e-5


# ---------------------------------------------------------------------------
# In-kernel helpers (operate on loaded VMEM values)
# ---------------------------------------------------------------------------
def _layernorm(x, g, b):
    mu = jnp.mean(x, axis=-1, keepdims=True)
    var = jnp.mean((x - mu) ** 2, axis=-1, keepdims=True)
    return (x - mu) * jax.lax.rsqrt(var + LN_EPS) * g + b


def _attention(q, k, v):
    """Multi-head scaled-dot-product attention on (Lq,D)/(Lk,D) values.

    K is transposed once (single XLU transpose per attention); per-head work
    stays in vregs and is concatenated once along lanes (no VMEM scratch).
    """
    kt = k.T                                   # (D, Lk)
    scale = 1.0 / math.sqrt(HEAD_DIM)
    outs = []
    for h in range(NHEAD):
        sl = slice(h * HEAD_DIM, (h + 1) * HEAD_DIM)
        s = jnp.dot(q[:, sl], kt[sl, :], preferred_element_type=jnp.float32) * scale
        s = s - jnp.max(s, axis=-1, keepdims=True)
        p = jnp.exp(s)
        p = p * pl.reciprocal(jnp.sum(p, axis=-1, keepdims=True), approx=True)
        outs.append(jnp.dot(p, v[:, sl], preferred_element_type=jnp.float32))
    return jnp.concatenate(outs, axis=-1)      # (Lq, D)


# ---------------------------------------------------------------------------
# Pallas kernel: one full decoder layer for a block of batch elements
# ---------------------------------------------------------------------------
def decoder_layer_kernel(bblk, lt, lm,
                         tgt_ref, mem_ref,
                         w_sa_ref, b_sa_ref, w_ca_ref, b_ca_ref,
                         w1_ref, b1_ref, w2_ref, vec_ref,
                         out_ref):
    D = D_MODEL
    x = tgt_ref[...]              # (bblk*lt, D)  batch flattened into rows
    mem = mem_ref[...]            # (bblk*lm, D)
    w_sa = w_sa_ref[...]          # (D, 4D) = [wq|wk|wv|wo]
    b_sa = b_sa_ref[...]          # (1, 4D)
    w_ca = w_ca_ref[...]
    b_ca = b_ca_ref[...]
    vec = vec_ref[...]            # (8, D) = [g1,be1,g2,be2,g3,be3,b2,pad]

    # ---- 1) self-attention: fused QKV projection (one wide MXU pass) ----
    qkv = jnp.dot(x, w_sa[:, :3 * D],
                  preferred_element_type=jnp.float32) + b_sa[:, :3 * D]
    parts = []
    for b in range(bblk):
        r = slice(b * lt, (b + 1) * lt)
        parts.append(_attention(qkv[r, 0:D], qkv[r, D:2 * D], qkv[r, 2 * D:3 * D]))
    sa = jnp.concatenate(parts, axis=0)
    sa = jnp.dot(sa, w_sa[:, 3 * D:],
                 preferred_element_type=jnp.float32) + b_sa[:, 3 * D:]
    x = _layernorm(x + sa, vec[0:1, :], vec[1:2, :])

    # ---- 2) cross-attention: Q from x, fused KV from encoder memory ----
    q_all = jnp.dot(x, w_ca[:, 0:D],
                    preferred_element_type=jnp.float32) + b_ca[:, 0:D]
    kv_all = jnp.dot(mem, w_ca[:, D:3 * D],
                     preferred_element_type=jnp.float32) + b_ca[:, D:3 * D]
    parts = []
    for b in range(bblk):
        rq = slice(b * lt, (b + 1) * lt)
        rk = slice(b * lm, (b + 1) * lm)
        parts.append(_attention(q_all[rq, :], kv_all[rk, 0:D], kv_all[rk, D:2 * D]))
    ca = jnp.concatenate(parts, axis=0)
    ca = jnp.dot(ca, w_ca[:, 3 * D:],
                 preferred_element_type=jnp.float32) + b_ca[:, 3 * D:]
    x = _layernorm(x + ca, vec[2:3, :], vec[3:4, :])

    # ---- 3) feed-forward (linear -> relu -> linear) + residual + LN ----
    h = jnp.maximum(jnp.dot(x, w1_ref[...],
                            preferred_element_type=jnp.float32) + b1_ref[...], 0.0)
    ff = jnp.dot(h, w2_ref[...],
                 preferred_element_type=jnp.float32) + vec[6:7, :]
    x = _layernorm(x + ff, vec[4:5, :], vec[5:6, :])

    out_ref[...] = x


# ---------------------------------------------------------------------------
# Wrapper
# ---------------------------------------------------------------------------
def cross_transformer_decoder_layer(tgt, memory, packed_params):
    B, Lt, D = tgt.shape
    _, Lm, _ = memory.shape
    assert D == D_MODEL

    # Batch-block size: flatten several batch elements into the row dim to
    # amortize per-grid-step overhead, but keep >= 2 steps for v7x megacore.
    bblk = B // 2 if (B >= 2 and B % 2 == 0) else 1
    n_steps = B // bblk

    # Flatten batch*seq into rows at the JAX level -> 2-D lane-dense blocks,
    # no in-kernel reshapes.
    tgt2 = tgt.reshape(B * Lt, D)
    mem2 = memory.reshape(B * Lm, D)

    tgt_spec = pl.BlockSpec((bblk * Lt, D), lambda i: (i, 0))
    mem_spec = pl.BlockSpec((bblk * Lm, D), lambda i: (i, 0))
    out_spec = pl.BlockSpec((bblk * Lt, D), lambda i: (i, 0))
    weight_specs = [pl.BlockSpec(p.shape, lambda i: (0, 0)) for p in packed_params]

    grid_spec = pltpu.PrefetchScalarGridSpec(
        num_scalar_prefetch=0,
        grid=(n_steps,),
        in_specs=[tgt_spec, mem_spec] + weight_specs,
        out_specs=out_spec,
    )

    kernel = functools.partial(decoder_layer_kernel, bblk, Lt, Lm)
    out = pl.pallas_call(
        kernel,
        out_shape=jax.ShapeDtypeStruct((B * Lt, D), jnp.float32),
        grid_spec=grid_spec,
        compiler_params=pltpu.CompilerParams(
            dimension_semantics=("parallel",)),
    )(tgt2, mem2, *packed_params)
    return out.reshape(B, Lt, D)


# ---------------------------------------------------------------------------
# Parameter init (26 raw tensors, reference layout) + packing for the kernel
# ---------------------------------------------------------------------------
def init_params(key):
    D, F = D_MODEL, DIM_FF
    keys = iter(jax.random.split(key, 40))

    def w(shape, scale=0.05):
        return (scale * jax.random.normal(next(keys), shape)).astype(jnp.float32)

    def attn_block():
        return [
            w((D, D)), w((D, D)), w((D, D)),          # wq, wk, wv
            w((1, D)), w((1, D)), w((1, D)),          # bq, bk, bv
            w((D, D)), w((1, D)),                     # wo, bo
        ]

    params = []
    params += attn_block()                            # self-attention
    params += attn_block()                            # cross-attention
    params += [w((D, F)), w((1, F)), w((F, D)), w((1, D))]   # FFN
    for _ in range(3):                                # 3 layernorms
        params.append(1.0 + 0.1 * w((1, D)))          # gamma
        params.append(0.1 * w((1, D)))                # beta
    return params


def pack_params(params):
    """Pack 26 small tensors into 8 slabs to cut DMA descriptors / VMEM allocs."""
    (wq1, wk1, wv1, bq1, bk1, bv1, wo1, bo1,
     wq2, wk2, wv2, bq2, bk2, bv2, wo2, bo2,
     w1, b1, w2, b2, g1, be1, g2, be2, g3, be3) = params
    D = D_MODEL
    w_sa = jnp.concatenate([wq1, wk1, wv1, wo1], axis=1)           # (D, 4D)
    b_sa = jnp.concatenate([bq1, bk1, bv1, bo1], axis=1)           # (1, 4D)
    w_ca = jnp.concatenate([wq2, wk2, wv2, wo2], axis=1)           # (D, 4D)
    b_ca = jnp.concatenate([bq2, bk2, bv2, bo2], axis=1)           # (1, 4D)
    vec = jnp.concatenate([g1, be1, g2, be2, g3, be3, b2,
                           jnp.zeros((1, D), jnp.float32)], axis=0)  # (8, D)
    return (w_sa, b_sa, w_ca, b_ca, w1, b1, w2, vec)


# ---------------------------------------------------------------------------
# Pure-JAX reference for correctness
# ---------------------------------------------------------------------------
def reference(tgt, memory, params):
    (wq1, wk1, wv1, bq1, bk1, bv1, wo1, bo1,
     wq2, wk2, wv2, bq2, bk2, bv2, wo2, bo2,
     w1, b1, w2, b2, g1, be1, g2, be2, g3, be3) = params

    def ln(x, g, b):
        mu = x.mean(-1, keepdims=True)
        var = ((x - mu) ** 2).mean(-1, keepdims=True)
        return (x - mu) / jnp.sqrt(var + LN_EPS) * g + b

    def mha(q_in, kv_in, wq, bq, wk, bk, wv, bv, wo, bo):
        B, Lq, D = q_in.shape
        Lk = kv_in.shape[1]
        q = (q_in @ wq + bq).reshape(B, Lq, NHEAD, HEAD_DIM)
        k = (kv_in @ wk + bk).reshape(B, Lk, NHEAD, HEAD_DIM)
        v = (kv_in @ wv + bv).reshape(B, Lk, NHEAD, HEAD_DIM)
        s = jnp.einsum('bqhd,bkhd->bhqk', q, k) / math.sqrt(HEAD_DIM)
        p = jax.nn.softmax(s, axis=-1)
        o = jnp.einsum('bhqk,bkhd->bqhd', p, v).reshape(B, Lq, D)
        return o @ wo + bo

    x = ln(tgt + mha(tgt, tgt, wq1, bq1, wk1, bk1, wv1, bv1, wo1, bo1), g1, be1)
    x = ln(x + mha(x, memory, wq2, bq2, wk2, bk2, wv2, bv2, wo2, bo2), g2, be2)
    ff = jnp.maximum(x @ w1 + b1, 0.0) @ w2 + b2
    return ln(x + ff, g3, be3)


if __name__ == "__main__":
    B, LT, LM = 2, 8, 16
    key = jax.random.PRNGKey(0)
    k_tgt, k_mem, k_par = jax.random.split(key, 3)

    tgt = jax.random.normal(k_tgt, (B, LT, D_MODEL), dtype=jnp.float32)
    memory = jax.random.normal(k_mem, (B, LM, D_MODEL), dtype=jnp.float32)
    params = init_params(k_par)
    packed = pack_params(params)

    out = cross_transformer_decoder_layer(tgt, memory, packed)
    out = jax.block_until_ready(out)

    ref = reference(tgt, memory, params)
    assert out.shape == (B, LT, D_MODEL)
    assert bool(jnp.all(jnp.isfinite(out)))
    # Slightly relaxed tolerance: softmax denom uses the EUP approx reciprocal.
    assert bool(jnp.allclose(out, ref, atol=2e-3, rtol=2e-3)), "mismatch vs reference"

    print("KERNEL_OK")
</pallas_src>

<mosaic_0001>
module attributes {stable_mosaic.version = 11 : i64} {
  func.func @decoder_layer_kernel(%arg0: i32, %arg1: memref<8x32xf32, #tpu.memory_space<vmem>>, %arg2: memref<16x32xf32, #tpu.memory_space<vmem>>, %arg3: memref<32x128xf32, #tpu.memory_space<vmem>>, %arg4: memref<1x128xf32, #tpu.memory_space<vmem>>, %arg5: memref<32x128xf32, #tpu.memory_space<vmem>>, %arg6: memref<1x128xf32, #tpu.memory_space<vmem>>, %arg7: memref<32x64xf32, #tpu.memory_space<vmem>>, %arg8: memref<1x64xf32, #tpu.memory_space<vmem>>, %arg9: memref<64x32xf32, #tpu.memory_space<vmem>>, %arg10: memref<8x32xf32, #tpu.memory_space<vmem>>, %arg11: memref<8x32xf32, #tpu.memory_space<vmem>>) attributes {dimension_semantics = [#tpu.dimension_semantics<parallel>], iteration_bounds = array<i64: 2>, scalar_prefetch = 0 : i64, scratch_operands = 0 : i64, tpu.core_type = #tpu.core_type<tc>, window_params = [{transform_indices = @transform_0, window_bounds = array<i64: 8, 32>}, {transform_indices = @transform_1, window_bounds = array<i64: 16, 32>}, {pipeline_mode = #tpu.pipeline_mode<synchronous>, transform_indices = @transform_2, window_bounds = array<i64: 32, 128>}, {pipeline_mode = #tpu.pipeline_mode<synchronous>, transform_indices = @transform_3, window_bounds = array<i64: 1, 128>}, {pipeline_mode = #tpu.pipeline_mode<synchronous>, transform_indices = @transform_4, window_bounds = array<i64: 32, 128>}, {pipeline_mode = #tpu.pipeline_mode<synchronous>, transform_indices = @transform_5, window_bounds = array<i64: 1, 128>}, {pipeline_mode = #tpu.pipeline_mode<synchronous>, transform_indices = @transform_6, window_bounds = array<i64: 32, 64>}, {pipeline_mode = #tpu.pipeline_mode<synchronous>, transform_indices = @transform_7, window_bounds = array<i64: 1, 64>}, {pipeline_mode = #tpu.pipeline_mode<synchronous>, transform_indices = @transform_8, window_bounds = array<i64: 64, 32>}, {pipeline_mode = #tpu.pipeline_mode<synchronous>, transform_indices = @transform_9, window_bounds = array<i64: 8, 32>}, {transform_indices = @transform_10, window_bounds = array<i64: 8, 32>}]} {
    %c0 = arith.constant 0 : index
    %c0_0 = arith.constant 0 : index
    %0 = vector.load %arg1[%c0, %c0_0] : memref<8x32xf32, #tpu.memory_space<vmem>>, vector<8x32xf32>
    %c0_1 = arith.constant 0 : index
    %c0_2 = arith.constant 0 : index
    %1 = vector.load %arg2[%c0_1, %c0_2] : memref<16x32xf32, #tpu.memory_space<vmem>>, vector<16x32xf32>
    %c0_3 = arith.constant 0 : index
    %c0_4 = arith.constant 0 : index
    %2 = vector.load %arg3[%c0_3, %c0_4] : memref<32x128xf32, #tpu.memory_space<vmem>>, vector<32x128xf32>
    %c0_5 = arith.constant 0 : index
    %c0_6 = arith.constant 0 : index
    %3 = vector.load %arg4[%c0_5, %c0_6] : memref<1x128xf32, #tpu.memory_space<vmem>>, vector<1x128xf32>
    %c0_7 = arith.constant 0 : index
    %c0_8 = arith.constant 0 : index
    %4 = vector.load %arg5[%c0_7, %c0_8] : memref<32x128xf32, #tpu.memory_space<vmem>>, vector<32x128xf32>
    %c0_9 = arith.constant 0 : index
    %c0_10 = arith.constant 0 : index
    %5 = vector.load %arg6[%c0_9, %c0_10] : memref<1x128xf32, #tpu.memory_space<vmem>>, vector<1x128xf32>
    %c0_11 = arith.constant 0 : index
    %c0_12 = arith.constant 0 : index
    %6 = vector.load %arg10[%c0_11, %c0_12] : memref<8x32xf32, #tpu.memory_space<vmem>>, vector<8x32xf32>
    %7 = vector.extract_strided_slice %2 {offsets = [0, 0], sizes = [32, 96], strides = [1, 1]} : vector<32x128xf32> to vector<32x96xf32>
    %cst = arith.constant dense<0.000000e+00> : vector<8x96xf32>
    %8 = tpu.matmul %0, %7, %cst {dimension_numbers = #tpu.dot_dimension_numbers<[1], [0], [0], [1], [0, 0, 1, 1], [], []>} : vector<8x32xf32>, vector<32x96xf32>, vector<8x96xf32> -> vector<8x96xf32>
    %9 = vector.extract_strided_slice %3 {offsets = [0, 0], sizes = [1, 96], strides = [1, 1]} : vector<1x128xf32> to vector<1x96xf32>
    %10 = vector.broadcast %9 : vector<1x96xf32> to vector<8x96xf32>
    %11 = arith.addf %8, %10 : vector<8x96xf32>
    %12 = vector.extract_strided_slice %11 {offsets = [0, 0], sizes = [8, 32], strides = [1, 1]} : vector<8x96xf32> to vector<8x32xf32>
    %13 = vector.extract_strided_slice %11 {offsets = [0, 32], sizes = [8, 32], strides = [1, 1]} : vector<8x96xf32> to vector<8x32xf32>
    %14 = vector.extract_strided_slice %11 {offsets = [0, 64], sizes = [8, 32], strides = [1, 1]} : vector<8x96xf32> to vector<8x32xf32>
    %15 = tpu.transpose %13, [1, 0] : vector<8x32xf32> -> vector<32x8xf32>
    %16 = vector.extract_strided_slice %12 {offsets = [0, 0], sizes = [8, 8], strides = [1, 1]} : vector<8x32xf32> to vector<8x8xf32>
    %17 = vector.extract_strided_slice %15 {offsets = [0, 0], sizes = [8, 8], strides = [1, 1]} : vector<32x8xf32> to vector<8x8xf32>
    %cst_13 = arith.constant dense<0.000000e+00> : vector<8x8xf32>
    %18 = tpu.matmul %16, %17, %cst_13 {dimension_numbers = #tpu.dot_dimension_numbers<[1], [0], [0], [1], [0, 0, 1, 1], [], []>} : vector<8x8xf32>, vector<8x8xf32>, vector<8x8xf32> -> vector<8x8xf32>
    %cst_14 = arith.constant 0.353553385 : f32
    %19 = vector.broadcast %cst_14 : f32 to vector<8x8xf32>
    %20 = arith.mulf %18, %19 : vector<8x8xf32>
    %cst_15 = arith.constant dense<0xFF800000> : vector<8xf32>
    %21 = vector.multi_reduction <maximumf>, %20, %cst_15 [1] : vector<8x8xf32> to vector<8xf32>
    %22 = vector.shape_cast %21 : vector<8xf32> to vector<8x1xf32>
    %23 = vector.broadcast %22 : vector<8x1xf32> to vector<8x8xf32>
    %24 = arith.subf %20, %23 : vector<8x8xf32>
    %25 = math.exp %24 : vector<8x8xf32>
    %cst_16 = arith.constant dense<0.000000e+00> : vector<8xf32>
    %26 = vector.multi_reduction <add>, %25, %cst_16 [1] : vector<8x8xf32> to vector<8xf32>
    %27 = vector.shape_cast %26 : vector<8xf32> to vector<8x1xf32>
    %28 = tpu.reciprocal %27 {approx = true} : vector<8x1xf32> -> vector<8x1xf32>
    %29 = vector.broadcast %28 : vector<8x1xf32> to vector<8x8xf32>
    %30 = arith.mulf %25, %29 : vector<8x8xf32>
    %31 = vector.extract_strided_slice %14 {offsets = [0, 0], sizes = [8, 8], strides = [1, 1]} : vector<8x32xf32> to vector<8x8xf32>
    %cst_17 = arith.constant dense<0.000000e+00> : vector<8x8xf32>
    %32 = tpu.matmul %30, %31, %cst_17 {dimension_numbers = #tpu.dot_dimension_numbers<[1], [0], [0], [1], [0, 0, 1, 1], [], []>} : vector<8x8xf32>, vector<8x8xf32>, vector<8x8xf32> -> vector<8x8xf32>
    %33 = vector.extract_strided_slice %12 {offsets = [0, 8], sizes = [8, 8], strides = [1, 1]} : vector<8x32xf32> to vector<8x8xf32>
    %34 = vector.extract_strided_slice %15 {offsets = [8, 0], sizes = [8, 8], strides = [1, 1]} : vector<32x8xf32> to vector<8x8xf32>
    %cst_18 = arith.constant dense<0.000000e+00> : vector<8x8xf32>
    %35 = tpu.matmul %33, %34, %cst_18 {dimension_numbers = #tpu.dot_dimension_numbers<[1], [0], [0], [1], [0, 0, 1, 1], [], []>} : vector<8x8xf32>, vector<8x8xf32>, vector<8x8xf32> -> vector<8x8xf32>
    %cst_19 = arith.constant 0.353553385 : f32
    %36 = vector.broadcast %cst_19 : f32 to vector<8x8xf32>
    %37 = arith.mulf %35, %36 : vector<8x8xf32>
    %cst_20 = arith.constant dense<0xFF800000> : vector<8xf32>
    %38 = vector.multi_reduction <maximumf>, %37, %cst_20 [1] : vector<8x8xf32> to vector<8xf32>
    %39 = vector.shape_cast %38 : vector<8xf32> to vector<8x1xf32>
    %40 = vector.broadcast %39 : vector<8x1xf32> to vector<8x8xf32>
    %41 = arith.subf %37, %40 : vector<8x8xf32>
    %42 = math.exp %41 : vector<8x8xf32>
    %cst_21 = arith.constant dense<0.000000e+00> : vector<8xf32>
    %43 = vector.multi_reduction <add>, %42, %cst_21 [1] : vector<8x8xf32> to vector<8xf32>
    %44 = vector.shape_cast %43 : vector<8xf32> to vector<8x1xf32>
    %45 = tpu.reciprocal %44 {approx = true} : vector<8x1xf32> -> vector<8x1xf32>
    %46 = vector.broadcast %45 : vector<8x1xf32> to vector<8x8xf32>
    %47 = arith.mulf %42, %46 : vector<8x8xf32>
    %48 = vector.extract_strided_slice %14 {offsets = [0, 8], sizes = [8, 8], strides = [1, 1]} : vector<8x32xf32> to vector<8x8xf32>
    %cst_22 = arith.constant dense<0.000000e+00> : vector<8x8xf32>
    %49 = tpu.matmul %47, %48, %cst_22 {dimension_numbers = #tpu.dot_dimension_numbers<[1], [0], [0], [1], [0, 0, 1, 1], [], []>} : vector<8x8xf32>, vector<8x8xf32>, vector<8x8xf32> -> vector<8x8xf32>
    %50 = vector.extract_strided_slice %12 {offsets = [0, 16], sizes = [8, 8], strides = [1, 1]} : vector<8x32xf32> to vector<8x8xf32>
    %51 = vector.extract_strided_slice %15 {offsets = [16, 0], sizes = [8, 8], strides = [1, 1]} : vector<32x8xf32> to vector<8x8xf32>
    %cst_23 = arith.constant dense<0.000000e+00> : vector<8x8xf32>
    %52 = tpu.matmul %50, %51, %cst_23 {dimension_numbers = #tpu.dot_dimension_numbers<[1], [0], [0], [1], [0, 0, 1, 1], [], []>} : vector<8x8xf32>, vector<8x8xf32>, vector<8x8xf32> -> vector<8x8xf32>
    %cst_24 = arith.constant 0.353553385 : f32
    %53 = vector.broadcast %cst_24 : f32 to vector<8x8xf32>
    %54 = arith.mulf %52, %53 : vector<8x8xf32>
    %cst_25 = arith.constant dense<0xFF800000> : vector<8xf32>
    %55 = vector.multi_reduction <maximumf>, %54, %cst_25 [1] : vector<8x8xf32> to vector<8xf32>
    %56 = vector.shape_cast %55 : vector<8xf32> to vector<8x1xf32>
    %57 = vector.broadcast %56 : vector<8x1xf32> to vector<8x8xf32>
    %58 = arith.subf %54, %57 : vector<8x8xf32>
    %59 = math.exp %58 : vector<8x8xf32>
    %cst_26 = arith.constant dense<0.000000e+00> : vector<8xf32>
    %60 = vector.multi_reduction <add>, %59, %cst_26 [1] : vector<8x8xf32> to vector<8xf32>
    %61 = vector.shape_cast %60 : vector<8xf32> to vector<8x1xf32>
    %62 = tpu.reciprocal %61 {approx = true} : vector<8x1xf32> -> vector<8x1xf32>
    %63 = vector.broadcast %62 : vector<8x1xf32> to vector<8x8xf32>
    %64 = arith.mulf %59, %63 : vector<8x8xf32>
    %65 = vector.extract_strided_slice %14 {offsets = [0, 16], sizes = [8, 8], strides = [1, 1]} : vector<8x32xf32> to vector<8x8xf32>
    %cst_27 = arith.constant dense<0.000000e+00> : vector<8x8xf32>
    %66 = tpu.matmul %64, %65, %cst_27 {dimension_numbers = #tpu.dot_dimension_numbers<[1], [0], [0], [1], [0, 0, 1, 1], [], []>} : vector<8x8xf32>, vector<8x8xf32>, vector<8x8xf32> -> vector<8x8xf32>
    %67 = vector.extract_strided_slice %12 {offsets = [0, 24], sizes = [8, 8], strides = [1, 1]} : vector<8x32xf32> to vector<8x8xf32>
    %68 = vector.extract_strided_slice %15 {offsets = [24, 0], sizes = [8, 8], strides = [1, 1]} : vector<32x8xf32> to vector<8x8xf32>
    %cst_28 = arith.constant dense<0.000000e+00> : vector<8x8xf32>
    %69 = tpu.matmul %67, %68, %cst_28 {dimension_numbers = #tpu.dot_dimension_numbers<[1], [0], [0], [1], [0, 0, 1, 1], [], []>} : vector<8x8xf32>, vector<8x8xf32>, vector<8x8xf32> -> vector<8x8xf32>
    %cst_29 = arith.constant 0.353553385 : f32
    %70 = vector.broadcast %cst_29 : f32 to vector<8x8xf32>
    %71 = arith.mulf %69, %70 : vector<8x8xf32>
    %cst_30 = arith.constant dense<0xFF800000> : vector<8xf32>
    %72 = vector.multi_reduction <maximumf>, %71, %cst_30 [1] : vector<8x8xf32> to vector<8xf32>
    %73 = vector.shape_cast %72 : vector<8xf32> to vector<8x1xf32>
    %74 = vector.broadcast %73 : vector<8x1xf32> to vector<8x8xf32>
    %75 = arith.subf %71, %74 : vector<8x8xf32>
    %76 = math.exp %75 : vector<8x8xf32>
    %cst_31 = arith.constant dense<0.000000e+00> : vector<8xf32>
    %77 = vector.multi_reduction <add>, %76, %cst_31 [1] : vector<8x8xf32> to vector<8xf32>
    %78 = vector.shape_cast %77 : vector<8xf32> to vector<8x1xf32>
    %79 = tpu.reciprocal %78 {approx = true} : vector<8x1xf32> -> vector<8x1xf32>
    %80 = vector.broadcast %79 : vector<8x1xf32> to vector<8x8xf32>
    %81 = arith.mulf %76, %80 : vector<8x8xf32>
    %82 = vector.extract_strided_slice %14 {offsets = [0, 24], sizes = [8, 8], strides = [1, 1]} : vector<8x32xf32> to vector<8x8xf32>
    %cst_32 = arith.constant dense<0.000000e+00> : vector<8x8xf32>
    %83 = tpu.matmul %81, %82, %cst_32 {dimension_numbers = #tpu.dot_dimension_numbers<[1], [0], [0], [1], [0, 0, 1, 1], [], []>} : vector<8x8xf32>, vector<8x8xf32>, vector<8x8xf32> -> vector<8x8xf32>
    %84 = tpu.concatenate %32, %49, %66, %83 in 1 : vector<8x8xf32>, vector<8x8xf32>, vector<8x8xf32>, vector<8x8xf32> -> vector<8x32xf32>
    %85 = vector.extract_strided_slice %2 {offsets = [0, 96], sizes = [32, 32], strides = [1, 1]} : vector<32x128xf32> to vector<32x32xf32>
    %cst_33 = arith.constant dense<0.000000e+00> : vector<8x32xf32>
    %86 = tpu.matmul %84, %85, %cst_33 {dimension_numbers = #tpu.dot_dimension_numbers<[1], [0], [0], [1], [0, 0, 1, 1], [], []>} : vector<8x32xf32>, vector<32x32xf32>, vector<8x32xf32> -> vector<8x32xf32>
    %87 = vector.extract_strided_slice %3 {offsets = [0, 96], sizes = [1, 32], strides = [1, 1]} : vector<1x128xf32> to vector<1x32xf32>
    %88 = vector.broadcast %87 : vector<1x32xf32> to vector<8x32xf32>
    %89 = arith.addf %86, %88 : vector<8x32xf32>
    %90 = arith.addf %0, %89 : vector<8x32xf32>
    %91 = vector.extract_strided_slice %6 {offsets = [0, 0], sizes = [1, 32], strides = [1, 1]} : vector<8x32xf32> to vector<1x32xf32>
    %92 = vector.extract_strided_slice %6 {offsets = [1, 0], sizes = [1, 32], strides = [1, 1]} : vector<8x32xf32> to vector<1x32xf32>
    %cst_34 = arith.constant dense<0.000000e+00> : vector<8xf32>
    %93 = vector.multi_reduction <add>, %90, %cst_34 [1] : vector<8x32xf32> to vector<8xf32>
    %94 = vector.shape_cast %93 : vector<8xf32> to vector<8x1xf32>
    %cst_35 = arith.constant 3.200000e+01 : f32
    %95 = vector.broadcast %cst_35 : f32 to vector<8x1xf32>
    %96 = arith.divf %94, %95 : vector<8x1xf32>
    %97 = vector.broadcast %96 : vector<8x1xf32> to vector<8x32xf32>
    %98 = arith.subf %90, %97 : vector<8x32xf32>
    %99 = arith.mulf %98, %98 : vector<8x32xf32>
    %cst_36 = arith.constant dense<0.000000e+00> : vector<8xf32>
    %100 = vector.multi_reduction <add>, %99, %cst_36 [1] : vector<8x32xf32> to vector<8xf32>
    %101 = vector.shape_cast %100 : vector<8xf32> to vector<8x1xf32>
    %cst_37 = arith.constant 3.200000e+01 : f32
    %102 = vector.broadcast %cst_37 : f32 to vector<8x1xf32>
    %103 = arith.divf %101, %102 : vector<8x1xf32>
    %104 = vector.broadcast %96 : vector<8x1xf32> to vector<8x32xf32>
    %105 = arith.subf %90, %104 : vector<8x32xf32>
    %cst_38 = arith.constant 9.99999974E-6 : f32
    %106 = vector.broadcast %cst_38 : f32 to vector<8x1xf32>
    %107 = arith.addf %103, %106 : vector<8x1xf32>
    %108 = math.rsqrt %107 : vector<8x1xf32>
    %109 = vector.broadcast %108 : vector<8x1xf32> to vector<8x32xf32>
    %110 = arith.mulf %105, %109 : vector<8x32xf32>
    %111 = vector.broadcast %91 : vector<1x32xf32> to vector<8x32xf32>
    %112 = arith.mulf %110, %111 : vector<8x32xf32>
    %113 = vector.broadcast %92 : vector<1x32xf32> to vector<8x32xf32>
    %114 = arith.addf %112, %113 : vector<8x32xf32>
    %115 = vector.extract_strided_slice %4 {offsets = [0, 0], sizes = [32, 32], strides = [1, 1]} : vector<32x128xf32> to vector<32x32xf32>
    %cst_39 = arith.constant dense<0.000000e+00> : vector<8x32xf32>
    %116 = tpu.matmul %114, %115, %cst_39 {dimension_numbers = #tpu.dot_dimension_numbers<[1], [0], [0], [1], [0, 0, 1, 1], [], []>} : vector<8x32xf32>, vector<32x32xf32>, vector<8x32xf32> -> vector<8x32xf32>
    %117 = vector.extract_strided_slice %5 {offsets = [0, 0], sizes = [1, 32], strides = [1, 1]} : vector<1x128xf32> to vector<1x32xf32>
    %118 = vector.broadcast %117 : vector<1x32xf32> to vector<8x32xf32>
    %119 = arith.addf %116, %118 : vector<8x32xf32>
    %120 = vector.extract_strided_slice %4 {offsets = [0, 32], sizes = [32, 64], strides = [1, 1]} : vector<32x128xf32> to vector<32x64xf32>
    %cst_40 = arith.constant dense<0.000000e+00> : vector<16x64xf32>
    %121 = tpu.matmul %1, %120, %cst_40 {dimension_numbers = #tpu.dot_dimension_numbers<[1], [0], [0], [1], [0, 0, 1, 1], [], []>} : vector<16x32xf32>, vector<32x64xf32>, vector<16x64xf32> -> vector<16x64xf32>
    %122 = vector.extract_strided_slice %5 {offsets = [0, 32], sizes = [1, 64], strides = [1, 1]} : vector<1x128xf32> to vector<1x64xf32>
    %123 = vector.broadcast %122 : vector<1x64xf32> to vector<16x64xf32>
    %124 = arith.addf %121, %123 : vector<16x64xf32>
    %125 = vector.extract_strided_slice %124 {offsets = [0, 0], sizes = [16, 32], strides = [1, 1]} : vector<16x64xf32> to vector<16x32xf32>
    %126 = vector.extract_strided_slice %124 {offsets = [0, 32], sizes = [16, 32], strides = [1, 1]} : vector<16x64xf32> to vector<16x32xf32>
    %127 = tpu.transpose %125, [1, 0] : vector<16x32xf32> -> vector<32x16xf32>
    %128 = vector.extract_strided_slice %119 {offsets = [0, 0], sizes = [8, 8], strides = [1, 1]} : vector<8x32xf32> to vector<8x8xf32>
    %129 = vector.extract_strided_slice %127 {offsets = [0, 0], sizes = [8, 16], strides = [1, 1]} : vector<32x16xf32> to vector<8x16xf32>
    %cst_41 = arith.constant dense<0.000000e+00> : vector<8x16xf32>
    %130 = tpu.matmul %128, %129, %cst_41 {dimension_numbers = #tpu.dot_dimension_numbers<[1], [0], [0], [1], [0, 0, 1, 1], [], []>} : vector<8x8xf32>, vector<8x16xf32>, vector<8x16xf32> -> vector<8x16xf32>
    %cst_42 = arith.constant 0.353553385 : f32
    %131 = vector.broadcast %cst_42 : f32 to vector<8x16xf32>
    %132 = arith.mulf %130, %131 : vector<8x16xf32>
    %cst_43 = arith.constant dense<0xFF800000> : vector<8xf32>
    %133 = vector.multi_reduction <maximumf>, %132, %cst_43 [1] : vector<8x16xf32> to vector<8xf32>
    %134 = vector.shape_cast %133 : vector<8xf32> to vector<8x1xf32>
    %135 = vector.broadcast %134 : vector<8x1xf32> to vector<8x16xf32>
    %136 = arith.subf %132, %135 : vector<8x16xf32>
    %137 = math.exp %136 : vector<8x16xf32>
    %cst_44 = arith.constant dense<0.000000e+00> : vector<8xf32>
    %138 = vector.multi_reduction <add>, %137, %cst_44 [1] : vector<8x16xf32> to vector<8xf32>
    %139 = vector.shape_cast %138 : vector<8xf32> to vector<8x1xf32>
    %140 = tpu.reciprocal %139 {approx = true} : vector<8x1xf32> -> vector<8x1xf32>
    %141 = vector.broadcast %140 : vector<8x1xf32> to vector<8x16xf32>
    %142 = arith.mulf %137, %141 : vector<8x16xf32>
    %143 = vector.extract_strided_slice %126 {offsets = [0, 0], sizes = [16, 8], strides = [1, 1]} : vector<16x32xf32> to vector<16x8xf32>
    %cst_45 = arith.constant dense<0.000000e+00> : vector<8x8xf32>
    %144 = tpu.matmul %142, %143, %cst_45 {dimension_numbers = #tpu.dot_dimension_numbers<[1], [0], [0], [1], [0, 0, 1, 1], [], []>} : vector<8x16xf32>, vector<16x8xf32>, vector<8x8xf32> -> vector<8x8xf32>
    %145 = vector.extract_strided_slice %119 {offsets = [0, 8], sizes = [8, 8], strides = [1, 1]} : vector<8x32xf32> to vector<8x8xf32>
    %146 = vector.extract_strided_slice %127 {offsets = [8, 0], sizes = [8, 16], strides = [1, 1]} : vector<32x16xf32> to vector<8x16xf32>
    %cst_46 = arith.constant dense<0.000000e+00> : vector<8x16xf32>
    %147 = tpu.matmul %145, %146, %cst_46 {dimension_numbers = #tpu.dot_dimension_numbers<[1], [0], [0], [1], [0, 0, 1, 1], [], []>} : vector<8x8xf32>, vector<8x16xf32>, vector<8x16xf32> -> vector<8x16xf32>
    %cst_47 = arith.constant 0.353553385 : f32
    %148 = vector.broadcast %cst_47 : f32 to vector<8x16xf32>
    %149 = arith.mulf %147, %148 : vector<8x16xf32>
    %cst_48 = arith.constant dense<0xFF800000> : vector<8xf32>
    %150 = vector.multi_reduction <maximumf>, %149, %cst_48 [1] : vector<8x16xf32> to vector<8xf32>
    %151 = vector.shape_cast %150 : vector<8xf32> to vector<8x1xf32>
    %152 = vector.broadcast %151 : vector<8x1xf32> to vector<8x16xf32>
    %153 = arith.subf %149, %152 : vector<8x16xf32>
    %154 = math.exp %153 : vector<8x16xf32>
    %cst_49 = arith.constant dense<0.000000e+00> : vector<8xf32>
    %155 = vector.multi_reduction <add>, %154, %cst_49 [1] : vector<8x16xf32> to vector<8xf32>
    %156 = vector.shape_cast %155 : vector<8xf32> to vector<8x1xf32>
    %157 = tpu.reciprocal %156 {approx = true} : vector<8x1xf32> -> vector<8x1xf32>
    %158 = vector.broadcast %157 : vector<8x1xf32> to vector<8x16xf32>
    %159 = arith.mulf %154, %158 : vector<8x16xf32>
    %160 = vector.extract_strided_slice %126 {offsets = [0, 8], sizes = [16, 8], strides = [1, 1]} : vector<16x32xf32> to vector<16x8xf32>
    %cst_50 = arith.constant dense<0.000000e+00> : vector<8x8xf32>
    %161 = tpu.matmul %159, %160, %cst_50 {dimension_numbers = #tpu.dot_dimension_numbers<[1], [0], [0], [1], [0, 0, 1, 1], [], []>} : vector<8x16xf32>, vector<16x8xf32>, vector<8x8xf32> -> vector<8x8xf32>
    %162 = vector.extract_strided_slice %119 {offsets = [0, 16], sizes = [8, 8], strides = [1, 1]} : vector<8x32xf32> to vector<8x8xf32>
    %163 = vector.extract_strided_slice %127 {offsets = [16, 0], sizes = [8, 16], strides = [1, 1]} : vector<32x16xf32> to vector<8x16xf32>
    %cst_51 = arith.constant dense<0.000000e+00> : vector<8x16xf32>
    %164 = tpu.matmul %162, %163, %cst_51 {dimension_numbers = #tpu.dot_dimension_numbers<[1], [0], [0], [1], [0, 0, 1, 1], [], []>} : vector<8x8xf32>, vector<8x16xf32>, vector<8x16xf32> -> vector<8x16xf32>
    %cst_52 = arith.constant 0.353553385 : f32
    %165 = vector.broadcast %cst_52 : f32 to vector<8x16xf32>
    %166 = arith.mulf %164, %165 : vector<8x16xf32>
    %cst_53 = arith.constant dense<0xFF800000> : vector<8xf32>
    %167 = vector.multi_reduction <maximumf>, %166, %cst_53 [1] : vector<8x16xf32> to vector<8xf32>
    %168 = vector.shape_cast %167 : vector<8xf32> to vector<8x1xf32>
    %169 = vector.broadcast %168 : vector<8x1xf32> to vector<8x16xf32>
    %170 = arith.subf %166, %169 : vector<8x16xf32>
    %171 = math.exp %170 : vector<8x16xf32>
    %cst_54 = arith.constant dense<0.000000e+00> : vector<8xf32>
    %172 = vector.multi_reduction <add>, %171, %cst_54 [1] : vector<8x16xf32> to vector<8xf32>
    %173 = vector.shape_cast %172 : vector<8xf32> to vector<8x1xf32>
    %174 = tpu.reciprocal %173 {approx = true} : vector<8x1xf32> -> vector<8x1xf32>
    %175 = vector.broadcast %174 : vector<8x1xf32> to vector<8x16xf32>
    %176 = arith.mulf %171, %175 : vector<8x16xf32>
    %177 = vector.extract_strided_slice %126 {offsets = [0, 16], sizes = [16, 8], strides = [1, 1]} : vector<16x32xf32> to vector<16x8xf32>
    %cst_55 = arith.constant dense<0.000000e+00> : vector<8x8xf32>
    %178 = tpu.matmul %176, %177, %cst_55 {dimension_numbers = #tpu.dot_dimension_numbers<[1], [0], [0], [1], [0, 0, 1, 1], [], []>} : vector<8x16xf32>, vector<16x8xf32>, vector<8x8xf32> -> vector<8x8xf32>
    %179 = vector.extract_strided_slice %119 {offsets = [0, 24], sizes = [8, 8], strides = [1, 1]} : vector<8x32xf32> to vector<8x8xf32>
    %180 = vector.extract_strided_slice %127 {offsets = [24, 0], sizes = [8, 16], strides = [1, 1]} : vector<32x16xf32> to vector<8x16xf32>
    %cst_56 = arith.constant dense<0.000000e+00> : vector<8x16xf32>
    %181 = tpu.matmul %179, %180, %cst_56 {dimension_numbers = #tpu.dot_dimension_numbers<[1], [0], [0], [1], [0, 0, 1, 1], [], []>} : vector<8x8xf32>, vector<8x16xf32>, vector<8x16xf32> -> vector<8x16xf32>
    %cst_57 = arith.constant 0.353553385 : f32
    %182 = vector.broadcast %cst_57 : f32 to vector<8x16xf32>
    %183 = arith.mulf %181, %182 : vector<8x16xf32>
    %cst_58 = arith.constant dense<0xFF800000> : vector<8xf32>
    %184 = vector.multi_reduction <maximumf>, %183, %cst_58 [1] : vector<8x16xf32> to vector<8xf32>
    %185 = vector.shape_cast %184 : vector<8xf32> to vector<8x1xf32>
    %186 = vector.broadcast %185 : vector<8x1xf32> to vector<8x16xf32>
    %187 = arith.subf %183, %186 : vector<8x16xf32>
    %188 = math.exp %187 : vector<8x16xf32>
    %cst_59 = arith.constant dense<0.000000e+00> : vector<8xf32>
    %189 = vector.multi_reduction <add>, %188, %cst_59 [1] : vector<8x16xf32> to vector<8xf32>
    %190 = vector.shape_cast %189 : vector<8xf32> to vector<8x1xf32>
    %191 = tpu.reciprocal %190 {approx = true} : vector<8x1xf32> -> vector<8x1xf32>
    %192 = vector.broadcast %191 : vector<8x1xf32> to vector<8x16xf32>
    %193 = arith.mulf %188, %192 : vector<8x16xf32>
    %194 = vector.extract_strided_slice %126 {offsets = [0, 24], sizes = [16, 8], strides = [1, 1]} : vector<16x32xf32> to vector<16x8xf32>
    %cst_60 = arith.constant dense<0.000000e+00> : vector<8x8xf32>
    %195 = tpu.matmul %193, %194, %cst_60 {dimension_numbers = #tpu.dot_dimension_numbers<[1], [0], [0], [1], [0, 0, 1, 1], [], []>} : vector<8x16xf32>, vector<16x8xf32>, vector<8x8xf32> -> vector<8x8xf32>
    %196 = tpu.concatenate %144, %161, %178, %195 in 1 : vector<8x8xf32>, vector<8x8xf32>, vector<8x8xf32>, vector<8x8xf32> -> vector<8x32xf32>
    %197 = vector.extract_strided_slice %4 {offsets = [0, 96], sizes = [32, 32], strides = [1, 1]} : vector<32x128xf32> to vector<32x32xf32>
    %cst_61 = arith.constant dense<0.000000e+00> : vector<8x32xf32>
    %198 = tpu.matmul %196, %197, %cst_61 {dimension_numbers = #tpu.dot_dimension_numbers<[1], [0], [0], [1], [0, 0, 1, 1], [], []>} : vector<8x32xf32>, vector<32x32xf32>, vector<8x32xf32> -> vector<8x32xf32>
    %199 = vector.extract_strided_slice %5 {offsets = [0, 96], sizes = [1, 32], strides = [1, 1]} : vector<1x128xf32> to vector<1x32xf32>
    %200 = vector.broadcast %199 : vector<1x32xf32> to vector<8x32xf32>
    %201 = arith.addf %198, %200 : vector<8x32xf32>
    %202 = arith.addf %114, %201 : vector<8x32xf32>
    %203 = vector.extract_strided_slice %6 {offsets = [2, 0], sizes = [1, 32], strides = [1, 1]} : vector<8x32xf32> to vector<1x32xf32>
    %204 = vector.extract_strided_slice %6 {offsets = [3, 0], sizes = [1, 32], strides = [1, 1]} : vector<8x32xf32> to vector<1x32xf32>
    %cst_62 = arith.constant dense<0.000000e+00> : vector<8xf32>
    %205 = vector.multi_reduction <add>, %202, %cst_62 [1] : vector<8x32xf32> to vector<8xf32>
    %206 = vector.shape_cast %205 : vector<8xf32> to vector<8x1xf32>
    %cst_63 = arith.constant 3.200000e+01 : f32
    %207 = vector.broadcast %cst_63 : f32 to vector<8x1xf32>
    %208 = arith.divf %206, %207 : vector<8x1xf32>
    %209 = vector.broadcast %208 : vector<8x1xf32> to vector<8x32xf32>
    %210 = arith.subf %202, %209 : vector<8x32xf32>
    %211 = arith.mulf %210, %210 : vector<8x32xf32>
    %cst_64 = arith.constant dense<0.000000e+00> : vector<8xf32>
    %212 = vector.multi_reduction <add>, %211, %cst_64 [1] : vector<8x32xf32> to vector<8xf32>
    %213 = vector.shape_cast %212 : vector<8xf32> to vector<8x1xf32>
    %cst_65 = arith.constant 3.200000e+01 : f32
    %214 = vector.broadcast %cst_65 : f32 to vector<8x1xf32>
    %215 = arith.divf %213, %214 : vector<8x1xf32>
    %216 = vector.broadcast %208 : vector<8x1xf32> to vector<8x32xf32>
    %217 = arith.subf %202, %216 : vector<8x32xf32>
    %cst_66 = arith.constant 9.99999974E-6 : f32
    %218 = vector.broadcast %cst_66 : f32 to vector<8x1xf32>
    %219 = arith.addf %215, %218 : vector<8x1xf32>
    %220 = math.rsqrt %219 : vector<8x1xf32>
    %221 = vector.broadcast %220 : vector<8x1xf32> to vector<8x32xf32>
    %222 = arith.mulf %217, %221 : vector<8x32xf32>
    %223 = vector.broadcast %203 : vector<1x32xf32> to vector<8x32xf32>
    %224 = arith.mulf %222, %223 : vector<8x32xf32>
    %225 = vector.broadcast %204 : vector<1x32xf32> to vector<8x32xf32>
    %226 = arith.addf %224, %225 : vector<8x32xf32>
    %c0_67 = arith.constant 0 : index
    %c0_68 = arith.constant 0 : index
    %227 = vector.load %arg7[%c0_67, %c0_68] : memref<32x64xf32, #tpu.memory_space<vmem>>, vector<32x64xf32>
    %cst_69 = arith.constant dense<0.000000e+00> : vector<8x64xf32>
    %228 = tpu.matmul %226, %227, %cst_69 {dimension_numbers = #tpu.dot_dimension_numbers<[1], [0], [0], [1], [0, 0, 1, 1], [], []>} : vector<8x32xf32>, vector<32x64xf32>, vector<8x64xf32> -> vector<8x64xf32>
    %c0_70 = arith.constant 0 : index
    %c0_71 = arith.constant 0 : index
    %229 = vector.load %arg8[%c0_70, %c0_71] : memref<1x64xf32, #tpu.memory_space<vmem>>, vector<1x64xf32>
    %230 = vector.broadcast %229 : vector<1x64xf32> to vector<8x64xf32>
    %231 = arith.addf %228, %230 : vector<8x64xf32>
    %cst_72 = arith.constant 0.000000e+00 : f32
    %232 = vector.broadcast %cst_72 : f32 to vector<8x64xf32>
    %233 = arith.maximumf %231, %232 : vector<8x64xf32>
    %c0_73 = arith.constant 0 : index
    %c0_74 = arith.constant 0 : index
    %234 = vector.load %arg9[%c0_73, %c0_74] : memref<64x32xf32, #tpu.memory_space<vmem>>, vector<64x32xf32>
    %cst_75 = arith.constant dense<0.000000e+00> : vector<8x32xf32>
    %235 = tpu.matmul %233, %234, %cst_75 {dimension_numbers = #tpu.dot_dimension_numbers<[1], [0], [0], [1], [0, 0, 1, 1], [], []>} : vector<8x64xf32>, vector<64x32xf32>, vector<8x32xf32> -> vector<8x32xf32>
    %236 = vector.extract_strided_slice %6 {offsets = [6, 0], sizes = [1, 32], strides = [1, 1]} : vector<8x32xf32> to vector<1x32xf32>
    %237 = vector.broadcast %236 : vector<1x32xf32> to vector<8x32xf32>
    %238 = arith.addf %235, %237 : vector<8x32xf32>
    %239 = arith.addf %226, %238 : vector<8x32xf32>
    %240 = vector.extract_strided_slice %6 {offsets = [4, 0], sizes = [1, 32], strides = [1, 1]} : vector<8x32xf32> to vector<1x32xf32>
    %241 = vector.extract_strided_slice %6 {offsets = [5, 0], sizes = [1, 32], strides = [1, 1]} : vector<8x32xf32> to vector<1x32xf32>
    %cst_76 = arith.constant dense<0.000000e+00> : vector<8xf32>
    %242 = vector.multi_reduction <add>, %239, %cst_76 [1] : vector<8x32xf32> to vector<8xf32>
    %243 = vector.shape_cast %242 : vector<8xf32> to vector<8x1xf32>
    %cst_77 = arith.constant 3.200000e+01 : f32
    %244 = vector.broadcast %cst_77 : f32 to vector<8x1xf32>
    %245 = arith.divf %243, %244 : vector<8x1xf32>
    %246 = vector.broadcast %245 : vector<8x1xf32> to vector<8x32xf32>
    %247 = arith.subf %239, %246 : vector<8x32xf32>
    %248 = arith.mulf %247, %247 : vector<8x32xf32>
    %cst_78 = arith.constant dense<0.000000e+00> : vector<8xf32>
    %249 = vector.multi_reduction <add>, %248, %cst_78 [1] : vector<8x32xf32> to vector<8xf32>
    %250 = vector.shape_cast %249 : vector<8xf32> to vector<8x1xf32>
    %cst_79 = arith.constant 3.200000e+01 : f32
    %251 = vector.broadcast %cst_79 : f32 to vector<8x1xf32>
    %252 = arith.divf %250, %251 : vector<8x1xf32>
    %253 = vector.broadcast %245 : vector<8x1xf32> to vector<8x32xf32>
    %254 = arith.subf %239, %253 : vector<8x32xf32>
    %cst_80 = arith.constant 9.99999974E-6 : f32
    %255 = vector.broadcast %cst_80 : f32 to vector<8x1xf32>
    %256 = arith.addf %252, %255 : vector<8x1xf32>
    %257 = math.rsqrt %256 : vector<8x1xf32>
    %258 = vector.broadcast %257 : vector<8x1xf32> to vector<8x32xf32>
    %259 = arith.mulf %254, %258 : vector<8x32xf32>
    %260 = vector.broadcast %240 : vector<1x32xf32> to vector<8x32xf32>
    %261 = arith.mulf %259, %260 : vector<8x32xf32>
    %262 = vector.broadcast %241 : vector<1x32xf32> to vector<8x32xf32>
    %263 = arith.addf %261, %262 : vector<8x32xf32>
    %c0_81 = arith.constant 0 : index
    %c0_82 = arith.constant 0 : index
    %264 = vector.load %arg11[%c0_81, %c0_82] : memref<8x32xf32, #tpu.memory_space<vmem>>, vector<8x32xf32>
    tpu.vector_store %arg11[%c0_81, %c0_82], %263 {strides = array<i32>} : memref<8x32xf32, #tpu.memory_space<vmem>>, vector<8x32xf32>,
    return
  }
  func.func @transform_0(%arg0: i32) -> (i32, i32) {
    %c0_i32 = arith.constant 0 : i32
    %c0_i32_0 = arith.constant 0 : i32
    return %arg0, %c0_i32 : i32, i32
  }
  func.func @transform_1(%arg0: i32) -> (i32, i32) {
    %c0_i32 = arith.constant 0 : i32
    %c0_i32_0 = arith.constant 0 : i32
    return %arg0, %c0_i32 : i32, i32
  }
  func.func @transform_2(%arg0: i32) -> (i32, i32) {
    %c0_i32 = arith.constant 0 : i32
    %c0_i32_0 = arith.constant 0 : i32
    %c0_i32_1 = arith.constant 0 : i32
    return %c0_i32, %c0_i32_0 : i32, i32
  }
  func.func @transform_3(%arg0: i32) -> (i32, i32) {
    %c0_i32 = arith.constant 0 : i32
    %c0_i32_0 = arith.constant 0 : i32
    %c0_i32_1 = arith.constant 0 : i32
    return %c0_i32, %c0_i32_0 : i32, i32
  }
  func.func @transform_4(%arg0: i32) -> (i32, i32) {
    %c0_i32 = arith.constant 0 : i32
    %c0_i32_0 = arith.constant 0 : i32
    %c0_i32_1 = arith.constant 0 : i32
    return %c0_i32, %c0_i32_0 : i32, i32
  }
  func.func @transform_5(%arg0: i32) -> (i32, i32) {
    %c0_i32 = arith.constant 0 : i32
    %c0_i32_0 = arith.constant 0 : i32
    %c0_i32_1 = arith.constant 0 : i32
    return %c0_i32, %c0_i32_0 : i32, i32
  }
  func.func @transform_6(%arg0: i32) -> (i32, i32) {
    %c0_i32 = arith.constant 0 : i32
    %c0_i32_0 = arith.constant 0 : i32
    %c0_i32_1 = arith.constant 0 : i32
    return %c0_i32, %c0_i32_0 : i32, i32
  }
  func.func @transform_7(%arg0: i32) -> (i32, i32) {
    %c0_i32 = arith.constant 0 : i32
    %c0_i32_0 = arith.constant 0 : i32
    %c0_i32_1 = arith.constant 0 : i32
    return %c0_i32, %c0_i32_0 : i32, i32
  }
  func.func @transform_8(%arg0: i32) -> (i32, i32) {
    %c0_i32 = arith.constant 0 : i32
    %c0_i32_0 = arith.constant 0 : i32
    %c0_i32_1 = arith.constant 0 : i32
    return %c0_i32, %c0_i32_0 : i32, i32
  }
  func.func @transform_9(%arg0: i32) -> (i32, i32) {
    %c0_i32 = arith.constant 0 : i32
    %c0_i32_0 = arith.constant 0 : i32
    %c0_i32_1 = arith.constant 0 : i32
    return %c0_i32, %c0_i32_0 : i32, i32
  }
  func.func @transform_10(%arg0: i32) -> (i32, i32) {
    %c0_i32 = arith.constant 0 : i32
    %c0_i32_0 = arith.constant 0 : i32
    return %arg0, %c0_i32 : i32, i32
  }
}

</mosaic_0001>

<llo_original>
// kernel: tpu_custom_call.1
$region0: #{tpu_custom_call.1}
  #allocation0 [shape = 'u32[]', space=smem, size = 0x4, offset = 0x4, fixed_abs, tag = 'smem constant byte address 0x4 - core index']
  #allocation1 [shape = 'u32[144,128]{1,0:T(1,128)}', space=vmem, size = 0x12000, scoped, tag = 'internal scratch']
  %s0 = inlined_call_operand.hbm [shape: f32[16,32], index: 0, kind: input, shape index: {}]
  %s1 = inlined_call_operand.vmem [shape: f32[32,32], index: 1, kind: input, shape index: {}]
  %s2 = inlined_call_operand.vmem [shape: f32[32,128], index: 2, kind: input, shape index: {}]
  %s3 = inlined_call_operand.vmem [shape: f32[1,128], index: 3, kind: input, shape index: {}]
  %s4 = inlined_call_operand.vmem [shape: f32[32,128], index: 4, kind: input, shape index: {}]
  %s5 = inlined_call_operand.vmem [shape: f32[1,128], index: 5, kind: input, shape index: {}]
  %s6 = inlined_call_operand.hbm [shape: f32[32,64], index: 6, kind: input, shape index: {}]
  %s7 = inlined_call_operand.vmem [shape: f32[1,64], index: 7, kind: input, shape index: {}]
  %s8 = inlined_call_operand.vmem [shape: f32[64,32], index: 8, kind: input, shape index: {}]
  %s9 = inlined_call_operand.vmem [shape: f32[8,32], index: 9, kind: input, shape index: {}]
  %s10 = inlined_call_operand.hbm [shape: f32[16,32], index: 10, kind: output, shape index: {}]
  %s11 = sld [smem:[#allocation0]]
  $region81: #{tpu_custom_call.1} parent=0
    _
  %s13 = ssub.s32 1, %s11
  %s14 = scalar_select 0, %s13, %s11
  $region1: #{tpu_custom_call.1} parent=0
    #allocation2 [shape = 'u8[8192]{0}', space=vmem, size = 0x2000, scoped, tag = 'input window, operand 0']
    #allocation3 [shape = 's32[2]{0}', space=sflag, size = 0x8, scoped, tag = 'scoped memory for tpu_custom_call.1']
    #allocation4 [shape = 's32[2]{0}', space=sflag, size = 0x8, scoped, tag = 'scoped memory for tpu_custom_call.1']
    #allocation5 [shape = 'u8[16384]{0}', space=vmem, size = 0x4000, scoped, tag = 'input window, operand 6, single buffered']
    #allocation6 [shape = 's32[1]{0}', space=sflag, size = 0x4, scoped, tag = 'scoped memory for tpu_custom_call.1']
    #allocation7 [shape = 'u8[8192]{0}', space=vmem, size = 0x2000, scoped, tag = 'output window, operand 0']
    %15 = vsyncpa [#allocation3], 0
    %s16 = scalar_lea.sflag [#allocation3], 1
    %17 = vsyncpa %s16, 0
    %18 = vsyncpa [#allocation6], 0
    %19 = vsyncpa [#allocation4], 0
    %s20 = scalar_lea.sflag [#allocation4], 1
    %21 = vsyncpa %s20, 0
    loop: start=0, step=1, limit=4
    $region2: #{tpu_custom_call.1} parent=1 // loop_pre_header
      _
    $region3: #{tpu_custom_call.1} parent=1 // loop_header
      %s23 = sphi 0, %s27
      %p24 = scmp.ge.s32.totalorder %s23, 4
      %s33 = sphi 0, %s35
      %s36 = sphi 0, %s33
      %s37 = sphi 0, %s36
      %s53 = sphi 0, %s37
      %s59 = sphi 0, %s61
      %s62 = sphi 0, %s59
      %s63 = sphi 0, %s62
      %s79 = sphi 0, %s63
      %s83 = sphi 0, %s83
      %s85 = sphi 0, %s83
      %s86 = sphi 0, %s85
      %s100 = sphi 0, %s86
      %s104 = sphi 0, %s104
      %s106 = sphi 0, %s104
      %s107 = sphi 0, %s106
      %s121 = sphi 0, %s107
      %s125 = sphi 0, %s125
      %s127 = sphi 0, %s125
      %s128 = sphi 0, %s127
      %s142 = sphi 0, %s128
      %s146 = sphi 0, %s146
      %s148 = sphi 0, %s146
      %s149 = sphi 0, %s148
      %s163 = sphi 0, %s149
      %s167 = sphi 0, %s167
      %s169 = sphi 0, %s167
      %s170 = sphi 0, %s169
      %s184 = sphi 0, %s170
      %s188 = sphi 0, %s188
      %s190 = sphi 0, %s188
      %s191 = sphi 0, %s190
      %s205 = sphi 0, %s191
      %s209 = sphi 0, %s209
      %s211 = sphi 0, %s209
      %s212 = sphi 0, %s211
      %s226 = sphi 0, %s212
      %s230 = sphi 0, %s230
      %s232 = sphi 0, %s230
      %s233 = sphi 0, %s232
      %s247 = sphi 0, %s233
      %s253 = sphi 0, %s255
      %s256 = sphi 0, %s253
      %s257 = sphi 0, %s256
      %s273 = sphi 0, %s257
    $region4: #{tpu_custom_call.1} parent=1 // loop_header_branch
      %26 = sbr.rel (%p24) target = $region8
    $region5: #{tpu_custom_call.1} parent=1 // loop_body
      %s28 = ssub.s32 %s23, 1
      %s29 = ssub.s32 %s23, 2
      %s30 = sadd.s32 %s23, 1
      %s31 = ssub.s32 %s23, %s30
      %p32 = scmp.eq.s32.totalorder %s31, 0
      %s34 = sadd.s32 %s33, 1
      %s35 = scalar_select %p32, %s33, %s34
      %p38 = pneg %p32
      %p39 = scmp.eq.s32.totalorder %s23, 1
      %p40 = por %p38, %p39
      %p41 = scmp.ne.s32.totalorder %s33, %s36
      %p42 = scmp.eq.s32.totalorder %s23, 0
      %p43 = por %p41, %p42
      %p44 = scmp.ne.s32.totalorder %s33, %s36
      %p45 = scmp.eq.s32.totalorder %s28, 1
      %p46 = por %p44, %p45
      %p47 = scmp.ne.s32.totalorder %s36, %s37
      %p48 = scmp.eq.s32.totalorder %s28, 0
      %p49 = por %p47, %p48
      %p50 = scmp.ne.s32.totalorder %s36, %s37
      %p51 = scmp.eq.s32.totalorder %s29, 1
      %p52 = por %p50, %p51
      %p54 = scmp.ne.s32.totalorder %s37, %s53
      %p55 = scmp.eq.s32.totalorder %s29, 0
      %p56 = por %p54, %p55
      %s57 = ssub.s32 %s23, %s30
      %p58 = scmp.eq.s32.totalorder %s57, 0
      %s60 = sadd.s32 %s59, 1
      %s61 = scalar_select %p58, %s59, %s60
      %p64 = pneg %p58
      %p65 = scmp.eq.s32.totalorder %s23, 1
      %p66 = por %p64, %p65
      %p67 = scmp.ne.s32.totalorder %s59, %s62
      %p68 = scmp.eq.s32.totalorder %s23, 0
      %p69 = por %p67, %p68
      %p70 = scmp.ne.s32.totalorder %s59, %s62
      %p71 = scmp.eq.s32.totalorder %s28, 1
      %p72 = por %p70, %p71
      %p73 = scmp.ne.s32.totalorder %s62, %s63
      %p74 = scmp.eq.s32.totalorder %s28, 0
      %p75 = por %p73, %p74
      %p76 = scmp.ne.s32.totalorder %s62, %s63
      %p77 = scmp.eq.s32.totalorder %s29, 1
      %p78 = por %p76, %p77
      %p80 = scmp.ne.s32.totalorder %s63, %s79
      %p81 = scmp.eq.s32.totalorder %s29, 0
      %p82 = por %p80, %p81
      %s84 = sadd.s32 %s83, 1
      %p87 = scmp.eq.s32.totalorder %s23, 1
      %p88 = scmp.ne.s32.totalorder %s83, %s85
      %p89 = scmp.eq.s32.totalorder %s23, 0
      %p90 = por %p88, %p89
      %p91 = scmp.ne.s32.totalorder %s83, %s85
      %p92 = scmp.eq.s32.totalorder %s28, 1
      %p93 = por %p91, %p92
      %p94 = scmp.ne.s32.totalorder %s85, %s86
      %p95 = scmp.eq.s32.totalorder %s28, 0
      %p96 = por %p94, %p95
      %p97 = scmp.ne.s32.totalorder %s85, %s86
      %p98 = scmp.eq.s32.totalorder %s29, 1
      %p99 = por %p97, %p98
      %p101 = scmp.ne.s32.totalorder %s86, %s100
      %p102 = scmp.eq.s32.totalorder %s29, 0
      %p103 = por %p101, %p102
      %s105 = sadd.s32 %s104, 1
      %p108 = scmp.eq.s32.totalorder %s23, 1
      %p109 = scmp.ne.s32.totalorder %s104, %s106
      %p110 = scmp.eq.s32.totalorder %s23, 0
      %p111 = por %p109, %p110
      %p112 = scmp.ne.s32.totalorder %s104, %s106
      %p113 = scmp.eq.s32.totalorder %s28, 1
      %p114 = por %p112, %p113
      %p115 = scmp.ne.s32.totalorder %s106, %s107
      %p116 = scmp.eq.s32.totalorder %s28, 0
      %p117 = por %p115, %p116
      %p118 = scmp.ne.s32.totalorder %s106, %s107
      %p119 = scmp.eq.s32.totalorder %s29, 1
      %p120 = por %p118, %p119
      %p122 = scmp.ne.s32.totalorder %s107, %s121
      %p123 = scmp.eq.s32.totalorder %s29, 0
      %p124 = por %p122, %p123
      %s126 = sadd.s32 %s125, 1
      %p129 = scmp.eq.s32.totalorder %s23, 1
      %p130 = scmp.ne.s32.totalorder %s125, %s127
      %p131 = scmp.eq.s32.totalorder %s23, 0
      %p132 = por %p130, %p131
      %p133 = scmp.ne.s32.totalorder %s125, %s127
      %p134 = scmp.eq.s32.totalorder %s28, 1
      %p135 = por %p133, %p134
      %p136 = scmp.ne.s32.totalorder %s127, %s128
      %p137 = scmp.eq.s32.totalorder %s28, 0
      %p138 = por %p136, %p137
      %p139 = scmp.ne.s32.totalorder %s127, %s128
      %p140 = scmp.eq.s32.totalorder %s29, 1
      %p141 = por %p139, %p140
      %p143 = scmp.ne.s32.totalorder %s128, %s142
      %p144 = scmp.eq.s32.totalorder %s29, 0
      %p145 = por %p143, %p144
      %s147 = sadd.s32 %s146, 1
      %p150 = scmp.eq.s32.totalorder %s23, 1
      %p151 = scmp.ne.s32.totalorder %s146, %s148
      %p152 = scmp.eq.s32.totalorder %s23, 0
      %p153 = por %p151, %p152
      %p154 = scmp.ne.s32.totalorder %s146, %s148
      %p155 = scmp.eq.s32.totalorder %s28, 1
      %p156 = por %p154, %p155
      %p157 = scmp.ne.s32.totalorder %s148, %s149
      %p158 = scmp.eq.s32.totalorder %s28, 0
      %p159 = por %p157, %p158
      %p160 = scmp.ne.s32.totalorder %s148, %s149
      %p161 = scmp.eq.s32.totalorder %s29, 1
      %p162 = por %p160, %p161
      %p164 = scmp.ne.s32.totalorder %s149, %s163
      %p165 = scmp.eq.s32.totalorder %s29, 0
      %p166 = por %p164, %p165
      %s168 = sadd.s32 %s167, 1
      %p171 = scmp.eq.s32.totalorder %s23, 1
      %p172 = scmp.ne.s32.totalorder %s167, %s169
      %p173 = scmp.eq.s32.totalorder %s23, 0
      %p174 = por %p172, %p173
      %p175 = scmp.ne.s32.totalorder %s167, %s169
      %p176 = scmp.eq.s32.totalorder %s28, 1
      %p177 = por %p175, %p176
      %p178 = scmp.ne.s32.totalorder %s169, %s170
      %p179 = scmp.eq.s32.totalorder %s28, 0
      %p180 = por %p178, %p179
      %p181 = scmp.ne.s32.totalorder %s169, %s170
      %p182 = scmp.eq.s32.totalorder %s29, 1
      %p183 = por %p181, %p182
      %p185 = scmp.ne.s32.totalorder %s170, %s184
      %p186 = scmp.eq.s32.totalorder %s29, 0
      %p187 = por %p185, %p186
      %s189 = sadd.s32 %s188, 1
      %p192 = scmp.eq.s32.totalorder %s23, 1
      %p193 = scmp.ne.s32.totalorder %s188, %s190
      %p194 = scmp.eq.s32.totalorder %s23, 0
      %p195 = por %p193, %p194
      %p196 = scmp.ne.s32.totalorder %s188, %s190
      %p197 = scmp.eq.s32.totalorder %s28, 1
      %p198 = por %p196, %p197
      %p199 = scmp.ne.s32.totalorder %s190, %s191
      %p200 = scmp.eq.s32.totalorder %s28, 0
      %p201 = por %p199, %p200
      %p202 = scmp.ne.s32.totalorder %s190, %s191
      %p203 = scmp.eq.s32.totalorder %s29, 1
      %p204 = por %p202, %p203
      %p206 = scmp.ne.s32.totalorder %s191, %s205
      %p207 = scmp.eq.s32.totalorder %s29, 0
      %p208 = por %p206, %p207
      %s210 = sadd.s32 %s209, 1
      %p213 = scmp.eq.s32.totalorder %s23, 1
      %p214 = scmp.ne.s32.totalorder %s209, %s211
      %p215 = scmp.eq.s32.totalorder %s23, 0
      %p216 = por %p214, %p215
      %p217 = scmp.ne.s32.totalorder %s209, %s211
      %p218 = scmp.eq.s32.totalorder %s28, 1
      %p219 = por %p217, %p218
      %p220 = scmp.ne.s32.totalorder %s211, %s212
      %p221 = scmp.eq.s32.totalorder %s28, 0
      %p222 = por %p220, %p221
      %p223 = scmp.ne.s32.totalorder %s211, %s212
      %p224 = scmp.eq.s32.totalorder %s29, 1
      %p225 = por %p223, %p224
      %p227 = scmp.ne.s32.totalorder %s212, %s226
      %p228 = scmp.eq.s32.totalorder %s29, 0
      %p229 = por %p227, %p228
      %s231 = sadd.s32 %s230, 1
      %p234 = scmp.eq.s32.totalorder %s23, 1
      %p235 = scmp.ne.s32.totalorder %s230, %s232
      %p236 = scmp.eq.s32.totalorder %s23, 0
      %p237 = por %p235, %p236
      %p238 = scmp.ne.s32.totalorder %s230, %s232
      %p239 = scmp.eq.s32.totalorder %s28, 1
      %p240 = por %p238, %p239
      %p241 = scmp.ne.s32.totalorder %s232, %s233
      %p242 = scmp.eq.s32.totalorder %s28, 0
      %p243 = por %p241, %p242
      %p244 = scmp.ne.s32.totalorder %s232, %s233
      %p245 = scmp.eq.s32.totalorder %s29, 1
      %p246 = por %p244, %p245
      %p248 = scmp.ne.s32.totalorder %s233, %s247
      %p249 = scmp.eq.s32.totalorder %s29, 0
      %p250 = por %p248, %p249
      %s251 = ssub.s32 %s23, %s30
      %p252 = scmp.eq.s32.totalorder %s251, 0
      %s254 = sadd.s32 %s253, 1
      %s255 = scalar_select %p252, %s253, %s254
      %p258 = pneg %p252
      %p259 = scmp.eq.s32.totalorder %s23, 1
      %p260 = por %p258, %p259
      %p261 = scmp.ne.s32.totalorder %s253, %s256
      %p262 = scmp.eq.s32.totalorder %s23, 0
      %p263 = por %p261, %p262
      %p264 = scmp.ne.s32.totalorder %s253, %s256
      %p265 = scmp.eq.s32.totalorder %s28, 1
      %p266 = por %p264, %p265
      %p267 = scmp.ne.s32.totalorder %s256, %s257
      %p268 = scmp.eq.s32.totalorder %s28, 0
      %p269 = por %p267, %p268
      %p270 = scmp.ne.s32.totalorder %s256, %s257
      %p271 = scmp.eq.s32.totalorder %s29, 1
      %p272 = por %p270, %p271
      %p274 = scmp.ne.s32.totalorder %s257, %s273
      %p275 = scmp.eq.s32.totalorder %s29, 0
      %p276 = por %p274, %p275
      %p277 = scmp.le.s32.totalorder 1, %s23
      %p278 = scmp.lt.s32.totalorder %s23, 3
      %p279 = pnand %p277, %p278
      %p280 = pneg %p279
      // Predicated region
      $region9: #{tpu_custom_call.1} parent=5 // pred_check
        _
      $region10: #{tpu_custom_call.1} parent=5 // pred_check_branch
        %282 = sbr.rel (%p279) target = $region12
      $region11: #{tpu_custom_call.1} parent=5 // pred_region
        %s283 = ssub.s32 %s23, 1
        // Predicated region
        $region13: #{tpu_custom_call.1} parent=11 // pred_check
          %p284 = pneg %p96
        $region14: #{tpu_custom_call.1} parent=11 // pred_check_branch
          %286 = sbr.rel (%p284) target = $region16
        $region15: #{tpu_custom_call.1} parent=11 // pred_region
          _
        $region16: #{tpu_custom_call.1} parent=11 // pred_fallthru
          _
        // Predicated region
        $region17: #{tpu_custom_call.1} parent=11 // pred_check
          %p287 = pneg %p117
        $region18: #{tpu_custom_call.1} parent=11 // pred_check_branch
          %289 = sbr.rel (%p287) target = $region20
        $region19: #{tpu_custom_call.1} parent=11 // pred_region
          _
        $region20: #{tpu_custom_call.1} parent=11 // pred_fallthru
          _
        // Predicated region
        $region21: #{tpu_custom_call.1} parent=11 // pred_check
          %p290 = pneg %p138
        $region22: #{tpu_custom_call.1} parent=11 // pred_check_branch
          %292 = sbr.rel (%p290) target = $region24
        $region23: #{tpu_custom_call.1} parent=11 // pred_region
          _
        $region24: #{tpu_custom_call.1} parent=11 // pred_fallthru
          _
        // Predicated region
        $region25: #{tpu_custom_call.1} parent=11 // pred_check
          %p293 = pneg %p159
        $region26: #{tpu_custom_call.1} parent=11 // pred_check_branch
          %295 = sbr.rel (%p293) target = $region28
        $region27: #{tpu_custom_call.1} parent=11 // pred_region
          _
        $region28: #{tpu_custom_call.1} parent=11 // pred_fallthru
          _
        // Predicated region
        $region29: #{tpu_custom_call.1} parent=11 // pred_check
          %p296 = pneg %p180
        $region30: #{tpu_custom_call.1} parent=11 // pred_check_branch
          %298 = sbr.rel (%p296) target = $region32
        $region31: #{tpu_custom_call.1} parent=11 // pred_region
          %s300 = ssub.s32 512, 512
          %301 = vsyncadd [#allocation6], %s300
          %s302 = sshll.u32 [#allocation5], 4
          %s303 = int_to_ptr.vmem [resolvable:$true] %s302
          %308 = dma.hbm_to_vmem [thread:$0]  %s6, 512, %s303, [#allocation6], 128, 128, 8
        $region32: #{tpu_custom_call.1} parent=11 // pred_fallthru
          _
        // Predicated region
        $region33: #{tpu_custom_call.1} parent=11 // pred_check
          %p309 = pneg %p201
        $region34: #{tpu_custom_call.1} parent=11 // pred_check_branch
          %311 = sbr.rel (%p309) target = $region36
        $region35: #{tpu_custom_call.1} parent=11 // pred_region
          _
        $region36: #{tpu_custom_call.1} parent=11 // pred_fallthru
          _
        // Predicated region
        $region37: #{tpu_custom_call.1} parent=11 // pred_check
          %p312 = pneg %p222
        $region38: #{tpu_custom_call.1} parent=11 // pred_check_branch
          %314 = sbr.rel (%p312) target = $region40
        $region39: #{tpu_custom_call.1} parent=11 // pred_region
          _
        $region40: #{tpu_custom_call.1} parent=11 // pred_fallthru
          _
        // Predicated region
        $region41: #{tpu_custom_call.1} parent=11 // pred_check
          %p315 = pneg %p243
        $region42: #{tpu_custom_call.1} parent=11 // pred_check_branch
          %317 = sbr.rel (%p315) target = $region44
        $region43: #{tpu_custom_call.1} parent=11 // pred_region
          _
        $region44: #{tpu_custom_call.1} parent=11 // pred_fallthru
          _
      $region12: #{tpu_custom_call.1} parent=5 // pred_fallthru
        _
      %p318 = scmp.lt.s32.totalorder %s23, 2
      // Predicated region
      $region45: #{tpu_custom_call.1} parent=5 // pred_check
        %p319 = pneg %p318
      $region46: #{tpu_custom_call.1} parent=5 // pred_check_branch
        %321 = sbr.rel (%p319) target = $region48
      $region47: #{tpu_custom_call.1} parent=5 // pred_region
        // Predicated region
        $region49: #{tpu_custom_call.1} parent=47 // pred_check
          %p322 = pneg %p43
        $region50: #{tpu_custom_call.1} parent=47 // pred_check_branch
          %324 = sbr.rel (%p322) target = $region52
        $region51: #{tpu_custom_call.1} parent=47 // pred_region
          %s325 = sand.u32 %s33, 1
          %s326 = scalar_lea.sflag [#allocation3], %s325
          %s327 = sand.u32 %s33, 1
          %s328 = smul.addr %s327, 8
          %s329 = scalar_lea.vmem [#allocation2], %s328
          %s331 = ssub.s32 128, 128
          %332 = vsyncadd %s326, %s331
          %s333 = smul.addr %s23, 128
          %s334 = scalar_lea.hbm %s0, %s333
          %s336 = sshll.u32 %s329, 4
          %s337 = int_to_ptr.vmem [resolvable:$true] %s336
          %339 = dma.hbm_to_vmem [thread:$0]  %s334, 128, %s337, %s326
        $region52: #{tpu_custom_call.1} parent=47 // pred_fallthru
          _
        // Predicated region
        $region53: #{tpu_custom_call.1} parent=47 // pred_check
          %p340 = pneg %p69
        $region54: #{tpu_custom_call.1} parent=47 // pred_check_branch
          %342 = sbr.rel (%p340) target = $region56
        $region55: #{tpu_custom_call.1} parent=47 // pred_region
          %s343 = smul.u32 2, %s23
          %p344 = scmp.lt.s32.totalorder %s343, 3
          %s345 = scalar_select %p344, %s343, 3
          %s346 = smul.addr %s345, 8
          %s347 = scalar_lea.vmem %s1, %s346
          %s348 = smul.u32 2, %s23
        $region56: #{tpu_custom_call.1} parent=47 // pred_fallthru
          _
      $region48: #{tpu_custom_call.1} parent=5 // pred_fallthru
        _
      %p349 = scmp.le.s32.totalorder 1, %s23
      %p350 = scmp.lt.s32.totalorder %s23, 3
      %p351 = pnand %p349, %p350
      %p352 = pneg %p351
      // Predicated region
      $region57: #{tpu_custom_call.1} parent=5 // pred_check
        _
      $region58: #{tpu_custom_call.1} parent=5 // pred_check_branch
        %354 = sbr.rel (%p351) target = $region60
      $region59: #{tpu_custom_call.1} parent=5 // pred_region
        %s355 = ssub.s32 %s23, 1
        %s356 = sand.u32 %s36, 1
        %s357 = scalar_lea.sflag [#allocation3], %s356
        %s358 = sand.u32 %s36, 1
        %s359 = smul.addr %s358, 8
        %s360 = scalar_lea.vmem [#allocation2], %s359
        // Predicated region
        $region61: #{tpu_custom_call.1} parent=59 // pred_check
          %p361 = pneg %p49
        $region62: #{tpu_custom_call.1} parent=59 // pred_check_branch
          %363 = sbr.rel (%p361) target = $region64
        $region63: #{tpu_custom_call.1} parent=59 // pred_region
          %364 = dma.done %s357, 128
        $region64: #{tpu_custom_call.1} parent=59 // pred_fallthru
          _
        // Predicated region
        $region65: #{tpu_custom_call.1} parent=59 // pred_check
          %p365 = pneg %p180
        $region66: #{tpu_custom_call.1} parent=59 // pred_check_branch
          %367 = sbr.rel (%p365) target = $region68
        $region67: #{tpu_custom_call.1} parent=59 // pred_region
          %368 = dma.done [#allocation6], 512
        $region68: #{tpu_custom_call.1} parent=59 // pred_fallthru
          _
        %s369 = sand.u32 %s36, 1
        %s370 = scalar_lea.sflag [#allocation3], %s369
        %s371 = sand.u32 %s36, 1
        %s372 = smul.addr %s371, 8
        %s373 = scalar_lea.vmem [#allocation2], %s372
        %p374 = pneg %p49
        %p375 = pneg %p46
        %s376 = smul.u32 2, %s28
        %p377 = scmp.lt.s32.totalorder %s376, 3
        %s378 = scalar_select %p377, %s376, 3
        %s379 = smul.addr %s378, 8
        %s380 = scalar_lea.vmem %s1, %s379
        %p381 = pneg %p75
        %p382 = pneg %p72
        %p383 = pneg %p96
        %p384 = pneg %p93
        %p385 = pneg %p117
        %p386 = pneg %p114
        %p387 = pneg %p138
        %p388 = pneg %p135
        %p389 = pneg %p159
        %p390 = pneg %p156
        %p391 = pneg %p180
        %p392 = pneg %p177
        %p393 = pneg %p201
        %p394 = pneg %p198
        %p395 = pneg %p222
        %p396 = pneg %p219
        %p397 = pneg %p243
        %p398 = pneg %p240
        %p399 = pneg %p269
        %p400 = pneg %p266
        %s401 = sand.u32 %s256, 1
        %s402 = scalar_lea.sflag [#allocation4], %s401
        %s403 = sand.u32 %s256, 1
        %s404 = smul.addr %s403, 8
        %s405 = scalar_lea.vmem [#allocation7], %s404
        %s406 = smul.u32 2, %s28
        %p407 = scmp.lt.s32.totalorder %s406, 3
        %s408 = scalar_select %p407, %s406, 3
        %s409 = smul.addr %s408, 8
        %s410 = scalar_lea.vmem %s1, %s409
        %s411 = smul.u32 2, %s28
        %v412 = vld [vmem:[%s360] sm:$0xff]
        %v413 = vld [vmem:[%s410] sm:$0xff]
        %v414 = vld [vmem:[%s410 + $0x8] sm:$0xff]
        %v415 = vld [vmem:[%s2] sm:$0xff]
        %v416 = vld [vmem:[%s2 + $0x8] sm:$0xff]
        %v417 = vld [vmem:[%s2 + $0x10] sm:$0xff]
        %v418 = vld [vmem:[%s2 + $0x18] sm:$0xff]
        %v419 = vld [vmem:[%s3] sm:$0x1]
        %v420 = vld [vmem:[%s4] sm:$0xff]
        %v421 = vld [vmem:[%s4 + $0x8] sm:$0xff]
        %v422 = vld [vmem:[%s4 + $0x10] sm:$0xff]
        %v423 = vld [vmem:[%s4 + $0x18] sm:$0xff]
        %v424 = vld [vmem:[%s5] sm:$0x1]
        %v425 = vld [vmem:[%s9] sm:$0xff]
        %v427 = vlaneseq
        %v428 = vshrl.u32 %v427, 7
        %v429 = vsub.s32 0, %v428
        %v430 = vrot.slane %v419, %v429
        %vm432 = vcmask 261120
        %v434 = vsel %vm432, %v412, 0
        %436 = vmatprep.subr.mxu0 0.0
        %437 = vmatpush1.msra.mxu0 %v415
        %438 = vmatprep.subr.mxu0 0.0
        %439 = vmatpush1.msra.mxu0 %v416
        %440 = vmatprep.subr.mxu0 0.0
        %441 = vmatpush1.msra.mxu0 %v417
        %442 = vmatprep.subr.mxu0 0.0
        %443 = vmatpush1.msra.mxu0 %v418
        %444 = vmatprep.subr.mxu0 0.0
        %445 = vmatpush1.msra.mxu0 0.0
        %446 = vmatprep.subr.mxu0 0.0
        %447 = vmatpush1.msra.mxu0 0.0
        %448 = vmatprep.subr.mxu0 0.0
        %449 = vmatpush1.msra.mxu0 0.0
        %450 = vmatprep.subr.mxu0 0.0
        %451 = vmatpush1.msra.mxu0 0.0
        %452 = vmatprep.subr.mxu0 0.0
        %453 = vmatpush1.msra.mxu0 0.0
        %454 = vmatprep.subr.mxu0 0.0
        %455 = vmatpush1.msra.mxu0 0.0
        %456 = vmatprep.subr.mxu0 0.0
        %457 = vmatpush1.msra.mxu0 0.0
        %458 = vmatprep.subr.mxu0 0.0
        %459 = vmatpush1.msra.mxu0 0.0
        %460 = vmatprep.subr.mxu0 0.0
        %461 = vmatpush1.msra.mxu0 0.0
        %462 = vmatprep.subr.mxu0 0.0
        %463 = vmatpush1.msra.mxu0 0.0
        %464 = vmatprep.subr.mxu0 0.0
        %465 = vmatpush1.msra.mxu0 0.0
        %466 = vmatprep.subr.mxu0 0.0
        %467 = vmatpush1.msra.mxu0 0.0
        %468 = vmatprep.subr.mxu0 0.0
        %469 = vmatpush1.msra.mxu0 0.0
        %470 = vmatprep.subr.mxu0 0.0
        %471 = vmatpush1.msra.mxu0 0.0
        %472 = vmatprep.subr.mxu0 0.0
        %473 = vmatpush1.msra.mxu0 0.0
        %474 = vmatprep.subr.mxu0 0.0
        %475 = vmatpush1.msra.mxu0 0.0
        %476 = vmatprep.subr.mxu0 0.0
        %477 = vmatpush1.msra.mxu0 0.0
        %478 = vmatprep.subr.mxu0 0.0
        %479 = vmatpush1.msra.mxu0 0.0
        %480 = vmatprep.subr.mxu0 0.0
        %481 = vmatpush1.msra.mxu0 0.0
        %482 = vmatprep.subr.mxu0 0.0
        %483 = vmatpush1.msra.mxu0 0.0
        %484 = vmatprep.subr.mxu0 0.0
        %485 = vmatpush1.msra.mxu0 0.0
        %486 = vmatprep.subr.mxu0 0.0
        %487 = vmatpush1.msra.mxu0 0.0
        %488 = vmatprep.subr.mxu0 0.0
        %489 = vmatpush1.msra.mxu0 0.0
        %490 = vmatprep.subr.mxu0 0.0
        %491 = vmatpush1.msra.mxu0 0.0
        %492 = vmatprep.subr.mxu0 0.0
        %493 = vmatpush1.msra.mxu0 0.0
        %494 = vmatprep.subr.mxu0 0.0
        %495 = vmatpush1.msra.mxu0 0.0
        %496 = vmatprep.subr.mxu0 0.0
        %497 = vmatpush1.msra.mxu0 0.0
        %498 = vmatprep.subr.mxu0 0.0
        %499 = vmatpush1.msra.mxu0 0.0
        %500 = vmatprep.mubr.f32.mxu0 0.0
        %501 = vmatmul.mubr.f32.gmra.mrb[0].mxu0 %v434
        %v502 = vpop.f32.mrb[0].mxu0
        %v503 = vadd.f32 %v430, %v502
        %v504 = vpop.f32.mrb[0].mxu0
        %505 = vdwg.mxu0
        %507 = vrot.lane.b32.xlu0 %v503, 96
        %v508 = vpop.permute.xlu0 %507
        %vm509 = vcmask 64512
        %v510 = vsel %vm509, %v503, 0
        %v512 = vsel %vm509, %v508, 0
        %514 = vmatprep.subr.mxu0 0.0
        %515 = vmatpush1.xpose.msra.mxu0 %v512
        %516 = vmatprep.subr.mxu0 0.0
        %517 = vmatpush1.xpose.msra.mxu0 0.0
        %518 = vmatprep.subr.mxu0 0.0
        %519 = vmatpush1.xpose.msra.mxu0 0.0
        %520 = vmatprep.subr.mxu0 0.0
        %521 = vmatpush1.xpose.msra.mxu0 0.0
        %522 = vmatprep.subr.mxu0 0.0
        %523 = vmatpush1.xpose.msra.mxu0 0.0
        %524 = vmatprep.subr.mxu0 0.0
        %525 = vmatpush1.xpose.msra.mxu0 0.0
        %526 = vmatprep.subr.mxu0 0.0
        %527 = vmatpush1.xpose.msra.mxu0 0.0
        %528 = vmatprep.subr.mxu0 0.0
        %529 = vmatpush1.xpose.msra.mxu0 0.0
        %530 = vmatprep.subr.mxu0 0.0
        %531 = vmatpush1.xpose.msra.mxu0 0.0
        %532 = vmatprep.subr.mxu0 0.0
        %533 = vmatpush1.xpose.msra.mxu0 0.0
        %534 = vmatprep.subr.mxu0 0.0
        %535 = vmatpush1.xpose.msra.mxu0 0.0
        %536 = vmatprep.subr.mxu0 0.0
        %537 = vmatpush1.xpose.msra.mxu0 0.0
        %538 = vmatprep.subr.mxu0 0.0
        %539 = vmatpush1.xpose.msra.mxu0 0.0
        %540 = vmatprep.subr.mxu0 0.0
        %541 = vmatpush1.xpose.msra.mxu0 0.0
        %542 = vmatprep.subr.mxu0 0.0
        %543 = vmatpush1.xpose.msra.mxu0 0.0
        %544 = vmatprep.subr.mxu0 0.0
        %545 = vmatpush1.xpose.msra.mxu0 0.0
        %546 = vmatprep.subr.mxu0 0.0
        %547 = vmatpush1.xpose.msra.mxu0 0.0
        %548 = vmatprep.subr.mxu0 0.0
        %549 = vmatpush1.xpose.msra.mxu0 0.0
        %550 = vmatprep.subr.mxu0 0.0
        %551 = vmatpush1.xpose.msra.mxu0 0.0
        %552 = vmatprep.subr.mxu0 0.0
        %553 = vmatpush1.xpose.msra.mxu0 0.0
        %554 = vmatprep.subr.mxu0 0.0
        %555 = vmatpush1.xpose.msra.mxu0 0.0
        %556 = vmatprep.subr.mxu0 0.0
        %557 = vmatpush1.xpose.msra.mxu0 0.0
        %558 = vmatprep.subr.mxu0 0.0
        %559 = vmatpush1.xpose.msra.mxu0 0.0
        %560 = vmatprep.subr.mxu0 0.0
        %561 = vmatpush1.xpose.msra.mxu0 0.0
        %562 = vmatprep.subr.mxu0 0.0
        %563 = vmatpush1.xpose.msra.mxu0 0.0
        %564 = vmatprep.subr.mxu0 0.0
        %565 = vmatpush1.xpose.msra.mxu0 0.0
        %566 = vmatprep.subr.mxu0 0.0
        %567 = vmatpush1.xpose.msra.mxu0 0.0
        %568 = vmatprep.subr.mxu0 0.0
        %569 = vmatpush1.xpose.msra.mxu0 0.0
        %570 = vmatprep.subr.mxu0 0.0
        %571 = vmatpush1.xpose.msra.mxu0 0.0
        %572 = vmatprep.subr.mxu0 0.0
        %573 = vmatpush1.xpose.msra.mxu0 0.0
        %574 = vmatprep.subr.mxu0 0.0
        %575 = vmatpush1.xpose.msra.mxu0 0.0
        %576 = vmatprep.subr.mxu0 0.0
        %577 = vmatpush1.xpose.msra.mxu0 0.0
        %578 = vmatprep.mubr.f32.mxu0 0.0
        %579 = vmatmul.mubr.f32.gmra.mrb[0].mxu0 %v510
        %v580 = vpop.f32.mrb[0].mxu0
        %v581 = vadd.f32 0.0, %v580
        %v582 = vpop.f32.mrb[0].mxu0
        %583 = vdwg.mxu0
        %v584 = vmul.f32 %v581, 0.35355338
        %v585 = vsel %vm509, %v584, -inf
        %586 = vmax.xlane.f32.xlu0 %v585
        %v587 = vpop.xlane.xlu0 %586
        %v588 = vsub.f32 %v584, %v587
        %v589 = vmul.f32 %v588, 1.442695
        %v590 = vpow.pop %v589
        %v591 = vsel %vm509, %v590, 0.0
        %592 = vadd.xlane.f32.xlu0 %v591
        %v593 = vpop.xlane.xlu0 %592
        %v594 = vrcp.pop %v593
        %v595 = vmul.f32 %v590, %v594
        %596 = vrot.lane.b32.xlu0 %v503, 64
        %v597 = vpop.permute.xlu0 %596
        %v600 = vsel %vm509, %v595, 0
        %602 = vmatprep.subr.mxu0 0.0
        %603 = vmatpush1.msra.mxu0 %v597
        %604 = vmatprep.subr.mxu0 0.0
        %605 = vmatpush1.msra.mxu0 0.0
        %606 = vmatprep.subr.mxu0 0.0
        %607 = vmatpush1.msra.mxu0 0.0
        %608 = vmatprep.subr.mxu0 0.0
        %609 = vmatpush1.msra.mxu0 0.0
        %610 = vmatprep.subr.mxu0 0.0
        %611 = vmatpush1.msra.mxu0 0.0
        %612 = vmatprep.subr.mxu0 0.0
        %613 = vmatpush1.msra.mxu0 0.0
        %614 = vmatprep.subr.mxu0 0.0
        %615 = vmatpush1.msra.mxu0 0.0
        %616 = vmatprep.subr.mxu0 0.0
        %617 = vmatpush1.msra.mxu0 0.0
        %618 = vmatprep.subr.mxu0 0.0
        %619 = vmatpush1.msra.mxu0 0.0
        %620 = vmatprep.subr.mxu0 0.0
        %621 = vmatpush1.msra.mxu0 0.0
        %622 = vmatprep.subr.mxu0 0.0
        %623 = vmatpush1.msra.mxu0 0.0
        %624 = vmatprep.subr.mxu0 0.0
        %625 = vmatpush1.msra.mxu0 0.0
        %626 = vmatprep.subr.mxu0 0.0
        %627 = vmatpush1.msra.mxu0 0.0
        %628 = vmatprep.subr.mxu0 0.0
        %629 = vmatpush1.msra.mxu0 0.0
        %630 = vmatprep.subr.mxu0 0.0
        %631 = vmatpush1.msra.mxu0 0.0
        %632 = vmatprep.subr.mxu0 0.0
        %633 = vmatpush1.msra.mxu0 0.0
        %634 = vmatprep.subr.mxu0 0.0
        %635 = vmatpush1.msra.mxu0 0.0
        %636 = vmatprep.subr.mxu0 0.0
        %637 = vmatpush1.msra.mxu0 0.0
        %638 = vmatprep.subr.mxu0 0.0
        %639 = vmatpush1.msra.mxu0 0.0
        %640 = vmatprep.subr.mxu0 0.0
        %641 = vmatpush1.msra.mxu0 0.0
        %642 = vmatprep.subr.mxu0 0.0
        %643 = vmatpush1.msra.mxu0 0.0
        %644 = vmatprep.subr.mxu0 0.0
        %645 = vmatpush1.msra.mxu0 0.0
        %646 = vmatprep.subr.mxu0 0.0
        %647 = vmatpush1.msra.mxu0 0.0
        %648 = vmatprep.subr.mxu0 0.0
        %649 = vmatpush1.msra.mxu0 0.0
        %650 = vmatprep.subr.mxu0 0.0
        %651 = vmatpush1.msra.mxu0 0.0
        %652 = vmatprep.subr.mxu0 0.0
        %653 = vmatpush1.msra.mxu0 0.0
        %654 = vmatprep.subr.mxu0 0.0
        %655 = vmatpush1.msra.mxu0 0.0
        %656 = vmatprep.subr.mxu0 0.0
        %657 = vmatpush1.msra.mxu0 0.0
        %658 = vmatprep.subr.mxu0 0.0
        %659 = vmatpush1.msra.mxu0 0.0
        %660 = vmatprep.subr.mxu0 0.0
        %661 = vmatpush1.msra.mxu0 0.0
        %662 = vmatprep.subr.mxu0 0.0
        %663 = vmatpush1.msra.mxu0 0.0
        %664 = vmatprep.subr.mxu0 0.0
        %665 = vmatpush1.msra.mxu0 0.0
        %666 = vmatprep.mubr.f32.mxu0 0.0
        %667 = vmatmul.mubr.f32.gmra.mrb[0].mxu0 %v600
        %v668 = vpop.f32.mrb[0].mxu0
        %v669 = vadd.f32 0.0, %v668
        %v670 = vpop.f32.mrb[0].mxu0
        %671 = vdwg.mxu0
        %672 = vrot.lane.b32.xlu0 %v503, 120
        %v673 = vpop.permute.xlu0 %672
        %674 = vrot.lane.b32.xlu0 %v503, 88
        %v675 = vpop.permute.xlu0 %674
        %v676 = vsel %vm509, %v673, 0
        %v678 = vsel %vm509, %v675, 0
        %680 = vmatprep.subr.mxu0 0.0
        %681 = vmatpush1.xpose.msra.mxu0 %v678
        %682 = vmatprep.subr.mxu0 0.0
        %683 = vmatpush1.xpose.msra.mxu0 0.0
        %684 = vmatprep.subr.mxu0 0.0
        %685 = vmatpush1.xpose.msra.mxu0 0.0
        %686 = vmatprep.subr.mxu0 0.0
        %687 = vmatpush1.xpose.msra.mxu0 0.0
        %688 = vmatprep.subr.mxu0 0.0
        %689 = vmatpush1.xpose.msra.mxu0 0.0
        %690 = vmatprep.subr.mxu0 0.0
        %691 = vmatpush1.xpose.msra.mxu0 0.0
        %692 = vmatprep.subr.mxu0 0.0
        %693 = vmatpush1.xpose.msra.mxu0 0.0
        %694 = vmatprep.subr.mxu0 0.0
        %695 = vmatpush1.xpose.msra.mxu0 0.0
        %696 = vmatprep.subr.mxu0 0.0
        %697 = vmatpush1.xpose.msra.mxu0 0.0
        %698 = vmatprep.subr.mxu0 0.0
        %699 = vmatpush1.xpose.msra.mxu0 0.0
        %700 = vmatprep.subr.mxu0 0.0
        %701 = vmatpush1.xpose.msra.mxu0 0.0
        %702 = vmatprep.subr.mxu0 0.0
        %703 = vmatpush1.xpose.msra.mxu0 0.0
        %704 = vmatprep.subr.mxu0 0.0
        %705 = vmatpush1.xpose.msra.mxu0 0.0
        %706 = vmatprep.subr.mxu0 0.0
        %707 = vmatpush1.xpose.msra.mxu0 0.0
        %708 = vmatprep.subr.mxu0 0.0
        %709 = vmatpush1.xpose.msra.mxu0 0.0
        %710 = vmatprep.subr.mxu0 0.0
        %711 = vmatpush1.xpose.msra.mxu0 0.0
        %712 = vmatprep.subr.mxu0 0.0
        %713 = vmatpush1.xpose.msra.mxu0 0.0
        %714 = vmatprep.subr.mxu0 0.0
        %715 = vmatpush1.xpose.msra.mxu0 0.0
        %716 = vmatprep.subr.mxu0 0.0
        %717 = vmatpush1.xpose.msra.mxu0 0.0
        %718 = vmatprep.subr.mxu0 0.0
        %719 = vmatpush1.xpose.msra.mxu0 0.0
        %720 = vmatprep.subr.mxu0 0.0
        %721 = vmatpush1.xpose.msra.mxu0 0.0
        %722 = vmatprep.subr.mxu0 0.0
        %723 = vmatpush1.xpose.msra.mxu0 0.0
        %724 = vmatprep.subr.mxu0 0.0
        %725 = vmatpush1.xpose.msra.mxu0 0.0
        %726 = vmatprep.subr.mxu0 0.0
        %727 = vmatpush1.xpose.msra.mxu0 0.0
        %728 = vmatprep.subr.mxu0 0.0
        %729 = vmatpush1.xpose.msra.mxu0 0.0
        %730 = vmatprep.subr.mxu0 0.0
        %731 = vmatpush1.xpose.msra.mxu0 0.0
        %732 = vmatprep.subr.mxu0 0.0
        %733 = vmatpush1.xpose.msra.mxu0 0.0
        %734 = vmatprep.subr.mxu0 0.0
        %735 = vmatpush1.xpose.msra.mxu0 0.0
        %736 = vmatprep.subr.mxu0 0.0
        %737 = vmatpush1.xpose.msra.mxu0 0.0
        %738 = vmatprep.subr.mxu0 0.0
        %739 = vmatpush1.xpose.msra.mxu0 0.0
        %740 = vmatprep.subr.mxu0 0.0
        %741 = vmatpush1.xpose.msra.mxu0 0.0
        %742 = vmatprep.subr.mxu0 0.0
        %743 = vmatpush1.xpose.msra.mxu0 0.0
        %744 = vmatprep.mubr.f32.mxu0 0.0
        %745 = vmatmul.mubr.f32.gmra.mrb[0].mxu0 %v676
        %v746 = vpop.f32.mrb[0].mxu0
        %v747 = vadd.f32 0.0, %v746
        %v748 = vpop.f32.mrb[0].mxu0
        %749 = vdwg.mxu0
        %v750 = vmul.f32 %v747, 0.35355338
        %v751 = vsel %vm509, %v750, -inf
        %752 = vmax.xlane.f32.xlu0 %v751
        %v753 = vpop.xlane.xlu0 %752
        %v754 = vsub.f32 %v750, %v753
        %v755 = vmul.f32 %v754, 1.442695
        %v756 = vpow.pop %v755
        %v757 = vsel %vm509, %v756, 0.0
        %758 = vadd.xlane.f32.xlu0 %v757
        %v759 = vpop.xlane.xlu0 %758
        %v760 = vrcp.pop %v759
        %v761 = vmul.f32 %v756, %v760
        %762 = vrot.lane.b32.xlu0 %v503, 56
        %v763 = vpop.permute.xlu0 %762
        %v766 = vsel %vm509, %v761, 0
        %768 = vmatprep.subr.mxu0 0.0
        %769 = vmatpush1.msra.mxu0 %v763
        %770 = vmatprep.subr.mxu0 0.0
        %771 = vmatpush1.msra.mxu0 0.0
        %772 = vmatprep.subr.mxu0 0.0
        %773 = vmatpush1.msra.mxu0 0.0
        %774 = vmatprep.subr.mxu0 0.0
        %775 = vmatpush1.msra.mxu0 0.0
        %776 = vmatprep.subr.mxu0 0.0
        %777 = vmatpush1.msra.mxu0 0.0
        %778 = vmatprep.subr.mxu0 0.0
        %779 = vmatpush1.msra.mxu0 0.0
        %780 = vmatprep.subr.mxu0 0.0
        %781 = vmatpush1.msra.mxu0 0.0
        %782 = vmatprep.subr.mxu0 0.0
        %783 = vmatpush1.msra.mxu0 0.0
        %784 = vmatprep.subr.mxu0 0.0
        %785 = vmatpush1.msra.mxu0 0.0
        %786 = vmatprep.subr.mxu0 0.0
        %787 = vmatpush1.msra.mxu0 0.0
        %788 = vmatprep.subr.mxu0 0.0
        %789 = vmatpush1.msra.mxu0 0.0
        %790 = vmatprep.subr.mxu0 0.0
        %791 = vmatpush1.msra.mxu0 0.0
        %792 = vmatprep.subr.mxu0 0.0
        %793 = vmatpush1.msra.mxu0 0.0
        %794 = vmatprep.subr.mxu0 0.0
        %795 = vmatpush1.msra.mxu0 0.0
        %796 = vmatprep.subr.mxu0 0.0
        %797 = vmatpush1.msra.mxu0 0.0
        %798 = vmatprep.subr.mxu0 0.0
        %799 = vmatpush1.msra.mxu0 0.0
        %800 = vmatprep.subr.mxu0 0.0
        %801 = vmatpush1.msra.mxu0 0.0
        %802 = vmatprep.subr.mxu0 0.0
        %803 = vmatpush1.msra.mxu0 0.0
        %804 = vmatprep.subr.mxu0 0.0
        %805 = vmatpush1.msra.mxu0 0.0
        %806 = vmatprep.subr.mxu0 0.0
        %807 = vmatpush1.msra.mxu0 0.0
        %808 = vmatprep.subr.mxu0 0.0
        %809 = vmatpush1.msra.mxu0 0.0
        %810 = vmatprep.subr.mxu0 0.0
        %811 = vmatpush1.msra.mxu0 0.0
        %812 = vmatprep.subr.mxu0 0.0
        %813 = vmatpush1.msra.mxu0 0.0
        %814 = vmatprep.subr.mxu0 0.0
        %815 = vmatpush1.msra.mxu0 0.0
        %816 = vmatprep.subr.mxu0 0.0
        %817 = vmatpush1.msra.mxu0 0.0
        %818 = vmatprep.subr.mxu0 0.0
        %819 = vmatpush1.msra.mxu0 0.0
        %820 = vmatprep.subr.mxu0 0.0
        %821 = vmatpush1.msra.mxu0 0.0
        %822 = vmatprep.subr.mxu0 0.0
        %823 = vmatpush1.msra.mxu0 0.0
        %824 = vmatprep.subr.mxu0 0.0
        %825 = vmatpush1.msra.mxu0 0.0
        %826 = vmatprep.subr.mxu0 0.0
        %827 = vmatpush1.msra.mxu0 0.0
        %828 = vmatprep.subr.mxu0 0.0
        %829 = vmatpush1.msra.mxu0 0.0
        %830 = vmatprep.subr.mxu0 0.0
        %831 = vmatpush1.msra.mxu0 0.0
        %832 = vmatprep.mubr.f32.mxu0 0.0
        %833 = vmatmul.mubr.f32.gmra.mrb[0].mxu0 %v766
        %v834 = vpop.f32.mrb[0].mxu0
        %v835 = vadd.f32 0.0, %v834
        %v836 = vpop.f32.mrb[0].mxu0
        %837 = vdwg.mxu0
        %838 = vrot.lane.b32.xlu0 %v503, 112
        %v839 = vpop.permute.xlu0 %838
        %840 = vrot.lane.b32.xlu0 %v503, 80
        %v841 = vpop.permute.xlu0 %840
        %v842 = vsel %vm509, %v839, 0
        %v844 = vsel %vm509, %v841, 0
        %846 = vmatprep.subr.mxu0 0.0
        %847 = vmatpush1.xpose.msra.mxu0 %v844
        %848 = vmatprep.subr.mxu0 0.0
        %849 = vmatpush1.xpose.msra.mxu0 0.0
        %850 = vmatprep.subr.mxu0 0.0
        %851 = vmatpush1.xpose.msra.mxu0 0.0
        %852 = vmatprep.subr.mxu0 0.0
        %853 = vmatpush1.xpose.msra.mxu0 0.0
        %854 = vmatprep.subr.mxu0 0.0
        %855 = vmatpush1.xpose.msra.mxu0 0.0
        %856 = vmatprep.subr.mxu0 0.0
        %857 = vmatpush1.xpose.msra.mxu0 0.0
        %858 = vmatprep.subr.mxu0 0.0
        %859 = vmatpush1.xpose.msra.mxu0 0.0
        %860 = vmatprep.subr.mxu0 0.0
        %861 = vmatpush1.xpose.msra.mxu0 0.0
        %862 = vmatprep.subr.mxu0 0.0
        %863 = vmatpush1.xpose.msra.mxu0 0.0
        %864 = vmatprep.subr.mxu0 0.0
        %865 = vmatpush1.xpose.msra.mxu0 0.0
        %866 = vmatprep.subr.mxu0 0.0
        %867 = vmatpush1.xpose.msra.mxu0 0.0
        %868 = vmatprep.subr.mxu0 0.0
        %869 = vmatpush1.xpose.msra.mxu0 0.0
        %870 = vmatprep.subr.mxu0 0.0
        %871 = vmatpush1.xpose.msra.mxu0 0.0
        %872 = vmatprep.subr.mxu0 0.0
        %873 = vmatpush1.xpose.msra.mxu0 0.0
        %874 = vmatprep.subr.mxu0 0.0
        %875 = vmatpush1.xpose.msra.mxu0 0.0
        %876 = vmatprep.subr.mxu0 0.0
        %877 = vmatpush1.xpose.msra.mxu0 0.0
        %878 = vmatprep.subr.mxu0 0.0
        %879 = vmatpush1.xpose.msra.mxu0 0.0
        %880 = vmatprep.subr.mxu0 0.0
        %881 = vmatpush1.xpose.msra.mxu0 0.0
        %882 = vmatprep.subr.mxu0 0.0
        %883 = vmatpush1.xpose.msra.mxu0 0.0
        %884 = vmatprep.subr.mxu0 0.0
        %885 = vmatpush1.xpose.msra.mxu0 0.0
        %886 = vmatprep.subr.mxu0 0.0
        %887 = vmatpush1.xpose.msra.mxu0 0.0
        %888 = vmatprep.subr.mxu0 0.0
        %889 = vmatpush1.xpose.msra.mxu0 0.0
        %890 = vmatprep.subr.mxu0 0.0
        %891 = vmatpush1.xpose.msra.mxu0 0.0
        %892 = vmatprep.subr.mxu0 0.0
        %893 = vmatpush1.xpose.msra.mxu0 0.0
        %894 = vmatprep.subr.mxu0 0.0
        %895 = vmatpush1.xpose.msra.mxu0 0.0
        %896 = vmatprep.subr.mxu0 0.0
        %897 = vmatpush1.xpose.msra.mxu0 0.0
        %898 = vmatprep.subr.mxu0 0.0
        %899 = vmatpush1.xpose.msra.mxu0 0.0
        %900 = vmatprep.subr.mxu0 0.0
        %901 = vmatpush1.xpose.msra.mxu0 0.0
        %902 = vmatprep.subr.mxu0 0.0
        %903 = vmatpush1.xpose.msra.mxu0 0.0
        %904 = vmatprep.subr.mxu0 0.0
        %905 = vmatpush1.xpose.msra.mxu0 0.0
        %906 = vmatprep.subr.mxu0 0.0
        %907 = vmatpush1.xpose.msra.mxu0 0.0
        %908 = vmatprep.subr.mxu0 0.0
        %909 = vmatpush1.xpose.msra.mxu0 0.0
        %910 = vmatprep.mubr.f32.mxu0 0.0
        %911 = vmatmul.mubr.f32.gmra.mrb[0].mxu0 %v842
        %v912 = vpop.f32.mrb[0].mxu0
        %v913 = vadd.f32 0.0, %v912
        %v914 = vpop.f32.mrb[0].mxu0
        %915 = vdwg.mxu0
        %v916 = vmul.f32 %v913, 0.35355338
        %v917 = vsel %vm509, %v916, -inf
        %918 = vmax.xlane.f32.xlu0 %v917
        %v919 = vpop.xlane.xlu0 %918
        %v920 = vsub.f32 %v916, %v919
        %v921 = vmul.f32 %v920, 1.442695
        %v922 = vpow.pop %v921
        %v923 = vsel %vm509, %v922, 0.0
        %924 = vadd.xlane.f32.xlu0 %v923
        %v925 = vpop.xlane.xlu0 %924
        %v926 = vrcp.pop %v925
        %v927 = vmul.f32 %v922, %v926
        %928 = vrot.lane.b32.xlu0 %v503, 48
        %v929 = vpop.permute.xlu0 %928
        %v932 = vsel %vm509, %v927, 0
        %934 = vmatprep.subr.mxu0 0.0
        %935 = vmatpush1.msra.mxu0 %v929
        %936 = vmatprep.subr.mxu0 0.0
        %937 = vmatpush1.msra.mxu0 0.0
        %938 = vmatprep.subr.mxu0 0.0
        %939 = vmatpush1.msra.mxu0 0.0
        %940 = vmatprep.subr.mxu0 0.0
        %941 = vmatpush1.msra.mxu0 0.0
        %942 = vmatprep.subr.mxu0 0.0
        %943 = vmatpush1.msra.mxu0 0.0
        %944 = vmatprep.subr.mxu0 0.0
        %945 = vmatpush1.msra.mxu0 0.0
        %946 = vmatprep.subr.mxu0 0.0
        %947 = vmatpush1.msra.mxu0 0.0
        %948 = vmatprep.subr.mxu0 0.0
        %949 = vmatpush1.msra.mxu0 0.0
        %950 = vmatprep.subr.mxu0 0.0
        %951 = vmatpush1.msra.mxu0 0.0
        %952 = vmatprep.subr.mxu0 0.0
        %953 = vmatpush1.msra.mxu0 0.0
        %954 = vmatprep.subr.mxu0 0.0
        %955 = vmatpush1.msra.mxu0 0.0
        %956 = vmatprep.subr.mxu0 0.0
        %957 = vmatpush1.msra.mxu0 0.0
        %958 = vmatprep.subr.mxu0 0.0
        %959 = vmatpush1.msra.mxu0 0.0
        %960 = vmatprep.subr.mxu0 0.0
        %961 = vmatpush1.msra.mxu0 0.0
        %962 = vmatprep.subr.mxu0 0.0
        %963 = vmatpush1.msra.mxu0 0.0
        %964 = vmatprep.subr.mxu0 0.0
        %965 = vmatpush1.msra.mxu0 0.0
        %966 = vmatprep.subr.mxu0 0.0
        %967 = vmatpush1.msra.mxu0 0.0
        %968 = vmatprep.subr.mxu0 0.0
        %969 = vmatpush1.msra.mxu0 0.0
        %970 = vmatprep.subr.mxu0 0.0
        %971 = vmatpush1.msra.mxu0 0.0
        %972 = vmatprep.subr.mxu0 0.0
        %973 = vmatpush1.msra.mxu0 0.0
        %974 = vmatprep.subr.mxu0 0.0
        %975 = vmatpush1.msra.mxu0 0.0
        %976 = vmatprep.subr.mxu0 0.0
        %977 = vmatpush1.msra.mxu0 0.0
        %978 = vmatprep.subr.mxu0 0.0
        %979 = vmatpush1.msra.mxu0 0.0
        %980 = vmatprep.subr.mxu0 0.0
        %981 = vmatpush1.msra.mxu0 0.0
        %982 = vmatprep.subr.mxu0 0.0
        %983 = vmatpush1.msra.mxu0 0.0
        %984 = vmatprep.subr.mxu0 0.0
        %985 = vmatpush1.msra.mxu0 0.0
        %986 = vmatprep.subr.mxu0 0.0
        %987 = vmatpush1.msra.mxu0 0.0
        %988 = vmatprep.subr.mxu0 0.0
        %989 = vmatpush1.msra.mxu0 0.0
        %990 = vmatprep.subr.mxu0 0.0
        %991 = vmatpush1.msra.mxu0 0.0
        %992 = vmatprep.subr.mxu0 0.0
        %993 = vmatpush1.msra.mxu0 0.0
        %994 = vmatprep.subr.mxu0 0.0
        %995 = vmatpush1.msra.mxu0 0.0
        %996 = vmatprep.subr.mxu0 0.0
        %997 = vmatpush1.msra.mxu0 0.0
        %998 = vmatprep.mubr.f32.mxu0 0.0
        %999 = vmatmul.mubr.f32.gmra.mrb[0].mxu0 %v932
        %v1000 = vpop.f32.mrb[0].mxu0
        %v1001 = vadd.f32 0.0, %v1000
        %v1002 = vpop.f32.mrb[0].mxu0
        %1003 = vdwg.mxu0
        %1004 = vrot.lane.b32.xlu0 %v503, 104
        %v1005 = vpop.permute.xlu0 %1004
        %1006 = vrot.lane.b32.xlu0 %v503, 72
        %v1007 = vpop.permute.xlu0 %1006
        %v1008 = vsel %vm509, %v1005, 0
        %v1010 = vsel %vm509, %v1007, 0
        %1012 = vmatprep.subr.mxu0 0.0
        %1013 = vmatpush1.xpose.msra.mxu0 %v1010
        %1014 = vmatprep.subr.mxu0 0.0
        %1015 = vmatpush1.xpose.msra.mxu0 0.0
        %1016 = vmatprep.subr.mxu0 0.0
        %1017 = vmatpush1.xpose.msra.mxu0 0.0
        %1018 = vmatprep.subr.mxu0 0.0
        %1019 = vmatpush1.xpose.msra.mxu0 0.0
        %1020 = vmatprep.subr.mxu0 0.0
        %1021 = vmatpush1.xpose.msra.mxu0 0.0
        %1022 = vmatprep.subr.mxu0 0.0
        %1023 = vmatpush1.xpose.msra.mxu0 0.0
        %1024 = vmatprep.subr.mxu0 0.0
        %1025 = vmatpush1.xpose.msra.mxu0 0.0
        %1026 = vmatprep.subr.mxu0 0.0
        %1027 = vmatpush1.xpose.msra.mxu0 0.0
        %1028 = vmatprep.subr.mxu0 0.0
        %1029 = vmatpush1.xpose.msra.mxu0 0.0
        %1030 = vmatprep.subr.mxu0 0.0
        %1031 = vmatpush1.xpose.msra.mxu0 0.0
        %1032 = vmatprep.subr.mxu0 0.0
        %1033 = vmatpush1.xpose.msra.mxu0 0.0
        %1034 = vmatprep.subr.mxu0 0.0
        %1035 = vmatpush1.xpose.msra.mxu0 0.0
        %1036 = vmatprep.subr.mxu0 0.0
        %1037 = vmatpush1.xpose.msra.mxu0 0.0
        %1038 = vmatprep.subr.mxu0 0.0
        %1039 = vmatpush1.xpose.msra.mxu0 0.0
        %1040 = vmatprep.subr.mxu0 0.0
        %1041 = vmatpush1.xpose.msra.mxu0 0.0
        %1042 = vmatprep.subr.mxu0 0.0
        %1043 = vmatpush1.xpose.msra.mxu0 0.0
        %1044 = vmatprep.subr.mxu0 0.0
        %1045 = vmatpush1.xpose.msra.mxu0 0.0
        %1046 = vmatprep.subr.mxu0 0.0
        %1047 = vmatpush1.xpose.msra.mxu0 0.0
        %1048 = vmatprep.subr.mxu0 0.0
        %1049 = vmatpush1.xpose.msra.mxu0 0.0
        %1050 = vmatprep.subr.mxu0 0.0
        %1051 = vmatpush1.xpose.msra.mxu0 0.0
        %1052 = vmatprep.subr.mxu0 0.0
        %1053 = vmatpush1.xpose.msra.mxu0 0.0
        %1054 = vmatprep.subr.mxu0 0.0
        %1055 = vmatpush1.xpose.msra.mxu0 0.0
        %1056 = vmatprep.subr.mxu0 0.0
        %1057 = vmatpush1.xpose.msra.mxu0 0.0
        %1058 = vmatprep.subr.mxu0 0.0
        %1059 = vmatpush1.xpose.msra.mxu0 0.0
        %1060 = vmatprep.subr.mxu0 0.0
        %1061 = vmatpush1.xpose.msra.mxu0 0.0
        %1062 = vmatprep.subr.mxu0 0.0
        %1063 = vmatpush1.xpose.msra.mxu0 0.0
        %1064 = vmatprep.subr.mxu0 0.0
        %1065 = vmatpush1.xpose.msra.mxu0 0.0
        %1066 = vmatprep.subr.mxu0 0.0
        %1067 = vmatpush1.xpose.msra.mxu0 0.0
        %1068 = vmatprep.subr.mxu0 0.0
        %1069 = vmatpush1.xpose.msra.mxu0 0.0
        %1070 = vmatprep.subr.mxu0 0.0
        %1071 = vmatpush1.xpose.msra.mxu0 0.0
        %1072 = vmatprep.subr.mxu0 0.0
        %1073 = vmatpush1.xpose.msra.mxu0 0.0
        %1074 = vmatprep.subr.mxu0 0.0
        %1075 = vmatpush1.xpose.msra.mxu0 0.0
        %1076 = vmatprep.mubr.f32.mxu0 0.0
        %1077 = vmatmul.mubr.f32.gmra.mrb[0].mxu0 %v1008
        %v1078 = vpop.f32.mrb[0].mxu0
        %v1079 = vadd.f32 0.0, %v1078
        %v1080 = vpop.f32.mrb[0].mxu0
        %1081 = vdwg.mxu0
        %v1082 = vmul.f32 %v1079, 0.35355338
        %v1083 = vsel %vm509, %v1082, -inf
        %1084 = vmax.xlane.f32.xlu0 %v1083
        %v1085 = vpop.xlane.xlu0 %1084
        %v1086 = vsub.f32 %v1082, %v1085
        %v1087 = vmul.f32 %v1086, 1.442695
        %v1088 = vpow.pop %v1087
        %v1089 = vsel %vm509, %v1088, 0.0
        %1090 = vadd.xlane.f32.xlu0 %v1089
        %v1091 = vpop.xlane.xlu0 %1090
        %v1092 = vrcp.pop %v1091
        %v1093 = vmul.f32 %v1088, %v1092
        %1094 = vrot.lane.b32.xlu0 %v503, 40
        %v1095 = vpop.permute.xlu0 %1094
        %v1098 = vsel %vm509, %v1093, 0
        %1100 = vmatprep.subr.mxu0 0.0
        %1101 = vmatpush1.msra.mxu0 %v1095
        %1102 = vmatprep.subr.mxu0 0.0
        %1103 = vmatpush1.msra.mxu0 0.0
        %1104 = vmatprep.subr.mxu0 0.0
        %1105 = vmatpush1.msra.mxu0 0.0
        %1106 = vmatprep.subr.mxu0 0.0
        %1107 = vmatpush1.msra.mxu0 0.0
        %1108 = vmatprep.subr.mxu0 0.0
        %1109 = vmatpush1.msra.mxu0 0.0
        %1110 = vmatprep.subr.mxu0 0.0
        %1111 = vmatpush1.msra.mxu0 0.0
        %1112 = vmatprep.subr.mxu0 0.0
        %1113 = vmatpush1.msra.mxu0 0.0
        %1114 = vmatprep.subr.mxu0 0.0
        %1115 = vmatpush1.msra.mxu0 0.0
        %1116 = vmatprep.subr.mxu0 0.0
        %1117 = vmatpush1.msra.mxu0 0.0
        %1118 = vmatprep.subr.mxu0 0.0
        %1119 = vmatpush1.msra.mxu0 0.0
        %1120 = vmatprep.subr.mxu0 0.0
        %1121 = vmatpush1.msra.mxu0 0.0
        %1122 = vmatprep.subr.mxu0 0.0
        %1123 = vmatpush1.msra.mxu0 0.0
        %1124 = vmatprep.subr.mxu0 0.0
        %1125 = vmatpush1.msra.mxu0 0.0
        %1126 = vmatprep.subr.mxu0 0.0
        %1127 = vmatpush1.msra.mxu0 0.0
        %1128 = vmatprep.subr.mxu0 0.0
        %1129 = vmatpush1.msra.mxu0 0.0
        %1130 = vmatprep.subr.mxu0 0.0
        %1131 = vmatpush1.msra.mxu0 0.0
        %1132 = vmatprep.subr.mxu0 0.0
        %1133 = vmatpush1.msra.mxu0 0.0
        %1134 = vmatprep.subr.mxu0 0.0
        %1135 = vmatpush1.msra.mxu0 0.0
        %1136 = vmatprep.subr.mxu0 0.0
        %1137 = vmatpush1.msra.mxu0 0.0
        %1138 = vmatprep.subr.mxu0 0.0
        %1139 = vmatpush1.msra.mxu0 0.0
        %1140 = vmatprep.subr.mxu0 0.0
        %1141 = vmatpush1.msra.mxu0 0.0
        %1142 = vmatprep.subr.mxu0 0.0
        %1143 = vmatpush1.msra.mxu0 0.0
        %1144 = vmatprep.subr.mxu0 0.0
        %1145 = vmatpush1.msra.mxu0 0.0
        %1146 = vmatprep.subr.mxu0 0.0
        %1147 = vmatpush1.msra.mxu0 0.0
        %1148 = vmatprep.subr.mxu0 0.0
        %1149 = vmatpush1.msra.mxu0 0.0
        %1150 = vmatprep.subr.mxu0 0.0
        %1151 = vmatpush1.msra.mxu0 0.0
        %1152 = vmatprep.subr.mxu0 0.0
        %1153 = vmatpush1.msra.mxu0 0.0
        %1154 = vmatprep.subr.mxu0 0.0
        %1155 = vmatpush1.msra.mxu0 0.0
        %1156 = vmatprep.subr.mxu0 0.0
        %1157 = vmatpush1.msra.mxu0 0.0
        %1158 = vmatprep.subr.mxu0 0.0
        %1159 = vmatpush1.msra.mxu0 0.0
        %1160 = vmatprep.subr.mxu0 0.0
        %1161 = vmatpush1.msra.mxu0 0.0
        %1162 = vmatprep.subr.mxu0 0.0
        %1163 = vmatpush1.msra.mxu0 0.0
        %1164 = vmatprep.mubr.f32.mxu0 0.0
        %1165 = vmatmul.mubr.f32.gmra.mrb[0].mxu0 %v1098
        %v1166 = vpop.f32.mrb[0].mxu0
        %v1167 = vadd.f32 0.0, %v1166
        %v1168 = vpop.f32.mrb[0].mxu0
        %1169 = vdwg.mxu0
        %1171 = vrot.lane.b32.xlu0 %v835, 8
        %v1172 = vpop.permute.xlu0 %1171
        %1175 = vrot.lane.b32.xlu0 %v1001, 16
        %v1176 = vpop.permute.xlu0 %1175
        %1179 = vrot.lane.b32.xlu0 %v1167, 24
        %v1180 = vpop.permute.xlu0 %1179
        %v1182 = vsel %vm509, %v669, %v1172
        %vm1183 = vcmask 130048
        %v1184 = vsel %vm1183, %v1182, %v1176
        %vm1185 = vcmask 195584
        %v1186 = vsel %vm1185, %v1184, %v1180
        %1191 = vrot.lane.b32.xlu0 %v415, 32
        %v1192 = vpop.permute.xlu0 %1191
        %1193 = vrot.lane.b32.xlu0 %v416, 32
        %v1194 = vpop.permute.xlu0 %1193
        %1195 = vrot.lane.b32.xlu0 %v417, 32
        %v1196 = vpop.permute.xlu0 %1195
        %1197 = vrot.lane.b32.xlu0 %v418, 32
        %v1198 = vpop.permute.xlu0 %1197
        %1203 = vrot.lane.b32.xlu0 %v430, 32
        %v1204 = vpop.permute.xlu0 %1203
        %v1207 = vsel %vm432, %v1186, 0
        %1209 = vmatprep.subr.mxu0 0.0
        %1210 = vmatpush1.msra.mxu0 %v1192
        %1211 = vmatprep.subr.mxu0 0.0
        %1212 = vmatpush1.msra.mxu0 %v1194
        %1213 = vmatprep.subr.mxu0 0.0
        %1214 = vmatpush1.msra.mxu0 %v1196
        %1215 = vmatprep.subr.mxu0 0.0
        %1216 = vmatpush1.msra.mxu0 %v1198
        %1217 = vmatprep.subr.mxu0 0.0
        %1218 = vmatpush1.msra.mxu0 0.0
        %1219 = vmatprep.subr.mxu0 0.0
        %1220 = vmatpush1.msra.mxu0 0.0
        %1221 = vmatprep.subr.mxu0 0.0
        %1222 = vmatpush1.msra.mxu0 0.0
        %1223 = vmatprep.subr.mxu0 0.0
        %1224 = vmatpush1.msra.mxu0 0.0
        %1225 = vmatprep.subr.mxu0 0.0
        %1226 = vmatpush1.msra.mxu0 0.0
        %1227 = vmatprep.subr.mxu0 0.0
        %1228 = vmatpush1.msra.mxu0 0.0
        %1229 = vmatprep.subr.mxu0 0.0
        %1230 = vmatpush1.msra.mxu0 0.0
        %1231 = vmatprep.subr.mxu0 0.0
        %1232 = vmatpush1.msra.mxu0 0.0
        %1233 = vmatprep.subr.mxu0 0.0
        %1234 = vmatpush1.msra.mxu0 0.0
        %1235 = vmatprep.subr.mxu0 0.0
        %1236 = vmatpush1.msra.mxu0 0.0
        %1237 = vmatprep.subr.mxu0 0.0
        %1238 = vmatpush1.msra.mxu0 0.0
        %1239 = vmatprep.subr.mxu0 0.0
        %1240 = vmatpush1.msra.mxu0 0.0
        %1241 = vmatprep.subr.mxu0 0.0
        %1242 = vmatpush1.msra.mxu0 0.0
        %1243 = vmatprep.subr.mxu0 0.0
        %1244 = vmatpush1.msra.mxu0 0.0
        %1245 = vmatprep.subr.mxu0 0.0
        %1246 = vmatpush1.msra.mxu0 0.0
        %1247 = vmatprep.subr.mxu0 0.0
        %1248 = vmatpush1.msra.mxu0 0.0
        %1249 = vmatprep.subr.mxu0 0.0
        %1250 = vmatpush1.msra.mxu0 0.0
        %1251 = vmatprep.subr.mxu0 0.0
        %1252 = vmatpush1.msra.mxu0 0.0
        %1253 = vmatprep.subr.mxu0 0.0
        %1254 = vmatpush1.msra.mxu0 0.0
        %1255 = vmatprep.subr.mxu0 0.0
        %1256 = vmatpush1.msra.mxu0 0.0
        %1257 = vmatprep.subr.mxu0 0.0
        %1258 = vmatpush1.msra.mxu0 0.0
        %1259 = vmatprep.subr.mxu0 0.0
        %1260 = vmatpush1.msra.mxu0 0.0
        %1261 = vmatprep.subr.mxu0 0.0
        %1262 = vmatpush1.msra.mxu0 0.0
        %1263 = vmatprep.subr.mxu0 0.0
        %1264 = vmatpush1.msra.mxu0 0.0
        %1265 = vmatprep.subr.mxu0 0.0
        %1266 = vmatpush1.msra.mxu0 0.0
        %1267 = vmatprep.subr.mxu0 0.0
        %1268 = vmatpush1.msra.mxu0 0.0
        %1269 = vmatprep.subr.mxu0 0.0
        %1270 = vmatpush1.msra.mxu0 0.0
        %1271 = vmatprep.subr.mxu0 0.0
        %1272 = vmatpush1.msra.mxu0 0.0
        %1273 = vmatprep.mubr.f32.mxu0 0.0
        %1274 = vmatmul.mubr.f32.gmra.mrb[0].mxu0 %v1207
        %v1275 = vpop.f32.mrb[0].mxu0
        %v1276 = vadd.f32 %v1204, %v1275
        %v1277 = vpop.f32.mrb[0].mxu0
        %1278 = vdwg.mxu0
        %v1279 = vadd.f32 %v412, %v1276
        %v1280 = vsel %vm432, %v1279, 0.0
        %1281 = vadd.xlane.f32.xlu0 %v1280
        %v1282 = vpop.xlane.xlu0 %1281
        %v1283 = vrcp.pop 32.0
        %v1284 = vmul.f32 %v1282, %v1283
        %v1285 = vsub.f32 %v1279, %v1284
        %v1286 = vmul.f32 %v1285, %v1285
        %v1287 = vsel %vm432, %v1286, 0.0
        %1288 = vadd.xlane.f32.xlu0 %v1287
        %v1289 = vpop.xlane.xlu0 %1288
        %v1290 = vmul.f32 %v1289, %v1283
        %v1291 = vadd.f32 %v1290, 1e-05
        %v1292 = vrsqrt.pop %v1291
        %v1293 = vmul.f32 %v1285, %v1292
        %v1294 = vlaneseq
        %v1295 = vshrl.u32 %v1294, 7
        %v1296 = vsub.s32 0, %v1295
        %v1297 = vrot.slane %v425, %v1296
        %v1298 = vmul.f32 %v1293, %v1297
        %v1299 = vlaneseq
        %v1300 = vshrl.u32 %v1299, 7
        %v1301 = vsub.s32 1, %v1300
        %v1302 = vrot.slane %v425, %v1301
        %v1303 = vadd.f32 %v1298, %v1302
        %v1305 = vlaneseq
        %v1306 = vshrl.u32 %v1305, 7
        %v1307 = vsub.s32 0, %v1306
        %v1308 = vrot.slane %v424, %v1307
        %v1311 = vsel %vm432, %v1303, 0
        %1313 = vmatprep.subr.mxu0 0.0
        %1314 = vmatpush1.msra.mxu0 %v420
        %1315 = vmatprep.subr.mxu0 0.0
        %1316 = vmatpush1.msra.mxu0 %v421
        %1317 = vmatprep.subr.mxu0 0.0
        %1318 = vmatpush1.msra.mxu0 %v422
        %1319 = vmatprep.subr.mxu0 0.0
        %1320 = vmatpush1.msra.mxu0 %v423
        %1321 = vmatprep.subr.mxu0 0.0
        %1322 = vmatpush1.msra.mxu0 0.0
        %1323 = vmatprep.subr.mxu0 0.0
        %1324 = vmatpush1.msra.mxu0 0.0
        %1325 = vmatprep.subr.mxu0 0.0
        %1326 = vmatpush1.msra.mxu0 0.0
        %1327 = vmatprep.subr.mxu0 0.0
        %1328 = vmatpush1.msra.mxu0 0.0
        %1329 = vmatprep.subr.mxu0 0.0
        %1330 = vmatpush1.msra.mxu0 0.0
        %1331 = vmatprep.subr.mxu0 0.0
        %1332 = vmatpush1.msra.mxu0 0.0
        %1333 = vmatprep.subr.mxu0 0.0
        %1334 = vmatpush1.msra.mxu0 0.0
        %1335 = vmatprep.subr.mxu0 0.0
        %1336 = vmatpush1.msra.mxu0 0.0
        %1337 = vmatprep.subr.mxu0 0.0
        %1338 = vmatpush1.msra.mxu0 0.0
        %1339 = vmatprep.subr.mxu0 0.0
        %1340 = vmatpush1.msra.mxu0 0.0
        %1341 = vmatprep.subr.mxu0 0.0
        %1342 = vmatpush1.msra.mxu0 0.0
        %1343 = vmatprep.subr.mxu0 0.0
        %1344 = vmatpush1.msra.mxu0 0.0
        %1345 = vmatprep.subr.mxu0 0.0
        %1346 = vmatpush1.msra.mxu0 0.0
        %1347 = vmatprep.subr.mxu0 0.0
        %1348 = vmatpush1.msra.mxu0 0.0
        %1349 = vmatprep.subr.mxu0 0.0
        %1350 = vmatpush1.msra.mxu0 0.0
        %1351 = vmatprep.subr.mxu0 0.0
        %1352 = vmatpush1.msra.mxu0 0.0
        %1353 = vmatprep.subr.mxu0 0.0
        %1354 = vmatpush1.msra.mxu0 0.0
        %1355 = vmatprep.subr.mxu0 0.0
        %1356 = vmatpush1.msra.mxu0 0.0
        %1357 = vmatprep.subr.mxu0 0.0
        %1358 = vmatpush1.msra.mxu0 0.0
        %1359 = vmatprep.subr.mxu0 0.0
        %1360 = vmatpush1.msra.mxu0 0.0
        %1361 = vmatprep.subr.mxu0 0.0
        %1362 = vmatpush1.msra.mxu0 0.0
        %1363 = vmatprep.subr.mxu0 0.0
        %1364 = vmatpush1.msra.mxu0 0.0
        %1365 = vmatprep.subr.mxu0 0.0
        %1366 = vmatpush1.msra.mxu0 0.0
        %1367 = vmatprep.subr.mxu0 0.0
        %1368 = vmatpush1.msra.mxu0 0.0
        %1369 = vmatprep.subr.mxu0 0.0
        %1370 = vmatpush1.msra.mxu0 0.0
        %1371 = vmatprep.subr.mxu0 0.0
        %1372 = vmatpush1.msra.mxu0 0.0
        %1373 = vmatprep.subr.mxu0 0.0
        %1374 = vmatpush1.msra.mxu0 0.0
        %1375 = vmatprep.subr.mxu0 0.0
        %1376 = vmatpush1.msra.mxu0 0.0
        %1377 = vmatprep.mubr.f32.mxu0 0.0
        %1378 = vmatmul.mubr.f32.gmra.mrb[0].mxu0 %v1311
        %v1379 = vpop.f32.mrb[0].mxu0
        %v1380 = vadd.f32 %v1308, %v1379
        %v1381 = vpop.f32.mrb[0].mxu0
        %1382 = vdwg.mxu0
        %1387 = vrot.lane.b32.xlu0 %v420, 96
        %v1388 = vpop.permute.xlu0 %1387
        %1389 = vrot.lane.b32.xlu0 %v421, 96
        %v1390 = vpop.permute.xlu0 %1389
        %1391 = vrot.lane.b32.xlu0 %v422, 96
        %v1392 = vpop.permute.xlu0 %1391
        %1393 = vrot.lane.b32.xlu0 %v423, 96
        %v1394 = vpop.permute.xlu0 %1393
        %1399 = vrot.lane.b32.xlu0 %v1308, 96
        %v1400 = vpop.permute.xlu0 %1399
        %v1403 = vsel %vm432, %v413, 0
        %v1406 = vsel %vm432, %v414, 0
        %1408 = vmatprep.subr.mxu0 0.0
        %1409 = vmatpush1.msra.mxu0 %v1388
        %1410 = vmatprep.subr.mxu0 0.0
        %1411 = vmatpush1.msra.mxu0 %v1390
        %1412 = vmatprep.subr.mxu0 0.0
        %1413 = vmatpush1.msra.mxu0 %v1392
        %1414 = vmatprep.subr.mxu0 0.0
        %1415 = vmatpush1.msra.mxu0 %v1394
        %1416 = vmatprep.subr.mxu0 0.0
        %1417 = vmatpush1.msra.mxu0 0.0
        %1418 = vmatprep.subr.mxu0 0.0
        %1419 = vmatpush1.msra.mxu0 0.0
        %1420 = vmatprep.subr.mxu0 0.0
        %1421 = vmatpush1.msra.mxu0 0.0
        %1422 = vmatprep.subr.mxu0 0.0
        %1423 = vmatpush1.msra.mxu0 0.0
        %1424 = vmatprep.subr.mxu0 0.0
        %1425 = vmatpush1.msra.mxu0 0.0
        %1426 = vmatprep.subr.mxu0 0.0
        %1427 = vmatpush1.msra.mxu0 0.0
        %1428 = vmatprep.subr.mxu0 0.0
        %1429 = vmatpush1.msra.mxu0 0.0
        %1430 = vmatprep.subr.mxu0 0.0
        %1431 = vmatpush1.msra.mxu0 0.0
        %1432 = vmatprep.subr.mxu0 0.0
        %1433 = vmatpush1.msra.mxu0 0.0
        %1434 = vmatprep.subr.mxu0 0.0
        %1435 = vmatpush1.msra.mxu0 0.0
        %1436 = vmatprep.subr.mxu0 0.0
        %1437 = vmatpush1.msra.mxu0 0.0
        %1438 = vmatprep.subr.mxu0 0.0
        %1439 = vmatpush1.msra.mxu0 0.0
        %1440 = vmatprep.subr.mxu0 0.0
        %1441 = vmatpush1.msra.mxu0 0.0
        %1442 = vmatprep.subr.mxu0 0.0
        %1443 = vmatpush1.msra.mxu0 0.0
        %1444 = vmatprep.subr.mxu0 0.0
        %1445 = vmatpush1.msra.mxu0 0.0
        %1446 = vmatprep.subr.mxu0 0.0
        %1447 = vmatpush1.msra.mxu0 0.0
        %1448 = vmatprep.subr.mxu0 0.0
        %1449 = vmatpush1.msra.mxu0 0.0
        %1450 = vmatprep.subr.mxu0 0.0
        %1451 = vmatpush1.msra.mxu0 0.0
        %1452 = vmatprep.subr.mxu0 0.0
        %1453 = vmatpush1.msra.mxu0 0.0
        %1454 = vmatprep.subr.mxu0 0.0
        %1455 = vmatpush1.msra.mxu0 0.0
        %1456 = vmatprep.subr.mxu0 0.0
        %1457 = vmatpush1.msra.mxu0 0.0
        %1458 = vmatprep.subr.mxu0 0.0
        %1459 = vmatpush1.msra.mxu0 0.0
        %1460 = vmatprep.subr.mxu0 0.0
        %1461 = vmatpush1.msra.mxu0 0.0
        %1462 = vmatprep.subr.mxu0 0.0
        %1463 = vmatpush1.msra.mxu0 0.0
        %1464 = vmatprep.subr.mxu0 0.0
        %1465 = vmatpush1.msra.mxu0 0.0
        %1466 = vmatprep.subr.mxu0 0.0
        %1467 = vmatpush1.msra.mxu0 0.0
        %1468 = vmatprep.subr.mxu0 0.0
        %1469 = vmatpush1.msra.mxu0 0.0
        %1470 = vmatprep.subr.mxu0 0.0
        %1471 = vmatpush1.msra.mxu0 0.0
        %1472 = vmatprep.mubr.f32.mxu0 0.0
        %1473 = vmatmul.mubr.f32.gmra.mrb[0].mxu0 %v1403
        %v1474 = vpop.f32.mrb[0].mxu0
        %v1475 = vadd.f32 %v1400, %v1474
        %v1476 = vpop.f32.mrb[0].mxu0
        %1477 = vmatprep.mubr.f32.mxu0 0.0
        %1478 = vmatmul.mubr.f32.gmra.mrb[0].mxu0 %v1406
        %v1479 = vpop.f32.mrb[0].mxu0
        %v1480 = vadd.f32 %v1400, %v1479
        %v1481 = vpop.f32.mrb[0].mxu0
        %1482 = vdwg.mxu0
        %v1484 = vsel %vm509, %v1380, 0
        %v1487 = vsel %vm509, %v1475, 0
        %v1490 = vsel %vm509, %v1480, 0
        %1492 = vmatprep.subr.mxu0 0.0
        %1493 = vmatpush1.xpose.msra.mxu0 %v1487
        %1494 = vmatprep.subr.mxu0 0.0
        %1495 = vmatpush1.xpose.msra.mxu0 %v1490
        %1496 = vmatprep.subr.mxu0 0.0
        %1497 = vmatpush1.xpose.msra.mxu0 0.0
        %1498 = vmatprep.subr.mxu0 0.0
        %1499 = vmatpush1.xpose.msra.mxu0 0.0
        %1500 = vmatprep.subr.mxu0 0.0
        %1501 = vmatpush1.xpose.msra.mxu0 0.0
        %1502 = vmatprep.subr.mxu0 0.0
        %1503 = vmatpush1.xpose.msra.mxu0 0.0
        %1504 = vmatprep.subr.mxu0 0.0
        %1505 = vmatpush1.xpose.msra.mxu0 0.0
        %1506 = vmatprep.subr.mxu0 0.0
        %1507 = vmatpush1.xpose.msra.mxu0 0.0
        %1508 = vmatprep.subr.mxu0 0.0
        %1509 = vmatpush1.xpose.msra.mxu0 0.0
        %1510 = vmatprep.subr.mxu0 0.0
        %1511 = vmatpush1.xpose.msra.mxu0 0.0
        %1512 = vmatprep.subr.mxu0 0.0
        %1513 = vmatpush1.xpose.msra.mxu0 0.0
        %1514 = vmatprep.subr.mxu0 0.0
        %1515 = vmatpush1.xpose.msra.mxu0 0.0
        %1516 = vmatprep.subr.mxu0 0.0
        %1517 = vmatpush1.xpose.msra.mxu0 0.0
        %1518 = vmatprep.subr.mxu0 0.0
        %1519 = vmatpush1.xpose.msra.mxu0 0.0
        %1520 = vmatprep.subr.mxu0 0.0
        %1521 = vmatpush1.xpose.msra.mxu0 0.0
        %1522 = vmatprep.subr.mxu0 0.0
        %1523 = vmatpush1.xpose.msra.mxu0 0.0
        %1524 = vmatprep.subr.mxu0 0.0
        %1525 = vmatpush1.xpose.msra.mxu0 0.0
        %1526 = vmatprep.subr.mxu0 0.0
        %1527 = vmatpush1.xpose.msra.mxu0 0.0
        %1528 = vmatprep.subr.mxu0 0.0
        %1529 = vmatpush1.xpose.msra.mxu0 0.0
        %1530 = vmatprep.subr.mxu0 0.0
        %1531 = vmatpush1.xpose.msra.mxu0 0.0
        %1532 = vmatprep.subr.mxu0 0.0
        %1533 = vmatpush1.xpose.msra.mxu0 0.0
        %1534 = vmatprep.subr.mxu0 0.0
        %1535 = vmatpush1.xpose.msra.mxu0 0.0
        %1536 = vmatprep.subr.mxu0 0.0
        %1537 = vmatpush1.xpose.msra.mxu0 0.0
        %1538 = vmatprep.subr.mxu0 0.0
        %1539 = vmatpush1.xpose.msra.mxu0 0.0
        %1540 = vmatprep.subr.mxu0 0.0
        %1541 = vmatpush1.xpose.msra.mxu0 0.0
        %1542 = vmatprep.subr.mxu0 0.0
        %1543 = vmatpush1.xpose.msra.mxu0 0.0
        %1544 = vmatprep.subr.mxu0 0.0
        %1545 = vmatpush1.xpose.msra.mxu0 0.0
        %1546 = vmatprep.subr.mxu0 0.0
        %1547 = vmatpush1.xpose.msra.mxu0 0.0
        %1548 = vmatprep.subr.mxu0 0.0
        %1549 = vmatpush1.xpose.msra.mxu0 0.0
        %1550 = vmatprep.subr.mxu0 0.0
        %1551 = vmatpush1.xpose.msra.mxu0 0.0
        %1552 = vmatprep.subr.mxu0 0.0
        %1553 = vmatpush1.xpose.msra.mxu0 0.0
        %1554 = vmatprep.subr.mxu0 0.0
        %1555 = vmatpush1.xpose.msra.mxu0 0.0
        %1556 = vmatprep.mubr.f32.mxu0 0.0
        %1557 = vmatmul.mubr.f32.gmra.mrb[0].mxu0 %v1484
        %v1558 = vpop.f32.mrb[0].mxu0
        %v1559 = vadd.f32 0.0, %v1558
        %v1560 = vpop.f32.mrb[0].mxu0
        %1561 = vdwg.mxu0
        %v1562 = vmul.f32 %v1559, 0.35355338
        %v1563 = vsel %vm1183, %v1562, -inf
        %1564 = vmax.xlane.f32.xlu0 %v1563
        %v1565 = vpop.xlane.xlu0 %1564
        %v1566 = vsub.f32 %v1562, %v1565
        %v1567 = vmul.f32 %v1566, 1.442695
        %v1568 = vpow.pop %v1567
        %v1569 = vsel %vm1183, %v1568, 0.0
        %1570 = vadd.xlane.f32.xlu0 %v1569
        %v1571 = vpop.xlane.xlu0 %1570
        %v1572 = vrcp.pop %v1571
        %v1573 = vmul.f32 %v1568, %v1572
        %1574 = vrot.lane.b32.xlu0 %v1475, 96
        %v1575 = vpop.permute.xlu0 %1574
        %1576 = vrot.lane.b32.xlu0 %v1480, 96
        %v1577 = vpop.permute.xlu0 %1576
        %v1581 = vsel %vm1183, %v1573, 0
        %1583 = vmatprep.subr.mxu0 0.0
        %1584 = vmatpush1.msra.mxu0 %v1575
        %1585 = vmatprep.subr.mxu0 0.0
        %1586 = vmatpush1.msra.mxu0 %v1577
        %1587 = vmatprep.subr.mxu0 0.0
        %1588 = vmatpush1.msra.mxu0 0.0
        %1589 = vmatprep.subr.mxu0 0.0
        %1590 = vmatpush1.msra.mxu0 0.0
        %1591 = vmatprep.subr.mxu0 0.0
        %1592 = vmatpush1.msra.mxu0 0.0
        %1593 = vmatprep.subr.mxu0 0.0
        %1594 = vmatpush1.msra.mxu0 0.0
        %1595 = vmatprep.subr.mxu0 0.0
        %1596 = vmatpush1.msra.mxu0 0.0
        %1597 = vmatprep.subr.mxu0 0.0
        %1598 = vmatpush1.msra.mxu0 0.0
        %1599 = vmatprep.subr.mxu0 0.0
        %1600 = vmatpush1.msra.mxu0 0.0
        %1601 = vmatprep.subr.mxu0 0.0
        %1602 = vmatpush1.msra.mxu0 0.0
        %1603 = vmatprep.subr.mxu0 0.0
        %1604 = vmatpush1.msra.mxu0 0.0
        %1605 = vmatprep.subr.mxu0 0.0
        %1606 = vmatpush1.msra.mxu0 0.0
        %1607 = vmatprep.subr.mxu0 0.0
        %1608 = vmatpush1.msra.mxu0 0.0
        %1609 = vmatprep.subr.mxu0 0.0
        %1610 = vmatpush1.msra.mxu0 0.0
        %1611 = vmatprep.subr.mxu0 0.0
        %1612 = vmatpush1.msra.mxu0 0.0
        %1613 = vmatprep.subr.mxu0 0.0
        %1614 = vmatpush1.msra.mxu0 0.0
        %1615 = vmatprep.subr.mxu0 0.0
        %1616 = vmatpush1.msra.mxu0 0.0
        %1617 = vmatprep.subr.mxu0 0.0
        %1618 = vmatpush1.msra.mxu0 0.0
        %1619 = vmatprep.subr.mxu0 0.0
        %1620 = vmatpush1.msra.mxu0 0.0
        %1621 = vmatprep.subr.mxu0 0.0
        %1622 = vmatpush1.msra.mxu0 0.0
        %1623 = vmatprep.subr.mxu0 0.0
        %1624 = vmatpush1.msra.mxu0 0.0
        %1625 = vmatprep.subr.mxu0 0.0
        %1626 = vmatpush1.msra.mxu0 0.0
        %1627 = vmatprep.subr.mxu0 0.0
        %1628 = vmatpush1.msra.mxu0 0.0
        %1629 = vmatprep.subr.mxu0 0.0
        %1630 = vmatpush1.msra.mxu0 0.0
        %1631 = vmatprep.subr.mxu0 0.0
        %1632 = vmatpush1.msra.mxu0 0.0
        %1633 = vmatprep.subr.mxu0 0.0
        %1634 = vmatpush1.msra.mxu0 0.0
        %1635 = vmatprep.subr.mxu0 0.0
        %1636 = vmatpush1.msra.mxu0 0.0
        %1637 = vmatprep.subr.mxu0 0.0
        %1638 = vmatpush1.msra.mxu0 0.0
        %1639 = vmatprep.subr.mxu0 0.0
        %1640 = vmatpush1.msra.mxu0 0.0
        %1641 = vmatprep.subr.mxu0 0.0
        %1642 = vmatpush1.msra.mxu0 0.0
        %1643 = vmatprep.subr.mxu0 0.0
        %1644 = vmatpush1.msra.mxu0 0.0
        %1645 = vmatprep.subr.mxu0 0.0
        %1646 = vmatpush1.msra.mxu0 0.0
        %1647 = vmatprep.mubr.f32.mxu0 0.0
        %1648 = vmatmul.mubr.f32.gmra.mrb[0].mxu0 %v1581
        %v1649 = vpop.f32.mrb[0].mxu0
        %v1650 = vadd.f32 0.0, %v1649
        %v1651 = vpop.f32.mrb[0].mxu0
        %1652 = vdwg.mxu0
        %1653 = vrot.lane.b32.xlu0 %v1380, 120
        %v1654 = vpop.permute.xlu0 %1653
        %1655 = vrot.lane.b32.xlu0 %v1475, 120
        %v1656 = vpop.permute.xlu0 %1655
        %1657 = vrot.lane.b32.xlu0 %v1480, 120
        %v1658 = vpop.permute.xlu0 %1657
        %v1659 = vsel %vm509, %v1654, 0
        %v1661 = vsel %vm509, %v1656, 0
        %v1663 = vsel %vm509, %v1658, 0
        %1665 = vmatprep.subr.mxu0 0.0
        %1666 = vmatpush1.xpose.msra.mxu0 %v1661
        %1667 = vmatprep.subr.mxu0 0.0
        %1668 = vmatpush1.xpose.msra.mxu0 %v1663
        %1669 = vmatprep.subr.mxu0 0.0
        %1670 = vmatpush1.xpose.msra.mxu0 0.0
        %1671 = vmatprep.subr.mxu0 0.0
        %1672 = vmatpush1.xpose.msra.mxu0 0.0
        %1673 = vmatprep.subr.mxu0 0.0
        %1674 = vmatpush1.xpose.msra.mxu0 0.0
        %1675 = vmatprep.subr.mxu0 0.0
        %1676 = vmatpush1.xpose.msra.mxu0 0.0
        %1677 = vmatprep.subr.mxu0 0.0
        %1678 = vmatpush1.xpose.msra.mxu0 0.0
        %1679 = vmatprep.subr.mxu0 0.0
        %1680 = vmatpush1.xpose.msra.mxu0 0.0
        %1681 = vmatprep.subr.mxu0 0.0
        %1682 = vmatpush1.xpose.msra.mxu0 0.0
        %1683 = vmatprep.subr.mxu0 0.0
        %1684 = vmatpush1.xpose.msra.mxu0 0.0
        %1685 = vmatprep.subr.mxu0 0.0
        %1686 = vmatpush1.xpose.msra.mxu0 0.0
        %1687 = vmatprep.subr.mxu0 0.0
        %1688 = vmatpush1.xpose.msra.mxu0 0.0
        %1689 = vmatprep.subr.mxu0 0.0
        %1690 = vmatpush1.xpose.msra.mxu0 0.0
        %1691 = vmatprep.subr.mxu0 0.0
        %1692 = vmatpush1.xpose.msra.mxu0 0.0
        %1693 = vmatprep.subr.mxu0 0.0
        %1694 = vmatpush1.xpose.msra.mxu0 0.0
        %1695 = vmatprep.subr.mxu0 0.0
        %1696 = vmatpush1.xpose.msra.mxu0 0.0
        %1697 = vmatprep.subr.mxu0 0.0
        %1698 = vmatpush1.xpose.msra.mxu0 0.0
        %1699 = vmatprep.subr.mxu0 0.0
        %1700 = vmatpush1.xpose.msra.mxu0 0.0
        %1701 = vmatprep.subr.mxu0 0.0
        %1702 = vmatpush1.xpose.msra.mxu0 0.0
        %1703 = vmatprep.subr.mxu0 0.0
        %1704 = vmatpush1.xpose.msra.mxu0 0.0
        %1705 = vmatprep.subr.mxu0 0.0
        %1706 = vmatpush1.xpose.msra.mxu0 0.0
        %1707 = vmatprep.subr.mxu0 0.0
        %1708 = vmatpush1.xpose.msra.mxu0 0.0
        %1709 = vmatprep.subr.mxu0 0.0
        %1710 = vmatpush1.xpose.msra.mxu0 0.0
        %1711 = vmatprep.subr.mxu0 0.0
        %1712 = vmatpush1.xpose.msra.mxu0 0.0
        %1713 = vmatprep.subr.mxu0 0.0
        %1714 = vmatpush1.xpose.msra.mxu0 0.0
        %1715 = vmatprep.subr.mxu0 0.0
        %1716 = vmatpush1.xpose.msra.mxu0 0.0
        %1717 = vmatprep.subr.mxu0 0.0
        %1718 = vmatpush1.xpose.msra.mxu0 0.0
        %1719 = vmatprep.subr.mxu0 0.0
        %1720 = vmatpush1.xpose.msra.mxu0 0.0
        %1721 = vmatprep.subr.mxu0 0.0
        %1722 = vmatpush1.xpose.msra.mxu0 0.0
        %1723 = vmatprep.subr.mxu0 0.0
        %1724 = vmatpush1.xpose.msra.mxu0 0.0
        %1725 = vmatprep.subr.mxu0 0.0
        %1726 = vmatpush1.xpose.msra.mxu0 0.0
        %1727 = vmatprep.subr.mxu0 0.0
        %1728 = vmatpush1.xpose.msra.mxu0 0.0
        %1729 = vmatprep.mubr.f32.mxu0 0.0
        %1730 = vmatmul.mubr.f32.gmra.mrb[0].mxu0 %v1659
        %v1731 = vpop.f32.mrb[0].mxu0
        %v1732 = vadd.f32 0.0, %v1731
        %v1733 = vpop.f32.mrb[0].mxu0
        %1734 = vdwg.mxu0
        %v1735 = vmul.f32 %v1732, 0.35355338
        %v1736 = vsel %vm1183, %v1735, -inf
        %1737 = vmax.xlane.f32.xlu0 %v1736
        %v1738 = vpop.xlane.xlu0 %1737
        %v1739 = vsub.f32 %v1735, %v1738
        %v1740 = vmul.f32 %v1739, 1.442695
        %v1741 = vpow.pop %v1740
        %v1742 = vsel %vm1183, %v1741, 0.0
        %1743 = vadd.xlane.f32.xlu0 %v1742
        %v1744 = vpop.xlane.xlu0 %1743
        %v1745 = vrcp.pop %v1744
        %v1746 = vmul.f32 %v1741, %v1745
        %1747 = vrot.lane.b32.xlu0 %v1475, 88
        %v1748 = vpop.permute.xlu0 %1747
        %1749 = vrot.lane.b32.xlu0 %v1480, 88
        %v1750 = vpop.permute.xlu0 %1749
        %v1754 = vsel %vm1183, %v1746, 0
        %1756 = vmatprep.subr.mxu0 0.0
        %1757 = vmatpush1.msra.mxu0 %v1748
        %1758 = vmatprep.subr.mxu0 0.0
        %1759 = vmatpush1.msra.mxu0 %v1750
        %1760 = vmatprep.subr.mxu0 0.0
        %1761 = vmatpush1.msra.mxu0 0.0
        %1762 = vmatprep.subr.mxu0 0.0
        %1763 = vmatpush1.msra.mxu0 0.0
        %1764 = vmatprep.subr.mxu0 0.0
        %1765 = vmatpush1.msra.mxu0 0.0
        %1766 = vmatprep.subr.mxu0 0.0
        %1767 = vmatpush1.msra.mxu0 0.0
        %1768 = vmatprep.subr.mxu0 0.0
        %1769 = vmatpush1.msra.mxu0 0.0
        %1770 = vmatprep.subr.mxu0 0.0
        %1771 = vmatpush1.msra.mxu0 0.0
        %1772 = vmatprep.subr.mxu0 0.0
        %1773 = vmatpush1.msra.mxu0 0.0
        %1774 = vmatprep.subr.mxu0 0.0
        %1775 = vmatpush1.msra.mxu0 0.0
        %1776 = vmatprep.subr.mxu0 0.0
        %1777 = vmatpush1.msra.mxu0 0.0
        %1778 = vmatprep.subr.mxu0 0.0
        %1779 = vmatpush1.msra.mxu0 0.0
        %1780 = vmatprep.subr.mxu0 0.0
        %1781 = vmatpush1.msra.mxu0 0.0
        %1782 = vmatprep.subr.mxu0 0.0
        %1783 = vmatpush1.msra.mxu0 0.0
        %1784 = vmatprep.subr.mxu0 0.0
        %1785 = vmatpush1.msra.mxu0 0.0
        %1786 = vmatprep.subr.mxu0 0.0
        %1787 = vmatpush1.msra.mxu0 0.0
        %1788 = vmatprep.subr.mxu0 0.0
        %1789 = vmatpush1.msra.mxu0 0.0
        %1790 = vmatprep.subr.mxu0 0.0
        %1791 = vmatpush1.msra.mxu0 0.0
        %1792 = vmatprep.subr.mxu0 0.0
        %1793 = vmatpush1.msra.mxu0 0.0
        %1794 = vmatprep.subr.mxu0 0.0
        %1795 = vmatpush1.msra.mxu0 0.0
        %1796 = vmatprep.subr.mxu0 0.0
        %1797 = vmatpush1.msra.mxu0 0.0
        %1798 = vmatprep.subr.mxu0 0.0
        %1799 = vmatpush1.msra.mxu0 0.0
        %1800 = vmatprep.subr.mxu0 0.0
        %1801 = vmatpush1.msra.mxu0 0.0
        %1802 = vmatprep.subr.mxu0 0.0
        %1803 = vmatpush1.msra.mxu0 0.0
        %1804 = vmatprep.subr.mxu0 0.0
        %1805 = vmatpush1.msra.mxu0 0.0
        %1806 = vmatprep.subr.mxu0 0.0
        %1807 = vmatpush1.msra.mxu0 0.0
        %1808 = vmatprep.subr.mxu0 0.0
        %1809 = vmatpush1.msra.mxu0 0.0
        %1810 = vmatprep.subr.mxu0 0.0
        %1811 = vmatpush1.msra.mxu0 0.0
        %1812 = vmatprep.subr.mxu0 0.0
        %1813 = vmatpush1.msra.mxu0 0.0
        %1814 = vmatprep.subr.mxu0 0.0
        %1815 = vmatpush1.msra.mxu0 0.0
        %1816 = vmatprep.subr.mxu0 0.0
        %1817 = vmatpush1.msra.mxu0 0.0
        %1818 = vmatprep.subr.mxu0 0.0
        %1819 = vmatpush1.msra.mxu0 0.0
        %1820 = vmatprep.mubr.f32.mxu0 0.0
        %1821 = vmatmul.mubr.f32.gmra.mrb[0].mxu0 %v1754
        %v1822 = vpop.f32.mrb[0].mxu0
        %v1823 = vadd.f32 0.0, %v1822
        %v1824 = vpop.f32.mrb[0].mxu0
        %1825 = vdwg.mxu0
        %1826 = vrot.lane.b32.xlu0 %v1380, 112
        %v1827 = vpop.permute.xlu0 %1826
        %1828 = vrot.lane.b32.xlu0 %v1475, 112
        %v1829 = vpop.permute.xlu0 %1828
        %1830 = vrot.lane.b32.xlu0 %v1480, 112
        %v1831 = vpop.permute.xlu0 %1830
        %v1832 = vsel %vm509, %v1827, 0
        %v1834 = vsel %vm509, %v1829, 0
        %v1836 = vsel %vm509, %v1831, 0
        %1838 = vmatprep.subr.mxu0 0.0
        %1839 = vmatpush1.xpose.msra.mxu0 %v1834
        %1840 = vmatprep.subr.mxu0 0.0
        %1841 = vmatpush1.xpose.msra.mxu0 %v1836
        %1842 = vmatprep.subr.mxu0 0.0
        %1843 = vmatpush1.xpose.msra.mxu0 0.0
        %1844 = vmatprep.subr.mxu0 0.0
        %1845 = vmatpush1.xpose.msra.mxu0 0.0
        %1846 = vmatprep.subr.mxu0 0.0
        %1847 = vmatpush1.xpose.msra.mxu0 0.0
        %1848 = vmatprep.subr.mxu0 0.0
        %1849 = vmatpush1.xpose.msra.mxu0 0.0
        %1850 = vmatprep.subr.mxu0 0.0
        %1851 = vmatpush1.xpose.msra.mxu0 0.0
        %1852 = vmatprep.subr.mxu0 0.0
        %1853 = vmatpush1.xpose.msra.mxu0 0.0
        %1854 = vmatprep.subr.mxu0 0.0
        %1855 = vmatpush1.xpose.msra.mxu0 0.0
        %1856 = vmatprep.subr.mxu0 0.0
        %1857 = vmatpush1.xpose.msra.mxu0 0.0
        %1858 = vmatprep.subr.mxu0 0.0
        %1859 = vmatpush1.xpose.msra.mxu0 0.0
        %1860 = vmatprep.subr.mxu0 0.0
        %1861 = vmatpush1.xpose.msra.mxu0 0.0
        %1862 = vmatprep.subr.mxu0 0.0
        %1863 = vmatpush1.xpose.msra.mxu0 0.0
        %1864 = vmatprep.subr.mxu0 0.0
        %1865 = vmatpush1.xpose.msra.mxu0 0.0
        %1866 = vmatprep.subr.mxu0 0.0
        %1867 = vmatpush1.xpose.msra.mxu0 0.0
        %1868 = vmatprep.subr.mxu0 0.0
        %1869 = vmatpush1.xpose.msra.mxu0 0.0
        %1870 = vmatprep.subr.mxu0 0.0
        %1871 = vmatpush1.xpose.msra.mxu0 0.0
        %1872 = vmatprep.subr.mxu0 0.0
        %1873 = vmatpush1.xpose.msra.mxu0 0.0
        %1874 = vmatprep.subr.mxu0 0.0
        %1875 = vmatpush1.xpose.msra.mxu0 0.0
        %1876 = vmatprep.subr.mxu0 0.0
        %1877 = vmatpush1.xpose.msra.mxu0 0.0
        %1878 = vmatprep.subr.mxu0 0.0
        %1879 = vmatpush1.xpose.msra.mxu0 0.0
        %1880 = vmatprep.subr.mxu0 0.0
        %1881 = vmatpush1.xpose.msra.mxu0 0.0
        %1882 = vmatprep.subr.mxu0 0.0
        %1883 = vmatpush1.xpose.msra.mxu0 0.0
        %1884 = vmatprep.subr.mxu0 0.0
        %1885 = vmatpush1.xpose.msra.mxu0 0.0
        %1886 = vmatprep.subr.mxu0 0.0
        %1887 = vmatpush1.xpose.msra.mxu0 0.0
        %1888 = vmatprep.subr.mxu0 0.0
        %1889 = vmatpush1.xpose.msra.mxu0 0.0
        %1890 = vmatprep.subr.mxu0 0.0
        %1891 = vmatpush1.xpose.msra.mxu0 0.0
        %1892 = vmatprep.subr.mxu0 0.0
        %1893 = vmatpush1.xpose.msra.mxu0 0.0
        %1894 = vmatprep.subr.mxu0 0.0
        %1895 = vmatpush1.xpose.msra.mxu0 0.0
        %1896 = vmatprep.subr.mxu0 0.0
        %1897 = vmatpush1.xpose.msra.mxu0 0.0
        %1898 = vmatprep.subr.mxu0 0.0
        %1899 = vmatpush1.xpose.msra.mxu0 0.0
        %1900 = vmatprep.subr.mxu0 0.0
        %1901 = vmatpush1.xpose.msra.mxu0 0.0
        %1902 = vmatprep.mubr.f32.mxu0 0.0
        %1903 = vmatmul.mubr.f32.gmra.mrb[0].mxu0 %v1832
        %v1904 = vpop.f32.mrb[0].mxu0
        %v1905 = vadd.f32 0.0, %v1904
        %v1906 = vpop.f32.mrb[0].mxu0
        %1907 = vdwg.mxu0
        %v1908 = vmul.f32 %v1905, 0.35355338
        %v1909 = vsel %vm1183, %v1908, -inf
        %1910 = vmax.xlane.f32.xlu0 %v1909
        %v1911 = vpop.xlane.xlu0 %1910
        %v1912 = vsub.f32 %v1908, %v1911
        %v1913 = vmul.f32 %v1912, 1.442695
        %v1914 = vpow.pop %v1913
        %v1915 = vsel %vm1183, %v1914, 0.0
        %1916 = vadd.xlane.f32.xlu0 %v1915
        %v1917 = vpop.xlane.xlu0 %1916
        %v1918 = vrcp.pop %v1917
        %v1919 = vmul.f32 %v1914, %v1918
        %1920 = vrot.lane.b32.xlu0 %v1475, 80
        %v1921 = vpop.permute.xlu0 %1920
        %1922 = vrot.lane.b32.xlu0 %v1480, 80
        %v1923 = vpop.permute.xlu0 %1922
        %v1927 = vsel %vm1183, %v1919, 0
        %1929 = vmatprep.subr.mxu0 0.0
        %1930 = vmatpush1.msra.mxu0 %v1921
        %1931 = vmatprep.subr.mxu0 0.0
        %1932 = vmatpush1.msra.mxu0 %v1923
        %1933 = vmatprep.subr.mxu0 0.0
        %1934 = vmatpush1.msra.mxu0 0.0
        %1935 = vmatprep.subr.mxu0 0.0
        %1936 = vmatpush1.msra.mxu0 0.0
        %1937 = vmatprep.subr.mxu0 0.0
        %1938 = vmatpush1.msra.mxu0 0.0
        %1939 = vmatprep.subr.mxu0 0.0
        %1940 = vmatpush1.msra.mxu0 0.0
        %1941 = vmatprep.subr.mxu0 0.0
        %1942 = vmatpush1.msra.mxu0 0.0
        %1943 = vmatprep.subr.mxu0 0.0
        %1944 = vmatpush1.msra.mxu0 0.0
        %1945 = vmatprep.subr.mxu0 0.0
        %1946 = vmatpush1.msra.mxu0 0.0
        %1947 = vmatprep.subr.mxu0 0.0
        %1948 = vmatpush1.msra.mxu0 0.0
        %1949 = vmatprep.subr.mxu0 0.0
        %1950 = vmatpush1.msra.mxu0 0.0
        %1951 = vmatprep.subr.mxu0 0.0
        %1952 = vmatpush1.msra.mxu0 0.0
        %1953 = vmatprep.subr.mxu0 0.0
        %1954 = vmatpush1.msra.mxu0 0.0
        %1955 = vmatprep.subr.mxu0 0.0
        %1956 = vmatpush1.msra.mxu0 0.0
        %1957 = vmatprep.subr.mxu0 0.0
        %1958 = vmatpush1.msra.mxu0 0.0
        %1959 = vmatprep.subr.mxu0 0.0
        %1960 = vmatpush1.msra.mxu0 0.0
        %1961 = vmatprep.subr.mxu0 0.0
        %1962 = vmatpush1.msra.mxu0 0.0
        %1963 = vmatprep.subr.mxu0 0.0
        %1964 = vmatpush1.msra.mxu0 0.0
        %1965 = vmatprep.subr.mxu0 0.0
        %1966 = vmatpush1.msra.mxu0 0.0
        %1967 = vmatprep.subr.mxu0 0.0
        %1968 = vmatpush1.msra.mxu0 0.0
        %1969 = vmatprep.subr.mxu0 0.0
        %1970 = vmatpush1.msra.mxu0 0.0
        %1971 = vmatprep.subr.mxu0 0.0
        %1972 = vmatpush1.msra.mxu0 0.0
        %1973 = vmatprep.subr.mxu0 0.0
        %1974 = vmatpush1.msra.mxu0 0.0
        %1975 = vmatprep.subr.mxu0 0.0
        %1976 = vmatpush1.msra.mxu0 0.0
        %1977 = vmatprep.subr.mxu0 0.0
        %1978 = vmatpush1.msra.mxu0 0.0
        %1979 = vmatprep.subr.mxu0 0.0
        %1980 = vmatpush1.msra.mxu0 0.0
        %1981 = vmatprep.subr.mxu0 0.0
        %1982 = vmatpush1.msra.mxu0 0.0
        %1983 = vmatprep.subr.mxu0 0.0
        %1984 = vmatpush1.msra.mxu0 0.0
        %1985 = vmatprep.subr.mxu0 0.0
        %1986 = vmatpush1.msra.mxu0 0.0
        %1987 = vmatprep.subr.mxu0 0.0
        %1988 = vmatpush1.msra.mxu0 0.0
        %1989 = vmatprep.subr.mxu0 0.0
        %1990 = vmatpush1.msra.mxu0 0.0
        %1991 = vmatprep.subr.mxu0 0.0
        %1992 = vmatpush1.msra.mxu0 0.0
        %1993 = vmatprep.mubr.f32.mxu0 0.0
        %1994 = vmatmul.mubr.f32.gmra.mrb[0].mxu0 %v1927
        %v1995 = vpop.f32.mrb[0].mxu0
        %v1996 = vadd.f32 0.0, %v1995
        %v1997 = vpop.f32.mrb[0].mxu0
        %1998 = vdwg.mxu0
        %1999 = vrot.lane.b32.xlu0 %v1380, 104
        %v2000 = vpop.permute.xlu0 %1999
        %2001 = vrot.lane.b32.xlu0 %v1475, 104
        %v2002 = vpop.permute.xlu0 %2001
        %2003 = vrot.lane.b32.xlu0 %v1480, 104
        %v2004 = vpop.permute.xlu0 %2003
        %v2005 = vsel %vm509, %v2000, 0
        %v2007 = vsel %vm509, %v2002, 0
        %v2009 = vsel %vm509, %v2004, 0
        %2011 = vmatprep.subr.mxu0 0.0
        %2012 = vmatpush1.xpose.msra.mxu0 %v2007
        %2013 = vmatprep.subr.mxu0 0.0
        %2014 = vmatpush1.xpose.msra.mxu0 %v2009
        %2015 = vmatprep.subr.mxu0 0.0
        %2016 = vmatpush1.xpose.msra.mxu0 0.0
        %2017 = vmatprep.subr.mxu0 0.0
        %2018 = vmatpush1.xpose.msra.mxu0 0.0
        %2019 = vmatprep.subr.mxu0 0.0
        %2020 = vmatpush1.xpose.msra.mxu0 0.0
        %2021 = vmatprep.subr.mxu0 0.0
        %2022 = vmatpush1.xpose.msra.mxu0 0.0
        %2023 = vmatprep.subr.mxu0 0.0
        %2024 = vmatpush1.xpose.msra.mxu0 0.0
        %2025 = vmatprep.subr.mxu0 0.0
        %2026 = vmatpush1.xpose.msra.mxu0 0.0
        %2027 = vmatprep.subr.mxu0 0.0
        %2028 = vmatpush1.xpose.msra.mxu0 0.0
        %2029 = vmatprep.subr.mxu0 0.0
        %2030 = vmatpush1.xpose.msra.mxu0 0.0
        %2031 = vmatprep.subr.mxu0 0.0
        %2032 = vmatpush1.xpose.msra.mxu0 0.0
        %2033 = vmatprep.subr.mxu0 0.0
        %2034 = vmatpush1.xpose.msra.mxu0 0.0
        %2035 = vmatprep.subr.mxu0 0.0
        %2036 = vmatpush1.xpose.msra.mxu0 0.0
        %2037 = vmatprep.subr.mxu0 0.0
        %2038 = vmatpush1.xpose.msra.mxu0 0.0
        %2039 = vmatprep.subr.mxu0 0.0
        %2040 = vmatpush1.xpose.msra.mxu0 0.0
        %2041 = vmatprep.subr.mxu0 0.0
        %2042 = vmatpush1.xpose.msra.mxu0 0.0
        %2043 = vmatprep.subr.mxu0 0.0
        %2044 = vmatpush1.xpose.msra.mxu0 0.0
        %2045 = vmatprep.subr.mxu0 0.0
        %2046 = vmatpush1.xpose.msra.mxu0 0.0
        %2047 = vmatprep.subr.mxu0 0.0
        %2048 = vmatpush1.xpose.msra.mxu0 0.0
        %2049 = vmatprep.subr.mxu0 0.0
        %2050 = vmatpush1.xpose.msra.mxu0 0.0
        %2051 = vmatprep.subr.mxu0 0.0
        %2052 = vmatpush1.xpose.msra.mxu0 0.0
        %2053 = vmatprep.subr.mxu0 0.0
        %2054 = vmatpush1.xpose.msra.mxu0 0.0
        %2055 = vmatprep.subr.mxu0 0.0
        %2056 = vmatpush1.xpose.msra.mxu0 0.0
        %2057 = vmatprep.subr.mxu0 0.0
        %2058 = vmatpush1.xpose.msra.mxu0 0.0
        %2059 = vmatprep.subr.mxu0 0.0
        %2060 = vmatpush1.xpose.msra.mxu0 0.0
        %2061 = vmatprep.subr.mxu0 0.0
        %2062 = vmatpush1.xpose.msra.mxu0 0.0
        %2063 = vmatprep.subr.mxu0 0.0
        %2064 = vmatpush1.xpose.msra.mxu0 0.0
        %2065 = vmatprep.subr.mxu0 0.0
        %2066 = vmatpush1.xpose.msra.mxu0 0.0
        %2067 = vmatprep.subr.mxu0 0.0
        %2068 = vmatpush1.xpose.msra.mxu0 0.0
        %2069 = vmatprep.subr.mxu0 0.0
        %2070 = vmatpush1.xpose.msra.mxu0 0.0
        %2071 = vmatprep.subr.mxu0 0.0
        %2072 = vmatpush1.xpose.msra.mxu0 0.0
        %2073 = vmatprep.subr.mxu0 0.0
        %2074 = vmatpush1.xpose.msra.mxu0 0.0
        %2075 = vmatprep.mubr.f32.mxu0 0.0
        %2076 = vmatmul.mubr.f32.gmra.mrb[0].mxu0 %v2005
        %v2077 = vpop.f32.mrb[0].mxu0
        %v2078 = vadd.f32 0.0, %v2077
        %v2079 = vpop.f32.mrb[0].mxu0
        %2080 = vdwg.mxu0
        %v2081 = vmul.f32 %v2078, 0.35355338
        %v2082 = vsel %vm1183, %v2081, -inf
        %2083 = vmax.xlane.f32.xlu0 %v2082
        %v2084 = vpop.xlane.xlu0 %2083
        %v2085 = vsub.f32 %v2081, %v2084
        %v2086 = vmul.f32 %v2085, 1.442695
        %v2087 = vpow.pop %v2086
        %v2088 = vsel %vm1183, %v2087, 0.0
        %2089 = vadd.xlane.f32.xlu0 %v2088
        %v2090 = vpop.xlane.xlu0 %2089
        %v2091 = vrcp.pop %v2090
        %v2092 = vmul.f32 %v2087, %v2091
        %2093 = vrot.lane.b32.xlu0 %v1475, 72
        %v2094 = vpop.permute.xlu0 %2093
        %2095 = vrot.lane.b32.xlu0 %v1480, 72
        %v2096 = vpop.permute.xlu0 %2095
        %v2100 = vsel %vm1183, %v2092, 0
        %2102 = vmatprep.subr.mxu0 0.0
        %2103 = vmatpush1.msra.mxu0 %v2094
        %2104 = vmatprep.subr.mxu0 0.0
        %2105 = vmatpush1.msra.mxu0 %v2096
        %2106 = vmatprep.subr.mxu0 0.0
        %2107 = vmatpush1.msra.mxu0 0.0
        %2108 = vmatprep.subr.mxu0 0.0
        %2109 = vmatpush1.msra.mxu0 0.0
        %2110 = vmatprep.subr.mxu0 0.0
        %2111 = vmatpush1.msra.mxu0 0.0
        %2112 = vmatprep.subr.mxu0 0.0
        %2113 = vmatpush1.msra.mxu0 0.0
        %2114 = vmatprep.subr.mxu0 0.0
        %2115 = vmatpush1.msra.mxu0 0.0
        %2116 = vmatprep.subr.mxu0 0.0
        %2117 = vmatpush1.msra.mxu0 0.0
        %2118 = vmatprep.subr.mxu0 0.0
        %2119 = vmatpush1.msra.mxu0 0.0
        %2120 = vmatprep.subr.mxu0 0.0
        %2121 = vmatpush1.msra.mxu0 0.0
        %2122 = vmatprep.subr.mxu0 0.0
        %2123 = vmatpush1.msra.mxu0 0.0
        %2124 = vmatprep.subr.mxu0 0.0
        %2125 = vmatpush1.msra.mxu0 0.0
        %2126 = vmatprep.subr.mxu0 0.0
        %2127 = vmatpush1.msra.mxu0 0.0
        %2128 = vmatprep.subr.mxu0 0.0
        %2129 = vmatpush1.msra.mxu0 0.0
        %2130 = vmatprep.subr.mxu0 0.0
        %2131 = vmatpush1.msra.mxu0 0.0
        %2132 = vmatprep.subr.mxu0 0.0
        %2133 = vmatpush1.msra.mxu0 0.0
        %2134 = vmatprep.subr.mxu0 0.0
        %2135 = vmatpush1.msra.mxu0 0.0
        %2136 = vmatprep.subr.mxu0 0.0
        %2137 = vmatpush1.msra.mxu0 0.0
        %2138 = vmatprep.subr.mxu0 0.0
        %2139 = vmatpush1.msra.mxu0 0.0
        %2140 = vmatprep.subr.mxu0 0.0
        %2141 = vmatpush1.msra.mxu0 0.0
        %2142 = vmatprep.subr.mxu0 0.0
        %2143 = vmatpush1.msra.mxu0 0.0
        %2144 = vmatprep.subr.mxu0 0.0
        %2145 = vmatpush1.msra.mxu0 0.0
        %2146 = vmatprep.subr.mxu0 0.0
        %2147 = vmatpush1.msra.mxu0 0.0
        %2148 = vmatprep.subr.mxu0 0.0
        %2149 = vmatpush1.msra.mxu0 0.0
        %2150 = vmatprep.subr.mxu0 0.0
        %2151 = vmatpush1.msra.mxu0 0.0
        %2152 = vmatprep.subr.mxu0 0.0
        %2153 = vmatpush1.msra.mxu0 0.0
        %2154 = vmatprep.subr.mxu0 0.0
        %2155 = vmatpush1.msra.mxu0 0.0
        %2156 = vmatprep.subr.mxu0 0.0
        %2157 = vmatpush1.msra.mxu0 0.0
        %2158 = vmatprep.subr.mxu0 0.0
        %2159 = vmatpush1.msra.mxu0 0.0
        %2160 = vmatprep.subr.mxu0 0.0
        %2161 = vmatpush1.msra.mxu0 0.0
        %2162 = vmatprep.subr.mxu0 0.0
        %2163 = vmatpush1.msra.mxu0 0.0
        %2164 = vmatprep.subr.mxu0 0.0
        %2165 = vmatpush1.msra.mxu0 0.0
        %2166 = vmatprep.mubr.f32.mxu0 0.0
        %2167 = vmatmul.mubr.f32.gmra.mrb[0].mxu0 %v2100
        %v2168 = vpop.f32.mrb[0].mxu0
        %v2169 = vadd.f32 0.0, %v2168
        %v2170 = vpop.f32.mrb[0].mxu0
        %2171 = vdwg.mxu0
        %2173 = vrot.lane.b32.xlu0 %v1823, 8
        %v2174 = vpop.permute.xlu0 %2173
        %2177 = vrot.lane.b32.xlu0 %v1996, 16
        %v2178 = vpop.permute.xlu0 %2177
        %2181 = vrot.lane.b32.xlu0 %v2169, 24
        %v2182 = vpop.permute.xlu0 %2181
        %v2184 = vsel %vm509, %v1650, %v2174
        %v2185 = vsel %vm1183, %v2184, %v2178
        %v2186 = vsel %vm1185, %v2185, %v2182
        %2187 = vrot.lane.b32.xlu0 %v420, 32
        %v2188 = vpop.permute.xlu0 %2187
        %2189 = vrot.lane.b32.xlu0 %v421, 32
        %v2190 = vpop.permute.xlu0 %2189
        %2191 = vrot.lane.b32.xlu0 %v422, 32
        %v2192 = vpop.permute.xlu0 %2191
        %2193 = vrot.lane.b32.xlu0 %v423, 32
        %v2194 = vpop.permute.xlu0 %2193
        %2199 = vrot.lane.b32.xlu0 %v1308, 32
        %v2200 = vpop.permute.xlu0 %2199
        %v2203 = vsel %vm432, %v2186, 0
        %2205 = vmatprep.subr.mxu0 0.0
        %2206 = vmatpush1.msra.mxu0 %v2188
        %2207 = vmatprep.subr.mxu0 0.0
        %2208 = vmatpush1.msra.mxu0 %v2190
        %2209 = vmatprep.subr.mxu0 0.0
        %2210 = vmatpush1.msra.mxu0 %v2192
        %2211 = vmatprep.subr.mxu0 0.0
        %2212 = vmatpush1.msra.mxu0 %v2194
        %2213 = vmatprep.subr.mxu0 0.0
        %2214 = vmatpush1.msra.mxu0 0.0
        %2215 = vmatprep.subr.mxu0 0.0
        %2216 = vmatpush1.msra.mxu0 0.0
        %2217 = vmatprep.subr.mxu0 0.0
        %2218 = vmatpush1.msra.mxu0 0.0
        %2219 = vmatprep.subr.mxu0 0.0
        %2220 = vmatpush1.msra.mxu0 0.0
        %2221 = vmatprep.subr.mxu0 0.0
        %2222 = vmatpush1.msra.mxu0 0.0
        %2223 = vmatprep.subr.mxu0 0.0
        %2224 = vmatpush1.msra.mxu0 0.0
        %2225 = vmatprep.subr.mxu0 0.0
        %2226 = vmatpush1.msra.mxu0 0.0
        %2227 = vmatprep.subr.mxu0 0.0
        %2228 = vmatpush1.msra.mxu0 0.0
        %2229 = vmatprep.subr.mxu0 0.0
        %2230 = vmatpush1.msra.mxu0 0.0
        %2231 = vmatprep.subr.mxu0 0.0
        %2232 = vmatpush1.msra.mxu0 0.0
        %2233 = vmatprep.subr.mxu0 0.0
        %2234 = vmatpush1.msra.mxu0 0.0
        %2235 = vmatprep.subr.mxu0 0.0
        %2236 = vmatpush1.msra.mxu0 0.0
        %2237 = vmatprep.subr.mxu0 0.0
        %2238 = vmatpush1.msra.mxu0 0.0
        %2239 = vmatprep.subr.mxu0 0.0
        %2240 = vmatpush1.msra.mxu0 0.0
        %2241 = vmatprep.subr.mxu0 0.0
        %2242 = vmatpush1.msra.mxu0 0.0
        %2243 = vmatprep.subr.mxu0 0.0
        %2244 = vmatpush1.msra.mxu0 0.0
        %2245 = vmatprep.subr.mxu0 0.0
        %2246 = vmatpush1.msra.mxu0 0.0
        %2247 = vmatprep.subr.mxu0 0.0
        %2248 = vmatpush1.msra.mxu0 0.0
        %2249 = vmatprep.subr.mxu0 0.0
        %2250 = vmatpush1.msra.mxu0 0.0
        %2251 = vmatprep.subr.mxu0 0.0
        %2252 = vmatpush1.msra.mxu0 0.0
        %2253 = vmatprep.subr.mxu0 0.0
        %2254 = vmatpush1.msra.mxu0 0.0
        %2255 = vmatprep.subr.mxu0 0.0
        %2256 = vmatpush1.msra.mxu0 0.0
        %2257 = vmatprep.subr.mxu0 0.0
        %2258 = vmatpush1.msra.mxu0 0.0
        %2259 = vmatprep.subr.mxu0 0.0
        %2260 = vmatpush1.msra.mxu0 0.0
        %2261 = vmatprep.subr.mxu0 0.0
        %2262 = vmatpush1.msra.mxu0 0.0
        %2263 = vmatprep.subr.mxu0 0.0
        %2264 = vmatpush1.msra.mxu0 0.0
        %2265 = vmatprep.subr.mxu0 0.0
        %2266 = vmatpush1.msra.mxu0 0.0
        %2267 = vmatprep.subr.mxu0 0.0
        %2268 = vmatpush1.msra.mxu0 0.0
        %2269 = vmatprep.mubr.f32.mxu0 0.0
        %2270 = vmatmul.mubr.f32.gmra.mrb[0].mxu0 %v2203
        %v2271 = vpop.f32.mrb[0].mxu0
        %v2272 = vadd.f32 %v2200, %v2271
        %v2273 = vpop.f32.mrb[0].mxu0
        %2274 = vdwg.mxu0
        %v2275 = vadd.f32 %v1303, %v2272
        %v2276 = vsel %vm432, %v2275, 0.0
        %2277 = vadd.xlane.f32.xlu0 %v2276
        %v2278 = vpop.xlane.xlu0 %2277
        %v2279 = vmul.f32 %v2278, %v1283
        %v2280 = vsub.f32 %v2275, %v2279
        %v2281 = vmul.f32 %v2280, %v2280
        %v2282 = vsel %vm432, %v2281, 0.0
        %2283 = vadd.xlane.f32.xlu0 %v2282
        %v2284 = vpop.xlane.xlu0 %2283
        %v2285 = vmul.f32 %v2284, %v1283
        %v2286 = vadd.f32 %v2285, 1e-05
        %v2287 = vrsqrt.pop %v2286
        %v2288 = vmul.f32 %v2280, %v2287
        %v2289 = vlaneseq
        %v2290 = vshrl.u32 %v2289, 7
        %v2291 = vsub.s32 2, %v2290
        %v2292 = vrot.slane %v425, %v2291
        %v2293 = vmul.f32 %v2288, %v2292
        %v2294 = vlaneseq
        %v2295 = vshrl.u32 %v2294, 7
        %v2296 = vsub.s32 3, %v2295
        %v2297 = vrot.slane %v425, %v2296
        %v2298 = vadd.f32 %v2293, %v2297
        %v2299 = vld [vmem:[#allocation5] sm:$0xff]
        %v2300 = vld [vmem:[#allocation5 + $0x8] sm:$0xff]
        %v2301 = vld [vmem:[#allocation5 + $0x10] sm:$0xff]
        %v2302 = vld [vmem:[#allocation5 + $0x18] sm:$0xff]
        %v2303 = vld [vmem:[%s7] sm:$0x1]
        %v2305 = vlaneseq
        %v2306 = vshrl.u32 %v2305, 7
        %v2307 = vsub.s32 0, %v2306
        %v2308 = vrot.slane %v2303, %v2307
        %v2311 = vsel %vm432, %v2298, 0
        %2313 = vmatprep.subr.mxu0 0.0
        %2314 = vmatpush1.msra.mxu0 %v2299
        %2315 = vmatprep.subr.mxu0 0.0
        %2316 = vmatpush1.msra.mxu0 %v2300
        %2317 = vmatprep.subr.mxu0 0.0
        %2318 = vmatpush1.msra.mxu0 %v2301
        %2319 = vmatprep.subr.mxu0 0.0
        %2320 = vmatpush1.msra.mxu0 %v2302
        %2321 = vmatprep.subr.mxu0 0.0
        %2322 = vmatpush1.msra.mxu0 0.0
        %2323 = vmatprep.subr.mxu0 0.0
        %2324 = vmatpush1.msra.mxu0 0.0
        %2325 = vmatprep.subr.mxu0 0.0
        %2326 = vmatpush1.msra.mxu0 0.0
        %2327 = vmatprep.subr.mxu0 0.0
        %2328 = vmatpush1.msra.mxu0 0.0
        %2329 = vmatprep.subr.mxu0 0.0
        %2330 = vmatpush1.msra.mxu0 0.0
        %2331 = vmatprep.subr.mxu0 0.0
        %2332 = vmatpush1.msra.mxu0 0.0
        %2333 = vmatprep.subr.mxu0 0.0
        %2334 = vmatpush1.msra.mxu0 0.0
        %2335 = vmatprep.subr.mxu0 0.0
        %2336 = vmatpush1.msra.mxu0 0.0
        %2337 = vmatprep.subr.mxu0 0.0
        %2338 = vmatpush1.msra.mxu0 0.0
        %2339 = vmatprep.subr.mxu0 0.0
        %2340 = vmatpush1.msra.mxu0 0.0
        %2341 = vmatprep.subr.mxu0 0.0
        %2342 = vmatpush1.msra.mxu0 0.0
        %2343 = vmatprep.subr.mxu0 0.0
        %2344 = vmatpush1.msra.mxu0 0.0
        %2345 = vmatprep.subr.mxu0 0.0
        %2346 = vmatpush1.msra.mxu0 0.0
        %2347 = vmatprep.subr.mxu0 0.0
        %2348 = vmatpush1.msra.mxu0 0.0
        %2349 = vmatprep.subr.mxu0 0.0
        %2350 = vmatpush1.msra.mxu0 0.0
        %2351 = vmatprep.subr.mxu0 0.0
        %2352 = vmatpush1.msra.mxu0 0.0
        %2353 = vmatprep.subr.mxu0 0.0
        %2354 = vmatpush1.msra.mxu0 0.0
        %2355 = vmatprep.subr.mxu0 0.0
        %2356 = vmatpush1.msra.mxu0 0.0
        %2357 = vmatprep.subr.mxu0 0.0
        %2358 = vmatpush1.msra.mxu0 0.0
        %2359 = vmatprep.subr.mxu0 0.0
        %2360 = vmatpush1.msra.mxu0 0.0
        %2361 = vmatprep.subr.mxu0 0.0
        %2362 = vmatpush1.msra.mxu0 0.0
        %2363 = vmatprep.subr.mxu0 0.0
        %2364 = vmatpush1.msra.mxu0 0.0
        %2365 = vmatprep.subr.mxu0 0.0
        %2366 = vmatpush1.msra.mxu0 0.0
        %2367 = vmatprep.subr.mxu0 0.0
        %2368 = vmatpush1.msra.mxu0 0.0
        %2369 = vmatprep.subr.mxu0 0.0
        %2370 = vmatpush1.msra.mxu0 0.0
        %2371 = vmatprep.subr.mxu0 0.0
        %2372 = vmatpush1.msra.mxu0 0.0
        %2373 = vmatprep.subr.mxu0 0.0
        %2374 = vmatpush1.msra.mxu0 0.0
        %2375 = vmatprep.subr.mxu0 0.0
        %2376 = vmatpush1.msra.mxu0 0.0
        %2377 = vmatprep.mubr.f32.mxu0 0.0
        %2378 = vmatmul.mubr.f32.gmra.mrb[0].mxu0 %v2311
        %v2379 = vpop.f32.mrb[0].mxu0
        %v2380 = vadd.f32 %v2308, %v2379
        %v2381 = vpop.f32.mrb[0].mxu0
        %2382 = vdwg.mxu0
        %v2383 = vmax.f32 %v2380, 0.0
        %v2384 = vld [vmem:[%s8] sm:$0xff]
        %v2385 = vld [vmem:[%s8 + $0x8] sm:$0xff]
        %v2386 = vld [vmem:[%s8 + $0x10] sm:$0xff]
        %v2387 = vld [vmem:[%s8 + $0x18] sm:$0xff]
        %v2388 = vld [vmem:[%s8 + $0x20] sm:$0xff]
        %v2389 = vld [vmem:[%s8 + $0x28] sm:$0xff]
        %v2390 = vld [vmem:[%s8 + $0x30] sm:$0xff]
        %v2391 = vld [vmem:[%s8 + $0x38] sm:$0xff]
        %v2392 = vlaneseq
        %v2393 = vshrl.u32 %v2392, 7
        %v2394 = vsub.s32 6, %v2393
        %v2395 = vrot.slane %v425, %v2394
        %vm2396 = vcmask 523264
        %v2398 = vsel %vm2396, %v2383, 0
        %2400 = vmatprep.subr.mxu0 0.0
        %2401 = vmatpush1.msra.mxu0 %v2384
        %2402 = vmatprep.subr.mxu0 0.0
        %2403 = vmatpush1.msra.mxu0 %v2385
        %2404 = vmatprep.subr.mxu0 0.0
        %2405 = vmatpush1.msra.mxu0 %v2386
        %2406 = vmatprep.subr.mxu0 0.0
        %2407 = vmatpush1.msra.mxu0 %v2387
        %2408 = vmatprep.subr.mxu0 0.0
        %2409 = vmatpush1.msra.mxu0 %v2388
        %2410 = vmatprep.subr.mxu0 0.0
        %2411 = vmatpush1.msra.mxu0 %v2389
        %2412 = vmatprep.subr.mxu0 0.0
        %2413 = vmatpush1.msra.mxu0 %v2390
        %2414 = vmatprep.subr.mxu0 0.0
        %2415 = vmatpush1.msra.mxu0 %v2391
        %2416 = vmatprep.subr.mxu0 0.0
        %2417 = vmatpush1.msra.mxu0 0.0
        %2418 = vmatprep.subr.mxu0 0.0
        %2419 = vmatpush1.msra.mxu0 0.0
        %2420 = vmatprep.subr.mxu0 0.0
        %2421 = vmatpush1.msra.mxu0 0.0
        %2422 = vmatprep.subr.mxu0 0.0
        %2423 = vmatpush1.msra.mxu0 0.0
        %2424 = vmatprep.subr.mxu0 0.0
        %2425 = vmatpush1.msra.mxu0 0.0
        %2426 = vmatprep.subr.mxu0 0.0
        %2427 = vmatpush1.msra.mxu0 0.0
        %2428 = vmatprep.subr.mxu0 0.0
        %2429 = vmatpush1.msra.mxu0 0.0
        %2430 = vmatprep.subr.mxu0 0.0
        %2431 = vmatpush1.msra.mxu0 0.0
        %2432 = vmatprep.subr.mxu0 0.0
        %2433 = vmatpush1.msra.mxu0 0.0
        %2434 = vmatprep.subr.mxu0 0.0
        %2435 = vmatpush1.msra.mxu0 0.0
        %2436 = vmatprep.subr.mxu0 0.0
        %2437 = vmatpush1.msra.mxu0 0.0
        %2438 = vmatprep.subr.mxu0 0.0
        %2439 = vmatpush1.msra.mxu0 0.0
        %2440 = vmatprep.subr.mxu0 0.0
        %2441 = vmatpush1.msra.mxu0 0.0
        %2442 = vmatprep.subr.mxu0 0.0
        %2443 = vmatpush1.msra.mxu0 0.0
        %2444 = vmatprep.subr.mxu0 0.0
        %2445 = vmatpush1.msra.mxu0 0.0
        %2446 = vmatprep.subr.mxu0 0.0
        %2447 = vmatpush1.msra.mxu0 0.0
        %2448 = vmatprep.subr.mxu0 0.0
        %2449 = vmatpush1.msra.mxu0 0.0
        %2450 = vmatprep.subr.mxu0 0.0
        %2451 = vmatpush1.msra.mxu0 0.0
        %2452 = vmatprep.subr.mxu0 0.0
        %2453 = vmatpush1.msra.mxu0 0.0
        %2454 = vmatprep.subr.mxu0 0.0
        %2455 = vmatpush1.msra.mxu0 0.0
        %2456 = vmatprep.subr.mxu0 0.0
        %2457 = vmatpush1.msra.mxu0 0.0
        %2458 = vmatprep.subr.mxu0 0.0
        %2459 = vmatpush1.msra.mxu0 0.0
        %2460 = vmatprep.subr.mxu0 0.0
        %2461 = vmatpush1.msra.mxu0 0.0
        %2462 = vmatprep.subr.mxu0 0.0
        %2463 = vmatpush1.msra.mxu0 0.0
        %2464 = vmatprep.mubr.f32.mxu0 0.0
        %2465 = vmatmul.mubr.f32.gmra.mrb[0].mxu0 %v2398
        %v2466 = vpop.f32.mrb[0].mxu0
        %v2467 = vadd.f32 %v2395, %v2466
        %v2468 = vpop.f32.mrb[0].mxu0
        %2469 = vdwg.mxu0
        %v2470 = vadd.f32 %v2298, %v2467
        %v2471 = vsel %vm432, %v2470, 0.0
        %2472 = vadd.xlane.f32.xlu0 %v2471
        %v2473 = vpop.xlane.xlu0 %2472
        %v2474 = vmul.f32 %v2473, %v1283
        %v2475 = vsub.f32 %v2470, %v2474
        %v2476 = vmul.f32 %v2475, %v2475
        %v2477 = vsel %vm432, %v2476, 0.0
        %2478 = vadd.xlane.f32.xlu0 %v2477
        %v2479 = vpop.xlane.xlu0 %2478
        %v2480 = vmul.f32 %v2479, %v1283
        %v2481 = vadd.f32 %v2480, 1e-05
        %v2482 = vrsqrt.pop %v2481
        %v2483 = vmul.f32 %v2475, %v2482
        %v2484 = vlaneseq
        %v2485 = vshrl.u32 %v2484, 7
        %v2486 = vsub.s32 4, %v2485
        %v2487 = vrot.slane %v425, %v2486
        %v2488 = vmul.f32 %v2483, %v2487
        %v2489 = vlaneseq
        %v2490 = vshrl.u32 %v2489, 7
        %v2491 = vsub.s32 5, %v2490
        %v2492 = vrot.slane %v425, %v2491
        %v2493 = vadd.f32 %v2488, %v2492
        %2494 = vst.msk [vmem:[%s405] sm:$0xff] %vm432, %v2493
        %s2495 = sand.u32 %s256, 1
        %s2496 = scalar_lea.sflag [#allocation4], %s2495
        %s2497 = sand.u32 %s256, 1
        %s2498 = smul.addr %s2497, 8
        %s2499 = scalar_lea.vmem [#allocation7], %s2498
        // Predicated region
        $region69: #{tpu_custom_call.1} parent=59 // pred_check
          %p2500 = pneg %p266
        $region70: #{tpu_custom_call.1} parent=59 // pred_check_branch
          %2502 = sbr.rel (%p2500) target = $region72
        $region71: #{tpu_custom_call.1} parent=59 // pred_region
          %s2504 = ssub.s32 128, 128
          %2505 = vsyncadd %s2496, %s2504
          %s2506 = smul.addr %s28, 128
          %s2507 = scalar_lea.hbm %s10, %s2506
          %s2509 = sshll.u32 %s2499, 4
          %s2510 = int_to_ptr.vmem [resolvable:$true] %s2509
          %2512 = dma.vmem_to_hbm [thread:$0]  %s2510, 128, %s2507, %s2496
        $region72: #{tpu_custom_call.1} parent=59 // pred_fallthru
          _
      $region60: #{tpu_custom_call.1} parent=5 // pred_fallthru
        _
      %p2513 = scmp.le.s32.totalorder 2, %s23
      // Predicated region
      $region73: #{tpu_custom_call.1} parent=5 // pred_check
        %p2514 = pneg %p2513
      $region74: #{tpu_custom_call.1} parent=5 // pred_check_branch
        %2516 = sbr.rel (%p2514) target = $region76
      $region75: #{tpu_custom_call.1} parent=5 // pred_region
        %s2517 = ssub.s32 %s23, 2
        // Predicated region
        $region77: #{tpu_custom_call.1} parent=75 // pred_check
          %p2518 = pneg %p272
        $region78: #{tpu_custom_call.1} parent=75 // pred_check_branch
          %2520 = sbr.rel (%p2518) target = $region80
        $region79: #{tpu_custom_call.1} parent=75 // pred_region
          %s2521 = sand.u32 %s257, 1
          %s2522 = scalar_lea.sflag [#allocation4], %s2521
          %s2523 = sand.u32 %s257, 1
          %s2524 = smul.addr %s2523, 8
          %s2525 = scalar_lea.vmem [#allocation7], %s2524
          %2526 = dma.done %s2522, 128
        $region80: #{tpu_custom_call.1} parent=75 // pred_fallthru
          _
      $region76: #{tpu_custom_call.1} parent=5 // pred_fallthru
        _
    $region6: #{tpu_custom_call.1} parent=1 // loop_footer
      %s27 = sadd.s32 1, %s23
    $region7: #{tpu_custom_call.1} parent=1 // loop_footer_branch
      %22 = sbr.rel target = $region3
    $region8: #{tpu_custom_call.1} parent=1 // loop_exit
      _
    %2527 = vsyncpa [#allocation3], 1
    %s2528 = scalar_lea.sflag [#allocation3], 1
    %2529 = vsyncpa %s2528, 1
    %2530 = vsyncpa [#allocation6], 1
    %2531 = vsyncpa [#allocation4], 1
    %s2532 = scalar_lea.sflag [#allocation4], 1
    %2533 = vsyncpa %s2532, 1

</llo_original>
